<compile_context>
chip_gen: v5e
topology: v5e:2x2
jax: 0.10.0
libtpu: 0.0.40
codegen_flags: <defaults>
</compile_context>

<pallas_src>
import functools
import math

import jax
import jax.numpy as jnp
from jax.experimental import pallas as pl
from jax.experimental.pallas import tpu as pltpu


def _round_up(a, b):
    return (a + b - 1) // b * b


# ----------------------------- Pallas kernel --------------------------------
def _ses_hh_fused_kernel(w_ref, bias_ref, a_ref, o_ref, *, K, Wp, Mo, apply_relu):
    """One (batch, output-row-tile) block: implicit-GEMM conv, all output scales.

    w_ref:    [K*K, S*O, Cpad]  bf16 block-banded per-tap weights (resident)
    bias_ref: [S*O, 1]          f32
    a_ref:    [Cpad, Lcols]     bf16 padded activation tile, rows = (in_scale, ch),
                                lanes = flattened (h, w) on the padded-width grid
    o_ref:    [S*O, Mo]         f32, Mo = th * Wp (junk columns w >= Wo are
                                dropped by the wrapper)
    """
    o_ref[...] = jnp.zeros_like(o_ref)
    # K*K shifted-slice matmuls accumulated into the f32 output block (VMEM).
    for ky in range(K):
        for kx in range(K):
            t = ky * K + kx
            off = ky * Wp + kx                    # static lane offset of this tap
            o_ref[...] += jnp.dot(w_ref[t], a_ref[:, off:off + Mo],
                                  preferred_element_type=jnp.float32)
    res = o_ref[...] + bias_ref[...]              # broadcast [S*O,1] -> [S*O,Mo]
    if apply_relu:
        res = jnp.maximum(res, 0.0)
    o_ref[...] = res


def _ses_conv_fused(w_taps, bias_col, a_tiles, *, K, Wp, Mo, apply_relu,
                    vmem_limit_bytes, flops, bytes_accessed):
    G = a_tiles.shape[0]
    KK, SO, Cpad = w_taps.shape
    Lcols = a_tiles.shape[-1]
    kern = functools.partial(_ses_hh_fused_kernel, K=K, Wp=Wp, Mo=Mo,
                             apply_relu=apply_relu)
    return pl.pallas_call(
        kern,
        out_shape=jax.ShapeDtypeStruct((G, SO, Mo), jnp.float32),
        grid_spec=pltpu.PrefetchScalarGridSpec(
            num_scalar_prefetch=0,
            grid=(G,),
            in_specs=[
                pl.BlockSpec((KK, SO, Cpad), lambda g: (0, 0, 0)),     # weights (resident)
                pl.BlockSpec((SO, 1), lambda g: (0, 0)),               # bias
                pl.BlockSpec((None, Cpad, Lcols), lambda g: (g, 0, 0)),  # activations
            ],
            out_specs=pl.BlockSpec((None, SO, Mo), lambda g: (g, 0, 0)),
        ),
        compiler_params=pltpu.CompilerParams(
            dimension_semantics=("parallel",),
            vmem_limit_bytes=vmem_limit_bytes),
        cost_estimate=pl.CostEstimate(
            flops=flops, transcendentals=0, bytes_accessed=bytes_accessed),
    )(w_taps, bias_col, a_tiles)


# --------------------------- tile-size selection -----------------------------
def _vmem_budget_bytes():
    """Per-grid-step working-set budget.  Conservative default keeps the step
    under v5e's 16 MiB scoped-VMEM default; scales up when the runtime reports
    a larger VMEM (v6e 128 MiB, v7x 64 MiB per TensorCore)."""
    try:
        cap = pltpu.get_tpu_info().vmem_capacity_bytes
        return max(8 * 2**20, min(cap // 5, 24 * 2**20))
    except Exception:
        return 10 * 2**20


def _step_vmem_bytes(th, Wp, Cpad, SO, K):
    a = Cpad * ((th + K - 1) * Wp + K) * 2            # bf16 activation tile
    o = SO * th * Wp * 4                              # f32 output tile
    w = K * K * SO * max(Cpad, 128) * 2               # resident weights (lane-padded)
    return 2 * a + 2 * o + w                          # in/out are double-buffered


def _choose_row_tile(B, Ho1, Wp, Cpad, SO, K):
    """Output rows per tile: as large as fits the VMEM budget, while keeping the
    parallel grid step count >= 2 (and even) so both v7x TensorCores get work."""
    budget = _vmem_budget_bytes()
    th = Ho1
    while th > 1 and _step_vmem_bytes(th, Wp, Cpad, SO, K) > budget:
        th = (th + 1) // 2
    nt = -(-Ho1 // th)
    if B * nt < 2 and Ho1 >= 2:
        nt = 2
    if (B * nt) % 2 == 1 and nt < Ho1:
        nt += 1
    th = -(-Ho1 // nt)
    nt = -(-Ho1 // th)
    return th, nt


# ------------------------------ JAX glue -------------------------------------
def init_relaxed_ses_conv_h_h(key, in_channels, out_channels, scale_size,
                              kernel_size, effective_size, scales=(1.0,),
                              stride=1, padding=0, bias=True, final_layer=False):
    num_scales = len(scales)
    num_funcs = effective_size * effective_size
    kb, kw, kbias = jax.random.split(key, 3)
    # TODO(synk): steerable_A / normalize_basis_by_min_scale (Hermite-Gaussian
    # multi-scale basis) are not available here; a deterministic random basis of
    # the correct shape [num_funcs, num_scales, K, K] stands in for it.
    basis = jax.random.normal(
        kb, (num_funcs, num_scales, kernel_size, kernel_size), jnp.float32)
    stdv = math.sqrt(1.0 / (kernel_size * kernel_size * in_channels * num_funcs))
    weight = jax.random.uniform(
        kw, (out_channels, in_channels, scale_size, num_funcs,
             kernel_size, kernel_size), jnp.float32, -stdv, stdv)
    # The module zero-initialises bias; small random values here so the bias
    # path is actually exercised by the reference check.
    b = (0.1 * jax.random.normal(kbias, (out_channels,), jnp.float32)
         if bias else None)
    return dict(weight=weight, basis=basis, bias=b, scale_size=scale_size,
                kernel_size=kernel_size, stride=stride, padding=padding,
                final_layer=final_layer)


def relaxed_ses_conv_h_h_forward(params, x):
    """x: [B, C, S, H, W] -> [B, O, S, H_out, W_out] (same as the PyTorch forward)."""
    weight, basis, bias = params['weight'], params['basis'], params['bias']
    SS, K = params['scale_size'], params['kernel_size']
    stride, padding = params['stride'], params['padding']
    O, C = weight.shape[0], weight.shape[1]
    S = basis.shape[1]
    B, _, _, H, W = x.shape

    # ---- weights: apply basis, then block-banded over the scale window -------
    # kfull[s, o, c, i] = sum_f weight[o, c, i, f] * basis[f, s]
    kfull = jnp.einsum('ocifhw,fshw->socihw', weight, basis)    # [S,O,C,SS,K,K]
    S_in = S + SS - 1                                           # un-duplicated input scales
    Ctot = S_in * C
    Cpad = _round_up(Ctot, 16)                                  # bf16 sublane pack only
    SO = S * O

    w_taps = jnp.zeros((K * K, SO, Cpad), jnp.float32)
    for s in range(S):
        for i in range(SS):
            blk = kfull[s, :, :, i]                             # [O, C, K, K]
            blk = blk.transpose(2, 3, 0, 1).reshape(K * K, O, C)
            w_taps = w_taps.at[:, s * O:(s + 1) * O,
                               (s + i) * C:(s + i + 1) * C].set(blk)
    w_taps = w_taps.astype(jnp.bfloat16)

    bias_vec = bias if bias is not None else jnp.zeros((O,), jnp.float32)
    bias_col = jnp.tile(bias_vec, S).reshape(SO, 1).astype(jnp.float32)

    # ---- activations: scale-pad, (scale, channel)-major, spatial pad, tiles --
    x_s = jnp.pad(x, ((0, 0), (0, 0), (0, SS - 1), (0, 0), (0, 0)))
    x_r = x_s.transpose(0, 2, 1, 3, 4).reshape(B, Ctot, H, W)   # rows = j*C + c
    xp = jnp.pad(x_r, ((0, 0), (0, 0), (padding, padding), (padding, padding)))
    Hp, Wp = H + 2 * padding, W + 2 * padding
    Ho1, Wo1 = Hp - K + 1, Wp - K + 1                           # stride-1 extents
    assert Ho1 >= 1 and Wo1 >= 1, "kernel larger than padded input"

    th, nt = _choose_row_tile(B, Ho1, Wp, Cpad, SO, K)
    Mo = th * Wp
    Lcols = (th + K - 1) * Wp + (K - 1)

    Hneed = nt * th + K - 1
    xp = jnp.pad(xp, ((0, 0), (0, 0), (0, Hneed - Hp), (0, 0)))
    tiles = jnp.stack([xp[:, :, t * th: t * th + th + K - 1, :]
                       for t in range(nt)], axis=1)             # [B,nt,Ctot,th+K-1,Wp]
    a_tiles = tiles.reshape(B * nt, Ctot, (th + K - 1) * Wp)
    a_tiles = jnp.pad(a_tiles, ((0, 0), (0, Cpad - Ctot), (0, K - 1)))
    a_tiles = a_tiles.astype(jnp.bfloat16)

    # ---- fused kernel --------------------------------------------------------
    G = B * nt
    need = _step_vmem_bytes(th, Wp, Cpad, SO, K)
    vmem_limit = int(min(max(2 * need, 16 * 2**20), 48 * 2**20))
    flops = 2 * G * (K * K) * SO * Cpad * Mo
    bytes_accessed = int(a_tiles.size * 2 + G * SO * Mo * 4
                         + w_taps.size * 2 + bias_col.size * 4)

    out_k = _ses_conv_fused(
        w_taps, bias_col, a_tiles, K=K, Wp=Wp, Mo=Mo,
        apply_relu=not params['final_layer'],
        vmem_limit_bytes=vmem_limit, flops=flops, bytes_accessed=bytes_accessed)

    # [B*nt, S*O, th*Wp] -> [B, O, S, Ho, Wo]
    out = out_k.reshape(B, nt, S, O, th, Wp)
    out = out.transpose(0, 3, 2, 1, 4, 5).reshape(B, O, S, nt * th, Wp)
    out = out[:, :, :, :Ho1, :Wo1]
    if stride > 1:
        out = out[:, :, :, ::stride, ::stride]
    return out


# --------------------------- pure-JAX reference ------------------------------
def reference_forward(params, x):
    weight, basis, bias = params['weight'], params['basis'], params['bias']
    SS, K = params['scale_size'], params['kernel_size']
    stride, padding = params['stride'], params['padding']
    S = basis.shape[1]
    kfull = jnp.einsum('ocifhw,fshw->socihw', weight, basis)    # [S,O,C,SS,K,K]
    xp = jnp.pad(x, ((0, 0), (0, 0), (0, SS - 1), (0, 0), (0, 0)))
    out = 0.0
    for i in range(SS):
        per_scale = []
        for s in range(S):
            y = jax.lax.conv_general_dilated(
                xp[:, :, s + i], kfull[s, :, :, i],
                window_strides=(stride, stride),
                padding=((padding, padding), (padding, padding)),
                dimension_numbers=('NCHW', 'OIHW', 'NCHW'))
            per_scale.append(y)
        out = out + jnp.stack(per_scale, axis=2)                # [B, O, S, Ho, Wo]
    if bias is not None:
        out = out + bias[None, :, None, None, None]
    if not params['final_layer']:
        out = jnp.maximum(out, 0.0)
    return out


if __name__ == "__main__":
    key = jax.random.PRNGKey(0)
    kx, kp = jax.random.split(key)

    B, C_in, C_out = 2, 4, 8
    num_scales, scale_size = 2, 2
    H = W = 16
    K, eff = 5, 3
    scales = [1.0, 1.5]

    params = init_relaxed_ses_conv_h_h(
        kp, C_in, C_out, scale_size, K, eff, scales=scales,
        stride=1, padding=K // 2, bias=True, final_layer=False)
    x = jax.random.normal(kx, (B, C_in, num_scales, H, W), jnp.float32)

    fwd = jax.jit(lambda inp: relaxed_ses_conv_h_h_forward(params, inp))
    y = fwd(x)
    jax.block_until_ready(y)
    assert y.shape == (B, C_out, num_scales, H, W), y.shape

    y_ref = reference_forward(params, x)
    rel_err = float(jnp.max(jnp.abs(y - y_ref)) /
                    (jnp.max(jnp.abs(y_ref)) + 1e-6))
    assert rel_err < 2e-2, f"mismatch vs reference: rel_err={rel_err}"

    print("KERNEL_OK")
</pallas_src>

<mosaic_0001>
module attributes {stable_mosaic.version = 11 : i64} {
  func.func @_ses_hh_fused_kernel(%arg0: i32, %arg1: memref<25x16x16xbf16, #tpu.memory_space<vmem>>, %arg2: memref<16x1xf32, #tpu.memory_space<vmem>>, %arg3: memref<1x16x404xbf16, #tpu.memory_space<vmem>>, %arg4: memref<1x16x320xf32, #tpu.memory_space<vmem>>) attributes {dimension_semantics = [#tpu.dimension_semantics<parallel>], iteration_bounds = array<i64: 2>, scalar_prefetch = 0 : i64, scratch_operands = 0 : i64, tpu.core_type = #tpu.core_type<tc>, window_params = [{pipeline_mode = #tpu.pipeline_mode<synchronous>, transform_indices = @transform_0, window_bounds = array<i64: 25, 16, 16>}, {pipeline_mode = #tpu.pipeline_mode<synchronous>, transform_indices = @transform_1, window_bounds = array<i64: 16, 1>}, {transform_indices = @transform_2, window_bounds = array<i64: 1, 16, 404>}, {transform_indices = @transform_3, window_bounds = array<i64: 1, 16, 320>}]} {
    %cst = arith.constant 0.000000e+00 : f32
    %0 = vector.broadcast %cst : f32 to vector<16x320xf32>
    %c0 = arith.constant 0 : index
    %c0_0 = arith.constant 0 : index
    %c0_1 = arith.constant 0 : index
    %1 = vector.load %arg4[%c0, %c0_0, %c0_1] : memref<1x16x320xf32, #tpu.memory_space<vmem>>, vector<1x16x320xf32>
    %2 = vector.shape_cast %1 : vector<1x16x320xf32> to vector<16x320xf32>
    %3 = vector.shape_cast %0 : vector<16x320xf32> to vector<1x16x320xf32>
    tpu.vector_store %arg4[%c0, %c0_0, %c0_1], %3 {strides = array<i32>} : memref<1x16x320xf32, #tpu.memory_space<vmem>>, vector<1x16x320xf32>,
    %c0_2 = arith.constant 0 : index
    %c0_3 = arith.constant 0 : index
    %c0_4 = arith.constant 0 : index
    %4 = vector.load %arg4[%c0_2, %c0_3, %c0_4] : memref<1x16x320xf32, #tpu.memory_space<vmem>>, vector<1x16x320xf32>
    %5 = vector.shape_cast %4 : vector<1x16x320xf32> to vector<16x320xf32>
    %c0_5 = arith.constant 0 : index
    %c0_6 = arith.constant 0 : index
    %c0_7 = arith.constant 0 : index
    %6 = vector.load %arg1[%c0_5, %c0_6, %c0_7] : memref<25x16x16xbf16, #tpu.memory_space<vmem>>, vector<1x16x16xbf16>
    %7 = vector.shape_cast %6 : vector<1x16x16xbf16> to vector<16x16xbf16>
    %c0_8 = arith.constant 0 : index
    %c0_9 = arith.constant 0 : index
    %c0_10 = arith.constant 0 : index
    %8 = vector.load %arg3[%c0_8, %c0_9, %c0_10] : memref<1x16x404xbf16, #tpu.memory_space<vmem>>, vector<1x16x320xbf16>
    %9 = vector.shape_cast %8 : vector<1x16x320xbf16> to vector<16x320xbf16>
    %cst_11 = arith.constant dense<0.000000e+00> : vector<16x320xf32>
    %10 = tpu.matmul %7, %9, %cst_11 {dimension_numbers = #tpu.dot_dimension_numbers<[1], [0], [0], [1], [0, 0, 1, 1], [], []>} : vector<16x16xbf16>, vector<16x320xbf16>, vector<16x320xf32> -> vector<16x320xf32>
    %11 = arith.addf %5, %10 : vector<16x320xf32>
    %c0_12 = arith.constant 0 : index
    %c0_13 = arith.constant 0 : index
    %c0_14 = arith.constant 0 : index
    %12 = vector.load %arg4[%c0_12, %c0_13, %c0_14] : memref<1x16x320xf32, #tpu.memory_space<vmem>>, vector<1x16x320xf32>
    %13 = vector.shape_cast %12 : vector<1x16x320xf32> to vector<16x320xf32>
    %14 = vector.shape_cast %11 : vector<16x320xf32> to vector<1x16x320xf32>
    tpu.vector_store %arg4[%c0_12, %c0_13, %c0_14], %14 {strides = array<i32>} : memref<1x16x320xf32, #tpu.memory_space<vmem>>, vector<1x16x320xf32>,
    %c0_15 = arith.constant 0 : index
    %c0_16 = arith.constant 0 : index
    %c0_17 = arith.constant 0 : index
    %15 = vector.load %arg4[%c0_15, %c0_16, %c0_17] : memref<1x16x320xf32, #tpu.memory_space<vmem>>, vector<1x16x320xf32>
    %16 = vector.shape_cast %15 : vector<1x16x320xf32> to vector<16x320xf32>
    %c1 = arith.constant 1 : index
    %c0_18 = arith.constant 0 : index
    %c0_19 = arith.constant 0 : index
    %17 = vector.load %arg1[%c1, %c0_18, %c0_19] : memref<25x16x16xbf16, #tpu.memory_space<vmem>>, vector<1x16x16xbf16>
    %18 = vector.shape_cast %17 : vector<1x16x16xbf16> to vector<16x16xbf16>
    %c0_20 = arith.constant 0 : index
    %c0_21 = arith.constant 0 : index
    %c1_22 = arith.constant 1 : index
    %19 = vector.load %arg3[%c0_20, %c0_21, %c1_22] : memref<1x16x404xbf16, #tpu.memory_space<vmem>>, vector<1x16x320xbf16>
    %20 = vector.shape_cast %19 : vector<1x16x320xbf16> to vector<16x320xbf16>
    %cst_23 = arith.constant dense<0.000000e+00> : vector<16x320xf32>
    %21 = tpu.matmul %18, %20, %cst_23 {dimension_numbers = #tpu.dot_dimension_numbers<[1], [0], [0], [1], [0, 0, 1, 1], [], []>} : vector<16x16xbf16>, vector<16x320xbf16>, vector<16x320xf32> -> vector<16x320xf32>
    %22 = arith.addf %16, %21 : vector<16x320xf32>
    %c0_24 = arith.constant 0 : index
    %c0_25 = arith.constant 0 : index
    %c0_26 = arith.constant 0 : index
    %23 = vector.load %arg4[%c0_24, %c0_25, %c0_26] : memref<1x16x320xf32, #tpu.memory_space<vmem>>, vector<1x16x320xf32>
    %24 = vector.shape_cast %23 : vector<1x16x320xf32> to vector<16x320xf32>
    %25 = vector.shape_cast %22 : vector<16x320xf32> to vector<1x16x320xf32>
    tpu.vector_store %arg4[%c0_24, %c0_25, %c0_26], %25 {strides = array<i32>} : memref<1x16x320xf32, #tpu.memory_space<vmem>>, vector<1x16x320xf32>,
    %c0_27 = arith.constant 0 : index
    %c0_28 = arith.constant 0 : index
    %c0_29 = arith.constant 0 : index
    %26 = vector.load %arg4[%c0_27, %c0_28, %c0_29] : memref<1x16x320xf32, #tpu.memory_space<vmem>>, vector<1x16x320xf32>
    %27 = vector.shape_cast %26 : vector<1x16x320xf32> to vector<16x320xf32>
    %c2 = arith.constant 2 : index
    %c0_30 = arith.constant 0 : index
    %c0_31 = arith.constant 0 : index
    %28 = vector.load %arg1[%c2, %c0_30, %c0_31] : memref<25x16x16xbf16, #tpu.memory_space<vmem>>, vector<1x16x16xbf16>
    %29 = vector.shape_cast %28 : vector<1x16x16xbf16> to vector<16x16xbf16>
    %c0_32 = arith.constant 0 : index
    %c0_33 = arith.constant 0 : index
    %c2_34 = arith.constant 2 : index
    %30 = vector.load %arg3[%c0_32, %c0_33, %c2_34] : memref<1x16x404xbf16, #tpu.memory_space<vmem>>, vector<1x16x320xbf16>
    %31 = vector.shape_cast %30 : vector<1x16x320xbf16> to vector<16x320xbf16>
    %cst_35 = arith.constant dense<0.000000e+00> : vector<16x320xf32>
    %32 = tpu.matmul %29, %31, %cst_35 {dimension_numbers = #tpu.dot_dimension_numbers<[1], [0], [0], [1], [0, 0, 1, 1], [], []>} : vector<16x16xbf16>, vector<16x320xbf16>, vector<16x320xf32> -> vector<16x320xf32>
    %33 = arith.addf %27, %32 : vector<16x320xf32>
    %c0_36 = arith.constant 0 : index
    %c0_37 = arith.constant 0 : index
    %c0_38 = arith.constant 0 : index
    %34 = vector.load %arg4[%c0_36, %c0_37, %c0_38] : memref<1x16x320xf32, #tpu.memory_space<vmem>>, vector<1x16x320xf32>
    %35 = vector.shape_cast %34 : vector<1x16x320xf32> to vector<16x320xf32>
    %36 = vector.shape_cast %33 : vector<16x320xf32> to vector<1x16x320xf32>
    tpu.vector_store %arg4[%c0_36, %c0_37, %c0_38], %36 {strides = array<i32>} : memref<1x16x320xf32, #tpu.memory_space<vmem>>, vector<1x16x320xf32>,
    %c0_39 = arith.constant 0 : index
    %c0_40 = arith.constant 0 : index
    %c0_41 = arith.constant 0 : index
    %37 = vector.load %arg4[%c0_39, %c0_40, %c0_41] : memref<1x16x320xf32, #tpu.memory_space<vmem>>, vector<1x16x320xf32>
    %38 = vector.shape_cast %37 : vector<1x16x320xf32> to vector<16x320xf32>
    %c3 = arith.constant 3 : index
    %c0_42 = arith.constant 0 : index
    %c0_43 = arith.constant 0 : index
    %39 = vector.load %arg1[%c3, %c0_42, %c0_43] : memref<25x16x16xbf16, #tpu.memory_space<vmem>>, vector<1x16x16xbf16>
    %40 = vector.shape_cast %39 : vector<1x16x16xbf16> to vector<16x16xbf16>
    %c0_44 = arith.constant 0 : index
    %c0_45 = arith.constant 0 : index
    %c3_46 = arith.constant 3 : index
    %41 = vector.load %arg3[%c0_44, %c0_45, %c3_46] : memref<1x16x404xbf16, #tpu.memory_space<vmem>>, vector<1x16x320xbf16>
    %42 = vector.shape_cast %41 : vector<1x16x320xbf16> to vector<16x320xbf16>
    %cst_47 = arith.constant dense<0.000000e+00> : vector<16x320xf32>
    %43 = tpu.matmul %40, %42, %cst_47 {dimension_numbers = #tpu.dot_dimension_numbers<[1], [0], [0], [1], [0, 0, 1, 1], [], []>} : vector<16x16xbf16>, vector<16x320xbf16>, vector<16x320xf32> -> vector<16x320xf32>
    %44 = arith.addf %38, %43 : vector<16x320xf32>
    %c0_48 = arith.constant 0 : index
    %c0_49 = arith.constant 0 : index
    %c0_50 = arith.constant 0 : index
    %45 = vector.load %arg4[%c0_48, %c0_49, %c0_50] : memref<1x16x320xf32, #tpu.memory_space<vmem>>, vector<1x16x320xf32>
    %46 = vector.shape_cast %45 : vector<1x16x320xf32> to vector<16x320xf32>
    %47 = vector.shape_cast %44 : vector<16x320xf32> to vector<1x16x320xf32>
    tpu.vector_store %arg4[%c0_48, %c0_49, %c0_50], %47 {strides = array<i32>} : memref<1x16x320xf32, #tpu.memory_space<vmem>>, vector<1x16x320xf32>,
    %c0_51 = arith.constant 0 : index
    %c0_52 = arith.constant 0 : index
    %c0_53 = arith.constant 0 : index
    %48 = vector.load %arg4[%c0_51, %c0_52, %c0_53] : memref<1x16x320xf32, #tpu.memory_space<vmem>>, vector<1x16x320xf32>
    %49 = vector.shape_cast %48 : vector<1x16x320xf32> to vector<16x320xf32>
    %c4 = arith.constant 4 : index
    %c0_54 = arith.constant 0 : index
    %c0_55 = arith.constant 0 : index
    %50 = vector.load %arg1[%c4, %c0_54, %c0_55] : memref<25x16x16xbf16, #tpu.memory_space<vmem>>, vector<1x16x16xbf16>
    %51 = vector.shape_cast %50 : vector<1x16x16xbf16> to vector<16x16xbf16>
    %c0_56 = arith.constant 0 : index
    %c0_57 = arith.constant 0 : index
    %c4_58 = arith.constant 4 : index
    %52 = vector.load %arg3[%c0_56, %c0_57, %c4_58] : memref<1x16x404xbf16, #tpu.memory_space<vmem>>, vector<1x16x320xbf16>
    %53 = vector.shape_cast %52 : vector<1x16x320xbf16> to vector<16x320xbf16>
    %cst_59 = arith.constant dense<0.000000e+00> : vector<16x320xf32>
    %54 = tpu.matmul %51, %53, %cst_59 {dimension_numbers = #tpu.dot_dimension_numbers<[1], [0], [0], [1], [0, 0, 1, 1], [], []>} : vector<16x16xbf16>, vector<16x320xbf16>, vector<16x320xf32> -> vector<16x320xf32>
    %55 = arith.addf %49, %54 : vector<16x320xf32>
    %c0_60 = arith.constant 0 : index
    %c0_61 = arith.constant 0 : index
    %c0_62 = arith.constant 0 : index
    %56 = vector.load %arg4[%c0_60, %c0_61, %c0_62] : memref<1x16x320xf32, #tpu.memory_space<vmem>>, vector<1x16x320xf32>
    %57 = vector.shape_cast %56 : vector<1x16x320xf32> to vector<16x320xf32>
    %58 = vector.shape_cast %55 : vector<16x320xf32> to vector<1x16x320xf32>
    tpu.vector_store %arg4[%c0_60, %c0_61, %c0_62], %58 {strides = array<i32>} : memref<1x16x320xf32, #tpu.memory_space<vmem>>, vector<1x16x320xf32>,
    %c0_63 = arith.constant 0 : index
    %c0_64 = arith.constant 0 : index
    %c0_65 = arith.constant 0 : index
    %59 = vector.load %arg4[%c0_63, %c0_64, %c0_65] : memref<1x16x320xf32, #tpu.memory_space<vmem>>, vector<1x16x320xf32>
    %60 = vector.shape_cast %59 : vector<1x16x320xf32> to vector<16x320xf32>
    %c5 = arith.constant 5 : index
    %c0_66 = arith.constant 0 : index
    %c0_67 = arith.constant 0 : index
    %61 = vector.load %arg1[%c5, %c0_66, %c0_67] : memref<25x16x16xbf16, #tpu.memory_space<vmem>>, vector<1x16x16xbf16>
    %62 = vector.shape_cast %61 : vector<1x16x16xbf16> to vector<16x16xbf16>
    %c0_68 = arith.constant 0 : index
    %c0_69 = arith.constant 0 : index
    %c20 = arith.constant 20 : index
    %63 = vector.load %arg3[%c0_68, %c0_69, %c20] : memref<1x16x404xbf16, #tpu.memory_space<vmem>>, vector<1x16x320xbf16>
    %64 = vector.shape_cast %63 : vector<1x16x320xbf16> to vector<16x320xbf16>
    %cst_70 = arith.constant dense<0.000000e+00> : vector<16x320xf32>
    %65 = tpu.matmul %62, %64, %cst_70 {dimension_numbers = #tpu.dot_dimension_numbers<[1], [0], [0], [1], [0, 0, 1, 1], [], []>} : vector<16x16xbf16>, vector<16x320xbf16>, vector<16x320xf32> -> vector<16x320xf32>
    %66 = arith.addf %60, %65 : vector<16x320xf32>
    %c0_71 = arith.constant 0 : index
    %c0_72 = arith.constant 0 : index
    %c0_73 = arith.constant 0 : index
    %67 = vector.load %arg4[%c0_71, %c0_72, %c0_73] : memref<1x16x320xf32, #tpu.memory_space<vmem>>, vector<1x16x320xf32>
    %68 = vector.shape_cast %67 : vector<1x16x320xf32> to vector<16x320xf32>
    %69 = vector.shape_cast %66 : vector<16x320xf32> to vector<1x16x320xf32>
    tpu.vector_store %arg4[%c0_71, %c0_72, %c0_73], %69 {strides = array<i32>} : memref<1x16x320xf32, #tpu.memory_space<vmem>>, vector<1x16x320xf32>,
    %c0_74 = arith.constant 0 : index
    %c0_75 = arith.constant 0 : index
    %c0_76 = arith.constant 0 : index
    %70 = vector.load %arg4[%c0_74, %c0_75, %c0_76] : memref<1x16x320xf32, #tpu.memory_space<vmem>>, vector<1x16x320xf32>
    %71 = vector.shape_cast %70 : vector<1x16x320xf32> to vector<16x320xf32>
    %c6 = arith.constant 6 : index
    %c0_77 = arith.constant 0 : index
    %c0_78 = arith.constant 0 : index
    %72 = vector.load %arg1[%c6, %c0_77, %c0_78] : memref<25x16x16xbf16, #tpu.memory_space<vmem>>, vector<1x16x16xbf16>
    %73 = vector.shape_cast %72 : vector<1x16x16xbf16> to vector<16x16xbf16>
    %c0_79 = arith.constant 0 : index
    %c0_80 = arith.constant 0 : index
    %c21 = arith.constant 21 : index
    %74 = vector.load %arg3[%c0_79, %c0_80, %c21] : memref<1x16x404xbf16, #tpu.memory_space<vmem>>, vector<1x16x320xbf16>
    %75 = vector.shape_cast %74 : vector<1x16x320xbf16> to vector<16x320xbf16>
    %cst_81 = arith.constant dense<0.000000e+00> : vector<16x320xf32>
    %76 = tpu.matmul %73, %75, %cst_81 {dimension_numbers = #tpu.dot_dimension_numbers<[1], [0], [0], [1], [0, 0, 1, 1], [], []>} : vector<16x16xbf16>, vector<16x320xbf16>, vector<16x320xf32> -> vector<16x320xf32>
    %77 = arith.addf %71, %76 : vector<16x320xf32>
    %c0_82 = arith.constant 0 : index
    %c0_83 = arith.constant 0 : index
    %c0_84 = arith.constant 0 : index
    %78 = vector.load %arg4[%c0_82, %c0_83, %c0_84] : memref<1x16x320xf32, #tpu.memory_space<vmem>>, vector<1x16x320xf32>
    %79 = vector.shape_cast %78 : vector<1x16x320xf32> to vector<16x320xf32>
    %80 = vector.shape_cast %77 : vector<16x320xf32> to vector<1x16x320xf32>
    tpu.vector_store %arg4[%c0_82, %c0_83, %c0_84], %80 {strides = array<i32>} : memref<1x16x320xf32, #tpu.memory_space<vmem>>, vector<1x16x320xf32>,
    %c0_85 = arith.constant 0 : index
    %c0_86 = arith.constant 0 : index
    %c0_87 = arith.constant 0 : index
    %81 = vector.load %arg4[%c0_85, %c0_86, %c0_87] : memref<1x16x320xf32, #tpu.memory_space<vmem>>, vector<1x16x320xf32>
    %82 = vector.shape_cast %81 : vector<1x16x320xf32> to vector<16x320xf32>
    %c7 = arith.constant 7 : index
    %c0_88 = arith.constant 0 : index
    %c0_89 = arith.constant 0 : index
    %83 = vector.load %arg1[%c7, %c0_88, %c0_89] : memref<25x16x16xbf16, #tpu.memory_space<vmem>>, vector<1x16x16xbf16>
    %84 = vector.shape_cast %83 : vector<1x16x16xbf16> to vector<16x16xbf16>
    %c0_90 = arith.constant 0 : index
    %c0_91 = arith.constant 0 : index
    %c22 = arith.constant 22 : index
    %85 = vector.load %arg3[%c0_90, %c0_91, %c22] : memref<1x16x404xbf16, #tpu.memory_space<vmem>>, vector<1x16x320xbf16>
    %86 = vector.shape_cast %85 : vector<1x16x320xbf16> to vector<16x320xbf16>
    %cst_92 = arith.constant dense<0.000000e+00> : vector<16x320xf32>
    %87 = tpu.matmul %84, %86, %cst_92 {dimension_numbers = #tpu.dot_dimension_numbers<[1], [0], [0], [1], [0, 0, 1, 1], [], []>} : vector<16x16xbf16>, vector<16x320xbf16>, vector<16x320xf32> -> vector<16x320xf32>
    %88 = arith.addf %82, %87 : vector<16x320xf32>
    %c0_93 = arith.constant 0 : index
    %c0_94 = arith.constant 0 : index
    %c0_95 = arith.constant 0 : index
    %89 = vector.load %arg4[%c0_93, %c0_94, %c0_95] : memref<1x16x320xf32, #tpu.memory_space<vmem>>, vector<1x16x320xf32>
    %90 = vector.shape_cast %89 : vector<1x16x320xf32> to vector<16x320xf32>
    %91 = vector.shape_cast %88 : vector<16x320xf32> to vector<1x16x320xf32>
    tpu.vector_store %arg4[%c0_93, %c0_94, %c0_95], %91 {strides = array<i32>} : memref<1x16x320xf32, #tpu.memory_space<vmem>>, vector<1x16x320xf32>,
    %c0_96 = arith.constant 0 : index
    %c0_97 = arith.constant 0 : index
    %c0_98 = arith.constant 0 : index
    %92 = vector.load %arg4[%c0_96, %c0_97, %c0_98] : memref<1x16x320xf32, #tpu.memory_space<vmem>>, vector<1x16x320xf32>
    %93 = vector.shape_cast %92 : vector<1x16x320xf32> to vector<16x320xf32>
    %c8 = arith.constant 8 : index
    %c0_99 = arith.constant 0 : index
    %c0_100 = arith.constant 0 : index
    %94 = vector.load %arg1[%c8, %c0_99, %c0_100] : memref<25x16x16xbf16, #tpu.memory_space<vmem>>, vector<1x16x16xbf16>
    %95 = vector.shape_cast %94 : vector<1x16x16xbf16> to vector<16x16xbf16>
    %c0_101 = arith.constant 0 : index
    %c0_102 = arith.constant 0 : index
    %c23 = arith.constant 23 : index
    %96 = vector.load %arg3[%c0_101, %c0_102, %c23] : memref<1x16x404xbf16, #tpu.memory_space<vmem>>, vector<1x16x320xbf16>
    %97 = vector.shape_cast %96 : vector<1x16x320xbf16> to vector<16x320xbf16>
    %cst_103 = arith.constant dense<0.000000e+00> : vector<16x320xf32>
    %98 = tpu.matmul %95, %97, %cst_103 {dimension_numbers = #tpu.dot_dimension_numbers<[1], [0], [0], [1], [0, 0, 1, 1], [], []>} : vector<16x16xbf16>, vector<16x320xbf16>, vector<16x320xf32> -> vector<16x320xf32>
    %99 = arith.addf %93, %98 : vector<16x320xf32>
    %c0_104 = arith.constant 0 : index
    %c0_105 = arith.constant 0 : index
    %c0_106 = arith.constant 0 : index
    %100 = vector.load %arg4[%c0_104, %c0_105, %c0_106] : memref<1x16x320xf32, #tpu.memory_space<vmem>>, vector<1x16x320xf32>
    %101 = vector.shape_cast %100 : vector<1x16x320xf32> to vector<16x320xf32>
    %102 = vector.shape_cast %99 : vector<16x320xf32> to vector<1x16x320xf32>
    tpu.vector_store %arg4[%c0_104, %c0_105, %c0_106], %102 {strides = array<i32>} : memref<1x16x320xf32, #tpu.memory_space<vmem>>, vector<1x16x320xf32>,
    %c0_107 = arith.constant 0 : index
    %c0_108 = arith.constant 0 : index
    %c0_109 = arith.constant 0 : index
    %103 = vector.load %arg4[%c0_107, %c0_108, %c0_109] : memref<1x16x320xf32, #tpu.memory_space<vmem>>, vector<1x16x320xf32>
    %104 = vector.shape_cast %103 : vector<1x16x320xf32> to vector<16x320xf32>
    %c9 = arith.constant 9 : index
    %c0_110 = arith.constant 0 : index
    %c0_111 = arith.constant 0 : index
    %105 = vector.load %arg1[%c9, %c0_110, %c0_111] : memref<25x16x16xbf16, #tpu.memory_space<vmem>>, vector<1x16x16xbf16>
    %106 = vector.shape_cast %105 : vector<1x16x16xbf16> to vector<16x16xbf16>
    %c0_112 = arith.constant 0 : index
    %c0_113 = arith.constant 0 : index
    %c24 = arith.constant 24 : index
    %107 = vector.load %arg3[%c0_112, %c0_113, %c24] : memref<1x16x404xbf16, #tpu.memory_space<vmem>>, vector<1x16x320xbf16>
    %108 = vector.shape_cast %107 : vector<1x16x320xbf16> to vector<16x320xbf16>
    %cst_114 = arith.constant dense<0.000000e+00> : vector<16x320xf32>
    %109 = tpu.matmul %106, %108, %cst_114 {dimension_numbers = #tpu.dot_dimension_numbers<[1], [0], [0], [1], [0, 0, 1, 1], [], []>} : vector<16x16xbf16>, vector<16x320xbf16>, vector<16x320xf32> -> vector<16x320xf32>
    %110 = arith.addf %104, %109 : vector<16x320xf32>
    %c0_115 = arith.constant 0 : index
    %c0_116 = arith.constant 0 : index
    %c0_117 = arith.constant 0 : index
    %111 = vector.load %arg4[%c0_115, %c0_116, %c0_117] : memref<1x16x320xf32, #tpu.memory_space<vmem>>, vector<1x16x320xf32>
    %112 = vector.shape_cast %111 : vector<1x16x320xf32> to vector<16x320xf32>
    %113 = vector.shape_cast %110 : vector<16x320xf32> to vector<1x16x320xf32>
    tpu.vector_store %arg4[%c0_115, %c0_116, %c0_117], %113 {strides = array<i32>} : memref<1x16x320xf32, #tpu.memory_space<vmem>>, vector<1x16x320xf32>,
    %c0_118 = arith.constant 0 : index
    %c0_119 = arith.constant 0 : index
    %c0_120 = arith.constant 0 : index
    %114 = vector.load %arg4[%c0_118, %c0_119, %c0_120] : memref<1x16x320xf32, #tpu.memory_space<vmem>>, vector<1x16x320xf32>
    %115 = vector.shape_cast %114 : vector<1x16x320xf32> to vector<16x320xf32>
    %c10 = arith.constant 10 : index
    %c0_121 = arith.constant 0 : index
    %c0_122 = arith.constant 0 : index
    %116 = vector.load %arg1[%c10, %c0_121, %c0_122] : memref<25x16x16xbf16, #tpu.memory_space<vmem>>, vector<1x16x16xbf16>
    %117 = vector.shape_cast %116 : vector<1x16x16xbf16> to vector<16x16xbf16>
    %c0_123 = arith.constant 0 : index
    %c0_124 = arith.constant 0 : index
    %c40 = arith.constant 40 : index
    %118 = vector.load %arg3[%c0_123, %c0_124, %c40] : memref<1x16x404xbf16, #tpu.memory_space<vmem>>, vector<1x16x320xbf16>
    %119 = vector.shape_cast %118 : vector<1x16x320xbf16> to vector<16x320xbf16>
    %cst_125 = arith.constant dense<0.000000e+00> : vector<16x320xf32>
    %120 = tpu.matmul %117, %119, %cst_125 {dimension_numbers = #tpu.dot_dimension_numbers<[1], [0], [0], [1], [0, 0, 1, 1], [], []>} : vector<16x16xbf16>, vector<16x320xbf16>, vector<16x320xf32> -> vector<16x320xf32>
    %121 = arith.addf %115, %120 : vector<16x320xf32>
    %c0_126 = arith.constant 0 : index
    %c0_127 = arith.constant 0 : index
    %c0_128 = arith.constant 0 : index
    %122 = vector.load %arg4[%c0_126, %c0_127, %c0_128] : memref<1x16x320xf32, #tpu.memory_space<vmem>>, vector<1x16x320xf32>
    %123 = vector.shape_cast %122 : vector<1x16x320xf32> to vector<16x320xf32>
    %124 = vector.shape_cast %121 : vector<16x320xf32> to vector<1x16x320xf32>
    tpu.vector_store %arg4[%c0_126, %c0_127, %c0_128], %124 {strides = array<i32>} : memref<1x16x320xf32, #tpu.memory_space<vmem>>, vector<1x16x320xf32>,
    %c0_129 = arith.constant 0 : index
    %c0_130 = arith.constant 0 : index
    %c0_131 = arith.constant 0 : index
    %125 = vector.load %arg4[%c0_129, %c0_130, %c0_131] : memref<1x16x320xf32, #tpu.memory_space<vmem>>, vector<1x16x320xf32>
    %126 = vector.shape_cast %125 : vector<1x16x320xf32> to vector<16x320xf32>
    %c11 = arith.constant 11 : index
    %c0_132 = arith.constant 0 : index
    %c0_133 = arith.constant 0 : index
    %127 = vector.load %arg1[%c11, %c0_132, %c0_133] : memref<25x16x16xbf16, #tpu.memory_space<vmem>>, vector<1x16x16xbf16>
    %128 = vector.shape_cast %127 : vector<1x16x16xbf16> to vector<16x16xbf16>
    %c0_134 = arith.constant 0 : index
    %c0_135 = arith.constant 0 : index
    %c41 = arith.constant 41 : index
    %129 = vector.load %arg3[%c0_134, %c0_135, %c41] : memref<1x16x404xbf16, #tpu.memory_space<vmem>>, vector<1x16x320xbf16>
    %130 = vector.shape_cast %129 : vector<1x16x320xbf16> to vector<16x320xbf16>
    %cst_136 = arith.constant dense<0.000000e+00> : vector<16x320xf32>
    %131 = tpu.matmul %128, %130, %cst_136 {dimension_numbers = #tpu.dot_dimension_numbers<[1], [0], [0], [1], [0, 0, 1, 1], [], []>} : vector<16x16xbf16>, vector<16x320xbf16>, vector<16x320xf32> -> vector<16x320xf32>
    %132 = arith.addf %126, %131 : vector<16x320xf32>
    %c0_137 = arith.constant 0 : index
    %c0_138 = arith.constant 0 : index
    %c0_139 = arith.constant 0 : index
    %133 = vector.load %arg4[%c0_137, %c0_138, %c0_139] : memref<1x16x320xf32, #tpu.memory_space<vmem>>, vector<1x16x320xf32>
    %134 = vector.shape_cast %133 : vector<1x16x320xf32> to vector<16x320xf32>
    %135 = vector.shape_cast %132 : vector<16x320xf32> to vector<1x16x320xf32>
    tpu.vector_store %arg4[%c0_137, %c0_138, %c0_139], %135 {strides = array<i32>} : memref<1x16x320xf32, #tpu.memory_space<vmem>>, vector<1x16x320xf32>,
    %c0_140 = arith.constant 0 : index
    %c0_141 = arith.constant 0 : index
    %c0_142 = arith.constant 0 : index
    %136 = vector.load %arg4[%c0_140, %c0_141, %c0_142] : memref<1x16x320xf32, #tpu.memory_space<vmem>>, vector<1x16x320xf32>
    %137 = vector.shape_cast %136 : vector<1x16x320xf32> to vector<16x320xf32>
    %c12 = arith.constant 12 : index
    %c0_143 = arith.constant 0 : index
    %c0_144 = arith.constant 0 : index
    %138 = vector.load %arg1[%c12, %c0_143, %c0_144] : memref<25x16x16xbf16, #tpu.memory_space<vmem>>, vector<1x16x16xbf16>
    %139 = vector.shape_cast %138 : vector<1x16x16xbf16> to vector<16x16xbf16>
    %c0_145 = arith.constant 0 : index
    %c0_146 = arith.constant 0 : index
    %c42 = arith.constant 42 : index
    %140 = vector.load %arg3[%c0_145, %c0_146, %c42] : memref<1x16x404xbf16, #tpu.memory_space<vmem>>, vector<1x16x320xbf16>
    %141 = vector.shape_cast %140 : vector<1x16x320xbf16> to vector<16x320xbf16>
    %cst_147 = arith.constant dense<0.000000e+00> : vector<16x320xf32>
    %142 = tpu.matmul %139, %141, %cst_147 {dimension_numbers = #tpu.dot_dimension_numbers<[1], [0], [0], [1], [0, 0, 1, 1], [], []>} : vector<16x16xbf16>, vector<16x320xbf16>, vector<16x320xf32> -> vector<16x320xf32>
    %143 = arith.addf %137, %142 : vector<16x320xf32>
    %c0_148 = arith.constant 0 : index
    %c0_149 = arith.constant 0 : index
    %c0_150 = arith.constant 0 : index
    %144 = vector.load %arg4[%c0_148, %c0_149, %c0_150] : memref<1x16x320xf32, #tpu.memory_space<vmem>>, vector<1x16x320xf32>
    %145 = vector.shape_cast %144 : vector<1x16x320xf32> to vector<16x320xf32>
    %146 = vector.shape_cast %143 : vector<16x320xf32> to vector<1x16x320xf32>
    tpu.vector_store %arg4[%c0_148, %c0_149, %c0_150], %146 {strides = array<i32>} : memref<1x16x320xf32, #tpu.memory_space<vmem>>, vector<1x16x320xf32>,
    %c0_151 = arith.constant 0 : index
    %c0_152 = arith.constant 0 : index
    %c0_153 = arith.constant 0 : index
    %147 = vector.load %arg4[%c0_151, %c0_152, %c0_153] : memref<1x16x320xf32, #tpu.memory_space<vmem>>, vector<1x16x320xf32>
    %148 = vector.shape_cast %147 : vector<1x16x320xf32> to vector<16x320xf32>
    %c13 = arith.constant 13 : index
    %c0_154 = arith.constant 0 : index
    %c0_155 = arith.constant 0 : index
    %149 = vector.load %arg1[%c13, %c0_154, %c0_155] : memref<25x16x16xbf16, #tpu.memory_space<vmem>>, vector<1x16x16xbf16>
    %150 = vector.shape_cast %149 : vector<1x16x16xbf16> to vector<16x16xbf16>
    %c0_156 = arith.constant 0 : index
    %c0_157 = arith.constant 0 : index
    %c43 = arith.constant 43 : index
    %151 = vector.load %arg3[%c0_156, %c0_157, %c43] : memref<1x16x404xbf16, #tpu.memory_space<vmem>>, vector<1x16x320xbf16>
    %152 = vector.shape_cast %151 : vector<1x16x320xbf16> to vector<16x320xbf16>
    %cst_158 = arith.constant dense<0.000000e+00> : vector<16x320xf32>
    %153 = tpu.matmul %150, %152, %cst_158 {dimension_numbers = #tpu.dot_dimension_numbers<[1], [0], [0], [1], [0, 0, 1, 1], [], []>} : vector<16x16xbf16>, vector<16x320xbf16>, vector<16x320xf32> -> vector<16x320xf32>
    %154 = arith.addf %148, %153 : vector<16x320xf32>
    %c0_159 = arith.constant 0 : index
    %c0_160 = arith.constant 0 : index
    %c0_161 = arith.constant 0 : index
    %155 = vector.load %arg4[%c0_159, %c0_160, %c0_161] : memref<1x16x320xf32, #tpu.memory_space<vmem>>, vector<1x16x320xf32>
    %156 = vector.shape_cast %155 : vector<1x16x320xf32> to vector<16x320xf32>
    %157 = vector.shape_cast %154 : vector<16x320xf32> to vector<1x16x320xf32>
    tpu.vector_store %arg4[%c0_159, %c0_160, %c0_161], %157 {strides = array<i32>} : memref<1x16x320xf32, #tpu.memory_space<vmem>>, vector<1x16x320xf32>,
    %c0_162 = arith.constant 0 : index
    %c0_163 = arith.constant 0 : index
    %c0_164 = arith.constant 0 : index
    %158 = vector.load %arg4[%c0_162, %c0_163, %c0_164] : memref<1x16x320xf32, #tpu.memory_space<vmem>>, vector<1x16x320xf32>
    %159 = vector.shape_cast %158 : vector<1x16x320xf32> to vector<16x320xf32>
    %c14 = arith.constant 14 : index
    %c0_165 = arith.constant 0 : index
    %c0_166 = arith.constant 0 : index
    %160 = vector.load %arg1[%c14, %c0_165, %c0_166] : memref<25x16x16xbf16, #tpu.memory_space<vmem>>, vector<1x16x16xbf16>
    %161 = vector.shape_cast %160 : vector<1x16x16xbf16> to vector<16x16xbf16>
    %c0_167 = arith.constant 0 : index
    %c0_168 = arith.constant 0 : index
    %c44 = arith.constant 44 : index
    %162 = vector.load %arg3[%c0_167, %c0_168, %c44] : memref<1x16x404xbf16, #tpu.memory_space<vmem>>, vector<1x16x320xbf16>
    %163 = vector.shape_cast %162 : vector<1x16x320xbf16> to vector<16x320xbf16>
    %cst_169 = arith.constant dense<0.000000e+00> : vector<16x320xf32>
    %164 = tpu.matmul %161, %163, %cst_169 {dimension_numbers = #tpu.dot_dimension_numbers<[1], [0], [0], [1], [0, 0, 1, 1], [], []>} : vector<16x16xbf16>, vector<16x320xbf16>, vector<16x320xf32> -> vector<16x320xf32>
    %165 = arith.addf %159, %164 : vector<16x320xf32>
    %c0_170 = arith.constant 0 : index
    %c0_171 = arith.constant 0 : index
    %c0_172 = arith.constant 0 : index
    %166 = vector.load %arg4[%c0_170, %c0_171, %c0_172] : memref<1x16x320xf32, #tpu.memory_space<vmem>>, vector<1x16x320xf32>
    %167 = vector.shape_cast %166 : vector<1x16x320xf32> to vector<16x320xf32>
    %168 = vector.shape_cast %165 : vector<16x320xf32> to vector<1x16x320xf32>
    tpu.vector_store %arg4[%c0_170, %c0_171, %c0_172], %168 {strides = array<i32>} : memref<1x16x320xf32, #tpu.memory_space<vmem>>, vector<1x16x320xf32>,
    %c0_173 = arith.constant 0 : index
    %c0_174 = arith.constant 0 : index
    %c0_175 = arith.constant 0 : index
    %169 = vector.load %arg4[%c0_173, %c0_174, %c0_175] : memref<1x16x320xf32, #tpu.memory_space<vmem>>, vector<1x16x320xf32>
    %170 = vector.shape_cast %169 : vector<1x16x320xf32> to vector<16x320xf32>
    %c15 = arith.constant 15 : index
    %c0_176 = arith.constant 0 : index
    %c0_177 = arith.constant 0 : index
    %171 = vector.load %arg1[%c15, %c0_176, %c0_177] : memref<25x16x16xbf16, #tpu.memory_space<vmem>>, vector<1x16x16xbf16>
    %172 = vector.shape_cast %171 : vector<1x16x16xbf16> to vector<16x16xbf16>
    %c0_178 = arith.constant 0 : index
    %c0_179 = arith.constant 0 : index
    %c60 = arith.constant 60 : index
    %173 = vector.load %arg3[%c0_178, %c0_179, %c60] : memref<1x16x404xbf16, #tpu.memory_space<vmem>>, vector<1x16x320xbf16>
    %174 = vector.shape_cast %173 : vector<1x16x320xbf16> to vector<16x320xbf16>
    %cst_180 = arith.constant dense<0.000000e+00> : vector<16x320xf32>
    %175 = tpu.matmul %172, %174, %cst_180 {dimension_numbers = #tpu.dot_dimension_numbers<[1], [0], [0], [1], [0, 0, 1, 1], [], []>} : vector<16x16xbf16>, vector<16x320xbf16>, vector<16x320xf32> -> vector<16x320xf32>
    %176 = arith.addf %170, %175 : vector<16x320xf32>
    %c0_181 = arith.constant 0 : index
    %c0_182 = arith.constant 0 : index
    %c0_183 = arith.constant 0 : index
    %177 = vector.load %arg4[%c0_181, %c0_182, %c0_183] : memref<1x16x320xf32, #tpu.memory_space<vmem>>, vector<1x16x320xf32>
    %178 = vector.shape_cast %177 : vector<1x16x320xf32> to vector<16x320xf32>
    %179 = vector.shape_cast %176 : vector<16x320xf32> to vector<1x16x320xf32>
    tpu.vector_store %arg4[%c0_181, %c0_182, %c0_183], %179 {strides = array<i32>} : memref<1x16x320xf32, #tpu.memory_space<vmem>>, vector<1x16x320xf32>,
    %c0_184 = arith.constant 0 : index
    %c0_185 = arith.constant 0 : index
    %c0_186 = arith.constant 0 : index
    %180 = vector.load %arg4[%c0_184, %c0_185, %c0_186] : memref<1x16x320xf32, #tpu.memory_space<vmem>>, vector<1x16x320xf32>
    %181 = vector.shape_cast %180 : vector<1x16x320xf32> to vector<16x320xf32>
    %c16 = arith.constant 16 : index
    %c0_187 = arith.constant 0 : index
    %c0_188 = arith.constant 0 : index
    %182 = vector.load %arg1[%c16, %c0_187, %c0_188] : memref<25x16x16xbf16, #tpu.memory_space<vmem>>, vector<1x16x16xbf16>
    %183 = vector.shape_cast %182 : vector<1x16x16xbf16> to vector<16x16xbf16>
    %c0_189 = arith.constant 0 : index
    %c0_190 = arith.constant 0 : index
    %c61 = arith.constant 61 : index
    %184 = vector.load %arg3[%c0_189, %c0_190, %c61] : memref<1x16x404xbf16, #tpu.memory_space<vmem>>, vector<1x16x320xbf16>
    %185 = vector.shape_cast %184 : vector<1x16x320xbf16> to vector<16x320xbf16>
    %cst_191 = arith.constant dense<0.000000e+00> : vector<16x320xf32>
    %186 = tpu.matmul %183, %185, %cst_191 {dimension_numbers = #tpu.dot_dimension_numbers<[1], [0], [0], [1], [0, 0, 1, 1], [], []>} : vector<16x16xbf16>, vector<16x320xbf16>, vector<16x320xf32> -> vector<16x320xf32>
    %187 = arith.addf %181, %186 : vector<16x320xf32>
    %c0_192 = arith.constant 0 : index
    %c0_193 = arith.constant 0 : index
    %c0_194 = arith.constant 0 : index
    %188 = vector.load %arg4[%c0_192, %c0_193, %c0_194] : memref<1x16x320xf32, #tpu.memory_space<vmem>>, vector<1x16x320xf32>
    %189 = vector.shape_cast %188 : vector<1x16x320xf32> to vector<16x320xf32>
    %190 = vector.shape_cast %187 : vector<16x320xf32> to vector<1x16x320xf32>
    tpu.vector_store %arg4[%c0_192, %c0_193, %c0_194], %190 {strides = array<i32>} : memref<1x16x320xf32, #tpu.memory_space<vmem>>, vector<1x16x320xf32>,
    %c0_195 = arith.constant 0 : index
    %c0_196 = arith.constant 0 : index
    %c0_197 = arith.constant 0 : index
    %191 = vector.load %arg4[%c0_195, %c0_196, %c0_197] : memref<1x16x320xf32, #tpu.memory_space<vmem>>, vector<1x16x320xf32>
    %192 = vector.shape_cast %191 : vector<1x16x320xf32> to vector<16x320xf32>
    %c17 = arith.constant 17 : index
    %c0_198 = arith.constant 0 : index
    %c0_199 = arith.constant 0 : index
    %193 = vector.load %arg1[%c17, %c0_198, %c0_199] : memref<25x16x16xbf16, #tpu.memory_space<vmem>>, vector<1x16x16xbf16>
    %194 = vector.shape_cast %193 : vector<1x16x16xbf16> to vector<16x16xbf16>
    %c0_200 = arith.constant 0 : index
    %c0_201 = arith.constant 0 : index
    %c62 = arith.constant 62 : index
    %195 = vector.load %arg3[%c0_200, %c0_201, %c62] : memref<1x16x404xbf16, #tpu.memory_space<vmem>>, vector<1x16x320xbf16>
    %196 = vector.shape_cast %195 : vector<1x16x320xbf16> to vector<16x320xbf16>
    %cst_202 = arith.constant dense<0.000000e+00> : vector<16x320xf32>
    %197 = tpu.matmul %194, %196, %cst_202 {dimension_numbers = #tpu.dot_dimension_numbers<[1], [0], [0], [1], [0, 0, 1, 1], [], []>} : vector<16x16xbf16>, vector<16x320xbf16>, vector<16x320xf32> -> vector<16x320xf32>
    %198 = arith.addf %192, %197 : vector<16x320xf32>
    %c0_203 = arith.constant 0 : index
    %c0_204 = arith.constant 0 : index
    %c0_205 = arith.constant 0 : index
    %199 = vector.load %arg4[%c0_203, %c0_204, %c0_205] : memref<1x16x320xf32, #tpu.memory_space<vmem>>, vector<1x16x320xf32>
    %200 = vector.shape_cast %199 : vector<1x16x320xf32> to vector<16x320xf32>
    %201 = vector.shape_cast %198 : vector<16x320xf32> to vector<1x16x320xf32>
    tpu.vector_store %arg4[%c0_203, %c0_204, %c0_205], %201 {strides = array<i32>} : memref<1x16x320xf32, #tpu.memory_space<vmem>>, vector<1x16x320xf32>,
    %c0_206 = arith.constant 0 : index
    %c0_207 = arith.constant 0 : index
    %c0_208 = arith.constant 0 : index
    %202 = vector.load %arg4[%c0_206, %c0_207, %c0_208] : memref<1x16x320xf32, #tpu.memory_space<vmem>>, vector<1x16x320xf32>
    %203 = vector.shape_cast %202 : vector<1x16x320xf32> to vector<16x320xf32>
    %c18 = arith.constant 18 : index
    %c0_209 = arith.constant 0 : index
    %c0_210 = arith.constant 0 : index
    %204 = vector.load %arg1[%c18, %c0_209, %c0_210] : memref<25x16x16xbf16, #tpu.memory_space<vmem>>, vector<1x16x16xbf16>
    %205 = vector.shape_cast %204 : vector<1x16x16xbf16> to vector<16x16xbf16>
    %c0_211 = arith.constant 0 : index
    %c0_212 = arith.constant 0 : index
    %c63 = arith.constant 63 : index
    %206 = vector.load %arg3[%c0_211, %c0_212, %c63] : memref<1x16x404xbf16, #tpu.memory_space<vmem>>, vector<1x16x320xbf16>
    %207 = vector.shape_cast %206 : vector<1x16x320xbf16> to vector<16x320xbf16>
    %cst_213 = arith.constant dense<0.000000e+00> : vector<16x320xf32>
    %208 = tpu.matmul %205, %207, %cst_213 {dimension_numbers = #tpu.dot_dimension_numbers<[1], [0], [0], [1], [0, 0, 1, 1], [], []>} : vector<16x16xbf16>, vector<16x320xbf16>, vector<16x320xf32> -> vector<16x320xf32>
    %209 = arith.addf %203, %208 : vector<16x320xf32>
    %c0_214 = arith.constant 0 : index
    %c0_215 = arith.constant 0 : index
    %c0_216 = arith.constant 0 : index
    %210 = vector.load %arg4[%c0_214, %c0_215, %c0_216] : memref<1x16x320xf32, #tpu.memory_space<vmem>>, vector<1x16x320xf32>
    %211 = vector.shape_cast %210 : vector<1x16x320xf32> to vector<16x320xf32>
    %212 = vector.shape_cast %209 : vector<16x320xf32> to vector<1x16x320xf32>
    tpu.vector_store %arg4[%c0_214, %c0_215, %c0_216], %212 {strides = array<i32>} : memref<1x16x320xf32, #tpu.memory_space<vmem>>, vector<1x16x320xf32>,
    %c0_217 = arith.constant 0 : index
    %c0_218 = arith.constant 0 : index
    %c0_219 = arith.constant 0 : index
    %213 = vector.load %arg4[%c0_217, %c0_218, %c0_219] : memref<1x16x320xf32, #tpu.memory_space<vmem>>, vector<1x16x320xf32>
    %214 = vector.shape_cast %213 : vector<1x16x320xf32> to vector<16x320xf32>
    %c19 = arith.constant 19 : index
    %c0_220 = arith.constant 0 : index
    %c0_221 = arith.constant 0 : index
    %215 = vector.load %arg1[%c19, %c0_220, %c0_221] : memref<25x16x16xbf16, #tpu.memory_space<vmem>>, vector<1x16x16xbf16>
    %216 = vector.shape_cast %215 : vector<1x16x16xbf16> to vector<16x16xbf16>
    %c0_222 = arith.constant 0 : index
    %c0_223 = arith.constant 0 : index
    %c64 = arith.constant 64 : index
    %217 = vector.load %arg3[%c0_222, %c0_223, %c64] : memref<1x16x404xbf16, #tpu.memory_space<vmem>>, vector<1x16x320xbf16>
    %218 = vector.shape_cast %217 : vector<1x16x320xbf16> to vector<16x320xbf16>
    %cst_224 = arith.constant dense<0.000000e+00> : vector<16x320xf32>
    %219 = tpu.matmul %216, %218, %cst_224 {dimension_numbers = #tpu.dot_dimension_numbers<[1], [0], [0], [1], [0, 0, 1, 1], [], []>} : vector<16x16xbf16>, vector<16x320xbf16>, vector<16x320xf32> -> vector<16x320xf32>
    %220 = arith.addf %214, %219 : vector<16x320xf32>
    %c0_225 = arith.constant 0 : index
    %c0_226 = arith.constant 0 : index
    %c0_227 = arith.constant 0 : index
    %221 = vector.load %arg4[%c0_225, %c0_226, %c0_227] : memref<1x16x320xf32, #tpu.memory_space<vmem>>, vector<1x16x320xf32>
    %222 = vector.shape_cast %221 : vector<1x16x320xf32> to vector<16x320xf32>
    %223 = vector.shape_cast %220 : vector<16x320xf32> to vector<1x16x320xf32>
    tpu.vector_store %arg4[%c0_225, %c0_226, %c0_227], %223 {strides = array<i32>} : memref<1x16x320xf32, #tpu.memory_space<vmem>>, vector<1x16x320xf32>,
    %c0_228 = arith.constant 0 : index
    %c0_229 = arith.constant 0 : index
    %c0_230 = arith.constant 0 : index
    %224 = vector.load %arg4[%c0_228, %c0_229, %c0_230] : memref<1x16x320xf32, #tpu.memory_space<vmem>>, vector<1x16x320xf32>
    %225 = vector.shape_cast %224 : vector<1x16x320xf32> to vector<16x320xf32>
    %c20_231 = arith.constant 20 : index
    %c0_232 = arith.constant 0 : index
    %c0_233 = arith.constant 0 : index
    %226 = vector.load %arg1[%c20_231, %c0_232, %c0_233] : memref<25x16x16xbf16, #tpu.memory_space<vmem>>, vector<1x16x16xbf16>
    %227 = vector.shape_cast %226 : vector<1x16x16xbf16> to vector<16x16xbf16>
    %c0_234 = arith.constant 0 : index
    %c0_235 = arith.constant 0 : index
    %c80 = arith.constant 80 : index
    %228 = vector.load %arg3[%c0_234, %c0_235, %c80] : memref<1x16x404xbf16, #tpu.memory_space<vmem>>, vector<1x16x320xbf16>
    %229 = vector.shape_cast %228 : vector<1x16x320xbf16> to vector<16x320xbf16>
    %cst_236 = arith.constant dense<0.000000e+00> : vector<16x320xf32>
    %230 = tpu.matmul %227, %229, %cst_236 {dimension_numbers = #tpu.dot_dimension_numbers<[1], [0], [0], [1], [0, 0, 1, 1], [], []>} : vector<16x16xbf16>, vector<16x320xbf16>, vector<16x320xf32> -> vector<16x320xf32>
    %231 = arith.addf %225, %230 : vector<16x320xf32>
    %c0_237 = arith.constant 0 : index
    %c0_238 = arith.constant 0 : index
    %c0_239 = arith.constant 0 : index
    %232 = vector.load %arg4[%c0_237, %c0_238, %c0_239] : memref<1x16x320xf32, #tpu.memory_space<vmem>>, vector<1x16x320xf32>
    %233 = vector.shape_cast %232 : vector<1x16x320xf32> to vector<16x320xf32>
    %234 = vector.shape_cast %231 : vector<16x320xf32> to vector<1x16x320xf32>
    tpu.vector_store %arg4[%c0_237, %c0_238, %c0_239], %234 {strides = array<i32>} : memref<1x16x320xf32, #tpu.memory_space<vmem>>, vector<1x16x320xf32>,
    %c0_240 = arith.constant 0 : index
    %c0_241 = arith.constant 0 : index
    %c0_242 = arith.constant 0 : index
    %235 = vector.load %arg4[%c0_240, %c0_241, %c0_242] : memref<1x16x320xf32, #tpu.memory_space<vmem>>, vector<1x16x320xf32>
    %236 = vector.shape_cast %235 : vector<1x16x320xf32> to vector<16x320xf32>
    %c21_243 = arith.constant 21 : index
    %c0_244 = arith.constant 0 : index
    %c0_245 = arith.constant 0 : index
    %237 = vector.load %arg1[%c21_243, %c0_244, %c0_245] : memref<25x16x16xbf16, #tpu.memory_space<vmem>>, vector<1x16x16xbf16>
    %238 = vector.shape_cast %237 : vector<1x16x16xbf16> to vector<16x16xbf16>
    %c0_246 = arith.constant 0 : index
    %c0_247 = arith.constant 0 : index
    %c81 = arith.constant 81 : index
    %239 = vector.load %arg3[%c0_246, %c0_247, %c81] : memref<1x16x404xbf16, #tpu.memory_space<vmem>>, vector<1x16x320xbf16>
    %240 = vector.shape_cast %239 : vector<1x16x320xbf16> to vector<16x320xbf16>
    %cst_248 = arith.constant dense<0.000000e+00> : vector<16x320xf32>
    %241 = tpu.matmul %238, %240, %cst_248 {dimension_numbers = #tpu.dot_dimension_numbers<[1], [0], [0], [1], [0, 0, 1, 1], [], []>} : vector<16x16xbf16>, vector<16x320xbf16>, vector<16x320xf32> -> vector<16x320xf32>
    %242 = arith.addf %236, %241 : vector<16x320xf32>
    %c0_249 = arith.constant 0 : index
    %c0_250 = arith.constant 0 : index
    %c0_251 = arith.constant 0 : index
    %243 = vector.load %arg4[%c0_249, %c0_250, %c0_251] : memref<1x16x320xf32, #tpu.memory_space<vmem>>, vector<1x16x320xf32>
    %244 = vector.shape_cast %243 : vector<1x16x320xf32> to vector<16x320xf32>
    %245 = vector.shape_cast %242 : vector<16x320xf32> to vector<1x16x320xf32>
    tpu.vector_store %arg4[%c0_249, %c0_250, %c0_251], %245 {strides = array<i32>} : memref<1x16x320xf32, #tpu.memory_space<vmem>>, vector<1x16x320xf32>,
    %c0_252 = arith.constant 0 : index
    %c0_253 = arith.constant 0 : index
    %c0_254 = arith.constant 0 : index
    %246 = vector.load %arg4[%c0_252, %c0_253, %c0_254] : memref<1x16x320xf32, #tpu.memory_space<vmem>>, vector<1x16x320xf32>
    %247 = vector.shape_cast %246 : vector<1x16x320xf32> to vector<16x320xf32>
    %c22_255 = arith.constant 22 : index
    %c0_256 = arith.constant 0 : index
    %c0_257 = arith.constant 0 : index
    %248 = vector.load %arg1[%c22_255, %c0_256, %c0_257] : memref<25x16x16xbf16, #tpu.memory_space<vmem>>, vector<1x16x16xbf16>
    %249 = vector.shape_cast %248 : vector<1x16x16xbf16> to vector<16x16xbf16>
    %c0_258 = arith.constant 0 : index
    %c0_259 = arith.constant 0 : index
    %c82 = arith.constant 82 : index
    %250 = vector.load %arg3[%c0_258, %c0_259, %c82] : memref<1x16x404xbf16, #tpu.memory_space<vmem>>, vector<1x16x320xbf16>
    %251 = vector.shape_cast %250 : vector<1x16x320xbf16> to vector<16x320xbf16>
    %cst_260 = arith.constant dense<0.000000e+00> : vector<16x320xf32>
    %252 = tpu.matmul %249, %251, %cst_260 {dimension_numbers = #tpu.dot_dimension_numbers<[1], [0], [0], [1], [0, 0, 1, 1], [], []>} : vector<16x16xbf16>, vector<16x320xbf16>, vector<16x320xf32> -> vector<16x320xf32>
    %253 = arith.addf %247, %252 : vector<16x320xf32>
    %c0_261 = arith.constant 0 : index
    %c0_262 = arith.constant 0 : index
    %c0_263 = arith.constant 0 : index
    %254 = vector.load %arg4[%c0_261, %c0_262, %c0_263] : memref<1x16x320xf32, #tpu.memory_space<vmem>>, vector<1x16x320xf32>
    %255 = vector.shape_cast %254 : vector<1x16x320xf32> to vector<16x320xf32>
    %256 = vector.shape_cast %253 : vector<16x320xf32> to vector<1x16x320xf32>
    tpu.vector_store %arg4[%c0_261, %c0_262, %c0_263], %256 {strides = array<i32>} : memref<1x16x320xf32, #tpu.memory_space<vmem>>, vector<1x16x320xf32>,
    %c0_264 = arith.constant 0 : index
    %c0_265 = arith.constant 0 : index
    %c0_266 = arith.constant 0 : index
    %257 = vector.load %arg4[%c0_264, %c0_265, %c0_266] : memref<1x16x320xf32, #tpu.memory_space<vmem>>, vector<1x16x320xf32>
    %258 = vector.shape_cast %257 : vector<1x16x320xf32> to vector<16x320xf32>
    %c23_267 = arith.constant 23 : index
    %c0_268 = arith.constant 0 : index
    %c0_269 = arith.constant 0 : index
    %259 = vector.load %arg1[%c23_267, %c0_268, %c0_269] : memref<25x16x16xbf16, #tpu.memory_space<vmem>>, vector<1x16x16xbf16>
    %260 = vector.shape_cast %259 : vector<1x16x16xbf16> to vector<16x16xbf16>
    %c0_270 = arith.constant 0 : index
    %c0_271 = arith.constant 0 : index
    %c83 = arith.constant 83 : index
    %261 = vector.load %arg3[%c0_270, %c0_271, %c83] : memref<1x16x404xbf16, #tpu.memory_space<vmem>>, vector<1x16x320xbf16>
    %262 = vector.shape_cast %261 : vector<1x16x320xbf16> to vector<16x320xbf16>
    %cst_272 = arith.constant dense<0.000000e+00> : vector<16x320xf32>
    %263 = tpu.matmul %260, %262, %cst_272 {dimension_numbers = #tpu.dot_dimension_numbers<[1], [0], [0], [1], [0, 0, 1, 1], [], []>} : vector<16x16xbf16>, vector<16x320xbf16>, vector<16x320xf32> -> vector<16x320xf32>
    %264 = arith.addf %258, %263 : vector<16x320xf32>
    %c0_273 = arith.constant 0 : index
    %c0_274 = arith.constant 0 : index
    %c0_275 = arith.constant 0 : index
    %265 = vector.load %arg4[%c0_273, %c0_274, %c0_275] : memref<1x16x320xf32, #tpu.memory_space<vmem>>, vector<1x16x320xf32>
    %266 = vector.shape_cast %265 : vector<1x16x320xf32> to vector<16x320xf32>
    %267 = vector.shape_cast %264 : vector<16x320xf32> to vector<1x16x320xf32>
    tpu.vector_store %arg4[%c0_273, %c0_274, %c0_275], %267 {strides = array<i32>} : memref<1x16x320xf32, #tpu.memory_space<vmem>>, vector<1x16x320xf32>,
    %c0_276 = arith.constant 0 : index
    %c0_277 = arith.constant 0 : index
    %c0_278 = arith.constant 0 : index
    %268 = vector.load %arg4[%c0_276, %c0_277, %c0_278] : memref<1x16x320xf32, #tpu.memory_space<vmem>>, vector<1x16x320xf32>
    %269 = vector.shape_cast %268 : vector<1x16x320xf32> to vector<16x320xf32>
    %c24_279 = arith.constant 24 : index
    %c0_280 = arith.constant 0 : index
    %c0_281 = arith.constant 0 : index
    %270 = vector.load %arg1[%c24_279, %c0_280, %c0_281] : memref<25x16x16xbf16, #tpu.memory_space<vmem>>, vector<1x16x16xbf16>
    %271 = vector.shape_cast %270 : vector<1x16x16xbf16> to vector<16x16xbf16>
    %c0_282 = arith.constant 0 : index
    %c0_283 = arith.constant 0 : index
    %c84 = arith.constant 84 : index
    %272 = vector.load %arg3[%c0_282, %c0_283, %c84] : memref<1x16x404xbf16, #tpu.memory_space<vmem>>, vector<1x16x320xbf16>
    %273 = vector.shape_cast %272 : vector<1x16x320xbf16> to vector<16x320xbf16>
    %cst_284 = arith.constant dense<0.000000e+00> : vector<16x320xf32>
    %274 = tpu.matmul %271, %273, %cst_284 {dimension_numbers = #tpu.dot_dimension_numbers<[1], [0], [0], [1], [0, 0, 1, 1], [], []>} : vector<16x16xbf16>, vector<16x320xbf16>, vector<16x320xf32> -> vector<16x320xf32>
    %275 = arith.addf %269, %274 : vector<16x320xf32>
    %c0_285 = arith.constant 0 : index
    %c0_286 = arith.constant 0 : index
    %c0_287 = arith.constant 0 : index
    %276 = vector.load %arg4[%c0_285, %c0_286, %c0_287] : memref<1x16x320xf32, #tpu.memory_space<vmem>>, vector<1x16x320xf32>
    %277 = vector.shape_cast %276 : vector<1x16x320xf32> to vector<16x320xf32>
    %278 = vector.shape_cast %275 : vector<16x320xf32> to vector<1x16x320xf32>
    tpu.vector_store %arg4[%c0_285, %c0_286, %c0_287], %278 {strides = array<i32>} : memref<1x16x320xf32, #tpu.memory_space<vmem>>, vector<1x16x320xf32>,
    %c0_288 = arith.constant 0 : index
    %c0_289 = arith.constant 0 : index
    %c0_290 = arith.constant 0 : index
    %279 = vector.load %arg4[%c0_288, %c0_289, %c0_290] : memref<1x16x320xf32, #tpu.memory_space<vmem>>, vector<1x16x320xf32>
    %280 = vector.shape_cast %279 : vector<1x16x320xf32> to vector<16x320xf32>
    %c0_291 = arith.constant 0 : index
    %c0_292 = arith.constant 0 : index
    %281 = vector.load %arg2[%c0_291, %c0_292] : memref<16x1xf32, #tpu.memory_space<vmem>>, vector<16x1xf32>
    %282 = vector.broadcast %281 : vector<16x1xf32> to vector<16x320xf32>
    %283 = arith.addf %280, %282 : vector<16x320xf32>
    %cst_293 = arith.constant 0.000000e+00 : f32
    %284 = vector.broadcast %cst_293 : f32 to vector<16x320xf32>
    %285 = arith.maximumf %283, %284 : vector<16x320xf32>
    %c0_294 = arith.constant 0 : index
    %c0_295 = arith.constant 0 : index
    %c0_296 = arith.constant 0 : index
    %286 = vector.load %arg4[%c0_294, %c0_295, %c0_296] : memref<1x16x320xf32, #tpu.memory_space<vmem>>, vector<1x16x320xf32>
    %287 = vector.shape_cast %286 : vector<1x16x320xf32> to vector<16x320xf32>
    %288 = vector.shape_cast %285 : vector<16x320xf32> to vector<1x16x320xf32>
    tpu.vector_store %arg4[%c0_294, %c0_295, %c0_296], %288 {strides = array<i32>} : memref<1x16x320xf32, #tpu.memory_space<vmem>>, vector<1x16x320xf32>,
    return
  }
  func.func @transform_0(%arg0: i32) -> (i32, i32, i32) {
    %c0_i32 = arith.constant 0 : i32
    %c0_i32_0 = arith.constant 0 : i32
    %c0_i32_1 = arith.constant 0 : i32
    %c0_i32_2 = arith.constant 0 : i32
    return %c0_i32, %c0_i32_0, %c0_i32_1 : i32, i32, i32
  }
  func.func @transform_1(%arg0: i32) -> (i32, i32) {
    %c0_i32 = arith.constant 0 : i32
    %c0_i32_0 = arith.constant 0 : i32
    %c0_i32_1 = arith.constant 0 : i32
    return %c0_i32, %c0_i32_0 : i32, i32
  }
  func.func @transform_2(%arg0: i32) -> (i32, i32, i32) {
    %c0_i32 = arith.constant 0 : i32
    %c0_i32_0 = arith.constant 0 : i32
    %c0_i32_1 = arith.constant 0 : i32
    return %arg0, %c0_i32, %c0_i32_0 : i32, i32, i32
  }
  func.func @transform_3(%arg0: i32) -> (i32, i32, i32) {
    %c0_i32 = arith.constant 0 : i32
    %c0_i32_0 = arith.constant 0 : i32
    %c0_i32_1 = arith.constant 0 : i32
    return %arg0, %c0_i32, %c0_i32_0 : i32, i32, i32
  }
}

</mosaic_0001>

<llo_original>
// kernel: tile.6
$region0: #{tile.6}
  #allocation0 [shape = 's32[1]{0}', space=sflag, size = 0x4, scoped, tag = 'scoped memory for tile.6']
  %s0 = inlined_call_operand.vmem [shape: f32[8], index: 0, kind: input, shape index: {}]
  %s1 = inlined_call_operand.vmem [shape: f32[2,8], index: 1, kind: output, shape index: {}]
  // Predicated region
  $region2: #{tile.6} parent=0 // pred_check
    _
  $region3: #{tile.6} parent=0 // pred_check_branch
    %3 = sbr.rel (0) target = $region5
  $region4: #{tile.6} parent=0 // pred_region
    _
  $region5: #{tile.6} parent=0 // pred_fallthru
    _
  %v4 = vld [vmem:[%s0] ss:$0 sm:$0xff]
  %5 = vst [vmem:[%s1] sm:$0x3] %v4

// kernel: tile.0
$region0: #{tile.0}
  %s0 = inlined_call_operand.vmem [shape: f32[2,8], index: 0, kind: input, shape index: {}]
  %s1 = inlined_call_operand.vmem [shape: f32[16,1], index: 1, kind: output, shape index: {}]
  $region1: #{tile.0} parent=0
    #allocation0 [shape = 'u8[4096]{0}', space=vmem, size = 0x1000, scoped, tag = 'scoped mem for input reshape']
    %s3 = ssub.s32 4, 1
    %v4 = vld [vmem:[%s0] sm:%s3]
    %5 = vst [vmem:[#allocation0] sm:%s3] %v4
    %v6 = vld [vmem:[#allocation0] sm:$0x3]
    %vm7 = vcmask 7168
    %8 = vst.msk [vmem:[%s1] ss:$8 sm:$0x3] %vm7, %v6
    %v9 = vld [vmem:[#allocation0] sm:$0x3]
    %10 = vrot.lane.b32.xlu0 %v9, 127
    %v11 = vpop.permute.xlu0 %10
    %vm12 = vcmask 7168
    %s13 = scalar_lea.vmem %s1, 1
    %14 = vst.msk [vmem:[%s13] ss:$8 sm:$0x3] %vm12, %v11
    %v15 = vld [vmem:[#allocation0] sm:$0x3]
    %16 = vrot.lane.b32.xlu0 %v15, 126
    %v17 = vpop.permute.xlu0 %16
    %vm18 = vcmask 7168
    %s19 = scalar_lea.vmem %s1, 2
    %20 = vst.msk [vmem:[%s19] ss:$8 sm:$0x3] %vm18, %v17
    %v21 = vld [vmem:[#allocation0] sm:$0x3]
    %22 = vrot.lane.b32.xlu0 %v21, 125
    %v23 = vpop.permute.xlu0 %22
    %vm24 = vcmask 7168
    %s25 = scalar_lea.vmem %s1, 3
    %26 = vst.msk [vmem:[%s25] ss:$8 sm:$0x3] %vm24, %v23
    %v27 = vld [vmem:[#allocation0] sm:$0x3]
    %28 = vrot.lane.b32.xlu0 %v27, 124
    %v29 = vpop.permute.xlu0 %28
    %vm30 = vcmask 7168
    %s31 = scalar_lea.vmem %s1, 4
    %32 = vst.msk [vmem:[%s31] ss:$8 sm:$0x3] %vm30, %v29
    %v33 = vld [vmem:[#allocation0] sm:$0x3]
    %34 = vrot.lane.b32.xlu0 %v33, 123
    %v35 = vpop.permute.xlu0 %34
    %vm36 = vcmask 7168
    %s37 = scalar_lea.vmem %s1, 5
    %38 = vst.msk [vmem:[%s37] ss:$8 sm:$0x3] %vm36, %v35
    %v39 = vld [vmem:[#allocation0] sm:$0x3]
    %40 = vrot.lane.b32.xlu0 %v39, 122
    %v41 = vpop.permute.xlu0 %40
    %vm42 = vcmask 7168
    %s43 = scalar_lea.vmem %s1, 6
    %44 = vst.msk [vmem:[%s43] ss:$8 sm:$0x3] %vm42, %v41
    %v45 = vld [vmem:[#allocation0] sm:$0x3]
    %46 = vrot.lane.b32.xlu0 %v45, 121
    %v47 = vpop.permute.xlu0 %46
    %vm48 = vcmask 7168
    %s49 = scalar_lea.vmem %s1, 7
    %50 = vst.msk [vmem:[%s49] ss:$8 sm:$0x3] %vm48, %v47

// kernel: _lambda_.1
$region0: #{_lambda_.1}
  #allocation0 [shape = 'u32[]', space=smem, size = 0x4, offset = 0x4, fixed_abs, tag = 'smem constant byte address 0x4 - core index']
  #allocation1 [shape = 'u32[72,128]{1,0:T(1,128)}', space=vmem, size = 0x9000, scoped, tag = 'internal scratch']
  %s0 = inlined_call_operand.vmem [shape: bf16[25,16,16], index: 0, kind: input, shape index: {}]
  %s1 = inlined_call_operand.vmem [shape: f32[16,1], index: 1, kind: input, shape index: {}]
  %s2 = inlined_call_operand.vmem [shape: bf16[2,16,404], index: 2, kind: input, shape index: {}]
  %s3 = inlined_call_operand.vmem [shape: f32[2,16,320], index: 3, kind: output, shape index: {}]
  %s4 = sld [smem:[#allocation0]]
  $region45: #{_lambda_.1} parent=0
    _
  %s6 = ssub.s32 1, %s4
  %s7 = scalar_select 0, %s6, %s4
  loop: start=0, step=1, limit=4
  $region2: #{_lambda_.1} parent=0 // loop_pre_header
    _
  $region3: #{_lambda_.1} parent=0 // loop_header
    %s9 = sphi 0, %s13
    %p10 = scmp.ge.s32.totalorder %s9, 4
    %s17 = sphi 0, %s17
    %s19 = sphi 0, %s17
    %s20 = sphi 0, %s19
    %s34 = sphi 0, %s20
    %s38 = sphi 0, %s38
    %s40 = sphi 0, %s38
    %s41 = sphi 0, %s40
    %s55 = sphi 0, %s41
    %s61 = sphi 0, %s63
    %s64 = sphi 0, %s61
    %s65 = sphi 0, %s64
    %s81 = sphi 0, %s65
    %s87 = sphi 0, %s89
    %s90 = sphi 0, %s87
    %s91 = sphi 0, %s90
    %s107 = sphi 0, %s91
  $region4: #{_lambda_.1} parent=0 // loop_header_branch
    %12 = sbr.rel (%p10) target = $region8
  $region5: #{_lambda_.1} parent=0 // loop_body
    %s14 = ssub.s32 %s9, 1
    %s15 = ssub.s32 %s9, 2
    %s16 = sadd.s32 %s9, 1
    %s18 = sadd.s32 %s17, 1
    %p21 = scmp.eq.s32.totalorder %s9, 1
    %p22 = scmp.ne.s32.totalorder %s17, %s19
    %p23 = scmp.eq.s32.totalorder %s9, 0
    %p24 = por %p22, %p23
    %p25 = scmp.ne.s32.totalorder %s17, %s19
    %p26 = scmp.eq.s32.totalorder %s14, 1
    %p27 = por %p25, %p26
    %p28 = scmp.ne.s32.totalorder %s19, %s20
    %p29 = scmp.eq.s32.totalorder %s14, 0
    %p30 = por %p28, %p29
    %p31 = scmp.ne.s32.totalorder %s19, %s20
    %p32 = scmp.eq.s32.totalorder %s15, 1
    %p33 = por %p31, %p32
    %p35 = scmp.ne.s32.totalorder %s20, %s34
    %p36 = scmp.eq.s32.totalorder %s15, 0
    %p37 = por %p35, %p36
    %s39 = sadd.s32 %s38, 1
    %p42 = scmp.eq.s32.totalorder %s9, 1
    %p43 = scmp.ne.s32.totalorder %s38, %s40
    %p44 = scmp.eq.s32.totalorder %s9, 0
    %p45 = por %p43, %p44
    %p46 = scmp.ne.s32.totalorder %s38, %s40
    %p47 = scmp.eq.s32.totalorder %s14, 1
    %p48 = por %p46, %p47
    %p49 = scmp.ne.s32.totalorder %s40, %s41
    %p50 = scmp.eq.s32.totalorder %s14, 0
    %p51 = por %p49, %p50
    %p52 = scmp.ne.s32.totalorder %s40, %s41
    %p53 = scmp.eq.s32.totalorder %s15, 1
    %p54 = por %p52, %p53
    %p56 = scmp.ne.s32.totalorder %s41, %s55
    %p57 = scmp.eq.s32.totalorder %s15, 0
    %p58 = por %p56, %p57
    %s59 = ssub.s32 %s9, %s16
    %p60 = scmp.eq.s32.totalorder %s59, 0
    %s62 = sadd.s32 %s61, 1
    %s63 = scalar_select %p60, %s61, %s62
    %p66 = pneg %p60
    %p67 = scmp.eq.s32.totalorder %s9, 1
    %p68 = por %p66, %p67
    %p69 = scmp.ne.s32.totalorder %s61, %s64
    %p70 = scmp.eq.s32.totalorder %s9, 0
    %p71 = por %p69, %p70
    %p72 = scmp.ne.s32.totalorder %s61, %s64
    %p73 = scmp.eq.s32.totalorder %s14, 1
    %p74 = por %p72, %p73
    %p75 = scmp.ne.s32.totalorder %s64, %s65
    %p76 = scmp.eq.s32.totalorder %s14, 0
    %p77 = por %p75, %p76
    %p78 = scmp.ne.s32.totalorder %s64, %s65
    %p79 = scmp.eq.s32.totalorder %s15, 1
    %p80 = por %p78, %p79
    %p82 = scmp.ne.s32.totalorder %s65, %s81
    %p83 = scmp.eq.s32.totalorder %s15, 0
    %p84 = por %p82, %p83
    %s85 = ssub.s32 %s9, %s16
    %p86 = scmp.eq.s32.totalorder %s85, 0
    %s88 = sadd.s32 %s87, 1
    %s89 = scalar_select %p86, %s87, %s88
    %p92 = pneg %p86
    %p93 = scmp.eq.s32.totalorder %s9, 1
    %p94 = por %p92, %p93
    %p95 = scmp.ne.s32.totalorder %s87, %s90
    %p96 = scmp.eq.s32.totalorder %s9, 0
    %p97 = por %p95, %p96
    %p98 = scmp.ne.s32.totalorder %s87, %s90
    %p99 = scmp.eq.s32.totalorder %s14, 1
    %p100 = por %p98, %p99
    %p101 = scmp.ne.s32.totalorder %s90, %s91
    %p102 = scmp.eq.s32.totalorder %s14, 0
    %p103 = por %p101, %p102
    %p104 = scmp.ne.s32.totalorder %s90, %s91
    %p105 = scmp.eq.s32.totalorder %s15, 1
    %p106 = por %p104, %p105
    %p108 = scmp.ne.s32.totalorder %s91, %s107
    %p109 = scmp.eq.s32.totalorder %s15, 0
    %p110 = por %p108, %p109
    %p111 = scmp.le.s32.totalorder 1, %s9
    %p112 = scmp.lt.s32.totalorder %s9, 3
    %p113 = pnand %p111, %p112
    %p114 = pneg %p113
    // Predicated region
    $region9: #{_lambda_.1} parent=5 // pred_check
      _
    $region10: #{_lambda_.1} parent=5 // pred_check_branch
      %116 = sbr.rel (%p113) target = $region12
    $region11: #{_lambda_.1} parent=5 // pred_region
      %s117 = ssub.s32 %s9, 1
      // Predicated region
      $region13: #{_lambda_.1} parent=11 // pred_check
        %p118 = pneg %p30
      $region14: #{_lambda_.1} parent=11 // pred_check_branch
        %120 = sbr.rel (%p118) target = $region16
      $region15: #{_lambda_.1} parent=11 // pred_region
        _
      $region16: #{_lambda_.1} parent=11 // pred_fallthru
        _
      // Predicated region
      $region17: #{_lambda_.1} parent=11 // pred_check
        %p121 = pneg %p51
      $region18: #{_lambda_.1} parent=11 // pred_check_branch
        %123 = sbr.rel (%p121) target = $region20
      $region19: #{_lambda_.1} parent=11 // pred_region
        _
      $region20: #{_lambda_.1} parent=11 // pred_fallthru
        _
    $region12: #{_lambda_.1} parent=5 // pred_fallthru
      _
    %p124 = scmp.lt.s32.totalorder %s9, 2
    // Predicated region
    $region21: #{_lambda_.1} parent=5 // pred_check
      %p125 = pneg %p124
    $region22: #{_lambda_.1} parent=5 // pred_check_branch
      %127 = sbr.rel (%p125) target = $region24
    $region23: #{_lambda_.1} parent=5 // pred_region
      // Predicated region
      $region25: #{_lambda_.1} parent=23 // pred_check
        %p128 = pneg %p71
      $region26: #{_lambda_.1} parent=23 // pred_check_branch
        %130 = sbr.rel (%p128) target = $region28
      $region27: #{_lambda_.1} parent=23 // pred_region
        %p131 = scmp.lt.s32.totalorder %s9, 1
        %s132 = scalar_select %p131, %s9, 1
        %s133 = smul.addr %s132, 8
        %s134 = smul.addr %s133, 4
        %s135 = scalar_lea.vmem %s2, %s134
      $region28: #{_lambda_.1} parent=23 // pred_fallthru
        _
    $region24: #{_lambda_.1} parent=5 // pred_fallthru
      _
    %p136 = scmp.le.s32.totalorder 1, %s9
    %p137 = scmp.lt.s32.totalorder %s9, 3
    %p138 = pnand %p136, %p137
    %p139 = pneg %p138
    // Predicated region
    $region29: #{_lambda_.1} parent=5 // pred_check
      _
    $region30: #{_lambda_.1} parent=5 // pred_check_branch
      %141 = sbr.rel (%p138) target = $region32
    $region31: #{_lambda_.1} parent=5 // pred_region
      %s142 = ssub.s32 %s9, 1
      %p143 = pneg %p30
      %p144 = pneg %p27
      %p145 = pneg %p51
      %p146 = pneg %p48
      %p147 = scmp.lt.s32.totalorder %s14, 1
      %s148 = scalar_select %p147, %s14, 1
      %s149 = smul.addr %s148, 8
      %s150 = smul.addr %s149, 4
      %s151 = scalar_lea.vmem %s2, %s150
      %p152 = pneg %p77
      %p153 = pneg %p74
      %p154 = pneg %p103
      %p155 = pneg %p100
      %p156 = scmp.lt.s32.totalorder %s14, 1
      %s157 = scalar_select %p156, %s14, 1
      %s158 = smul.addr %s157, 6
      %s159 = smul.addr %s158, 8
      %s160 = scalar_lea.vmem %s3, %s159
      %p161 = scmp.lt.s32.totalorder %s14, 1
      %s162 = scalar_select %p161, %s14, 1
      %s163 = smul.addr %s162, 8
      %s164 = smul.addr %s163, 4
      %s165 = scalar_lea.vmem %s2, %s164
      %p166 = scmp.lt.s32.totalorder %s14, 1
      %s167 = scalar_select %p166, %s14, 1
      %s168 = smul.addr %s167, 6
      %s169 = smul.addr %s168, 8
      %s170 = scalar_lea.vmem %s3, %s169
      %172 = vst [vmem:[%s170] sm:$0xff] 0.0
      %173 = vst [vmem:[%s170 + $0x8] sm:$0xff] 0.0
      %vm174 = vcmask 523264
      %175 = vst.msk [vmem:[%s170 + $0x10] sm:$0xff] %vm174, 0.0
      %176 = vst [vmem:[%s170 + $0x18] sm:$0xff] 0.0
      %177 = vst [vmem:[%s170 + $0x20] sm:$0xff] 0.0
      %178 = vst.msk [vmem:[%s170 + $0x28] sm:$0xff] %vm174, 0.0
      %v179 = vld [vmem:[%s170] sm:$0xff]
      %v180 = vld [vmem:[%s170 + $0x8] sm:$0xff]
      %v181 = vld [vmem:[%s170 + $0x10] sm:$0xff]
      %v182 = vld [vmem:[%s170 + $0x18] sm:$0xff]
      %v183 = vld [vmem:[%s170 + $0x20] sm:$0xff]
      %v184 = vld [vmem:[%s170 + $0x28] sm:$0xff]
      %v185 = vld [vmem:[%s0] sm:$0xf]
      %v186 = vld [vmem:[%s0 + $0x4] sm:$0xf]
      %v187 = vld [vmem:[%s165] sm:$0xff]
      %v188 = vld [vmem:[%s165 + $0x8] sm:$0xf]
      %v189 = vld [vmem:[%s165 + $0x10] sm:$0xff]
      %v190 = vld [vmem:[%s165 + $0x18] sm:$0xf]
      %v193 = vunpack.c.l.b16 %v185
      %v194 = vunpack.c.l.b16 %v186
      %v195 = vpack.c.b16 %v194, %v193
      %v200 = vunpack.c.l.b16 %v187
      %v201 = vunpack.c.h.b16 %v187
      %v202 = vunpack.c.l.b16 %v188
      %v203 = vunpack.c.l.b16 %v189
      %v204 = vunpack.c.h.b16 %v189
      %v205 = vunpack.c.l.b16 %v190
      %v206 = vpack.c.b16 %v203, %v200
      %v207 = vpack.c.b16 %v204, %v201
      %v208 = vpack.c.b16 %v205, %v202
      %vm212 = vcmask 130048
      %v214 = vsel %vm212, %v195, 0
      %216 = vmatpush.bf16.msra.mxu0 0
      %217 = vmatpush.bf16.msra.mxu0 0
      %218 = vmatpush.bf16.msra.mxu0 0
      %219 = vmatpush.bf16.msra.mxu0 0
      %220 = vmatpush.bf16.msra.mxu0 0
      %221 = vmatpush.bf16.msra.mxu0 0
      %222 = vmatpush.bf16.msra.mxu0 0
      %223 = vmatpush.bf16.msra.mxu0 %v206
      %224 = vmatmul.bf16.gmra.mxu0 %v214
      %v225 = vpop.f32.mrf.mxu0
      %v226 = vadd.f32 0.0, %v225
      %v227 = vpop.f32.mrf.mxu0
      %v228 = vadd.f32 0.0, %v227
      %229 = vdwg.mxu0
      %230 = vmatpush.bf16.msra.mxu0 0
      %231 = vmatpush.bf16.msra.mxu0 0
      %232 = vmatpush.bf16.msra.mxu0 0
      %233 = vmatpush.bf16.msra.mxu0 0
      %234 = vmatpush.bf16.msra.mxu0 0
      %235 = vmatpush.bf16.msra.mxu0 0
      %236 = vmatpush.bf16.msra.mxu0 0
      %237 = vmatpush.bf16.msra.mxu0 %v207
      %238 = vmatmul.bf16.gmra.mxu0 %v214
      %v239 = vpop.f32.mrf.mxu0
      %v240 = vadd.f32 0.0, %v239
      %v241 = vpop.f32.mrf.mxu0
      %v242 = vadd.f32 0.0, %v241
      %243 = vdwg.mxu0
      %244 = vmatpush.bf16.msra.mxu0 0
      %245 = vmatpush.bf16.msra.mxu0 0
      %246 = vmatpush.bf16.msra.mxu0 0
      %247 = vmatpush.bf16.msra.mxu0 0
      %248 = vmatpush.bf16.msra.mxu0 0
      %249 = vmatpush.bf16.msra.mxu0 0
      %250 = vmatpush.bf16.msra.mxu0 0
      %251 = vmatpush.bf16.msra.mxu0 %v208
      %252 = vmatmul.bf16.gmra.mxu0 %v214
      %v253 = vpop.f32.mrf.mxu0
      %v254 = vadd.f32 0.0, %v253
      %v255 = vpop.f32.mrf.mxu0
      %v256 = vadd.f32 0.0, %v255
      %257 = vdwg.mxu0
      %v258 = vadd.f32 %v179, %v226
      %v259 = vadd.f32 %v180, %v240
      %v260 = vadd.f32 %v181, %v254
      %v261 = vadd.f32 %v182, %v228
      %v262 = vadd.f32 %v183, %v242
      %v263 = vadd.f32 %v184, %v256
      %264 = vst [vmem:[%s170] sm:$0xff] %v258
      %265 = vst [vmem:[%s170 + $0x8] sm:$0xff] %v259
      %266 = vst.msk [vmem:[%s170 + $0x10] sm:$0xff] %vm174, %v260
      %267 = vst [vmem:[%s170 + $0x18] sm:$0xff] %v261
      %268 = vst [vmem:[%s170 + $0x20] sm:$0xff] %v262
      %269 = vst.msk [vmem:[%s170 + $0x28] sm:$0xff] %vm174, %v263
      %v270 = vld [vmem:[%s170] sm:$0xff]
      %v271 = vld [vmem:[%s170 + $0x8] sm:$0xff]
      %v272 = vld [vmem:[%s170 + $0x10] sm:$0xff]
      %v273 = vld [vmem:[%s170 + $0x18] sm:$0xff]
      %v274 = vld [vmem:[%s170 + $0x20] sm:$0xff]
      %v275 = vld [vmem:[%s170 + $0x28] sm:$0xff]
      %s276 = scalar_lea.vmem %s0, 8
      %v277 = vld [vmem:[%s276] sm:$0xf]
      %v278 = vld [vmem:[%s276 + $0x4] sm:$0xf]
      %v279 = vld [vmem:[%s165] sm:$0xff]
      %v280 = vld [vmem:[%s165 + $0x8] sm:$0xf]
      %v281 = vld [vmem:[%s165 + $0x10] sm:$0xff]
      %v282 = vld [vmem:[%s165 + $0x18] sm:$0xf]
      %v285 = vunpack.c.l.b16 %v277
      %v286 = vunpack.c.l.b16 %v278
      %v287 = vpack.c.b16 %v286, %v285
      %v292 = vunpack.c.l.b16 %v279
      %v293 = vunpack.c.h.b16 %v279
      %v294 = vunpack.c.l.b16 %v280
      %v295 = vunpack.c.l.b16 %v281
      %v296 = vunpack.c.h.b16 %v281
      %v297 = vunpack.c.l.b16 %v282
      %v298 = vpack.c.b16 %v295, %v292
      %v299 = vpack.c.b16 %v296, %v293
      %v300 = vpack.c.b16 %v297, %v294
      %301 = vrot.lane.b32.xlu0 %v298, 127
      %v302 = vpop.permute.xlu0 %301
      %303 = vrot.lane.b32.xlu0 %v299, 127
      %v304 = vpop.permute.xlu0 %303
      %305 = vrot.lane.b32.xlu0 %v300, 127
      %v306 = vpop.permute.xlu0 %305
      %vm307 = vcmask 1039360
      %v308 = vsel %vm307, %v302, %v304
      %v309 = vsel %vm307, %v304, %v306
      %v314 = vsel %vm212, %v287, 0
      %316 = vmatpush.bf16.msra.mxu0 0
      %317 = vmatpush.bf16.msra.mxu0 0
      %318 = vmatpush.bf16.msra.mxu0 0
      %319 = vmatpush.bf16.msra.mxu0 0
      %320 = vmatpush.bf16.msra.mxu0 0
      %321 = vmatpush.bf16.msra.mxu0 0
      %322 = vmatpush.bf16.msra.mxu0 0
      %323 = vmatpush.bf16.msra.mxu0 %v308
      %324 = vmatmul.bf16.gmra.mxu0 %v314
      %v325 = vpop.f32.mrf.mxu0
      %v326 = vadd.f32 0.0, %v325
      %v327 = vpop.f32.mrf.mxu0
      %v328 = vadd.f32 0.0, %v327
      %329 = vdwg.mxu0
      %330 = vmatpush.bf16.msra.mxu0 0
      %331 = vmatpush.bf16.msra.mxu0 0
      %332 = vmatpush.bf16.msra.mxu0 0
      %333 = vmatpush.bf16.msra.mxu0 0
      %334 = vmatpush.bf16.msra.mxu0 0
      %335 = vmatpush.bf16.msra.mxu0 0
      %336 = vmatpush.bf16.msra.mxu0 0
      %337 = vmatpush.bf16.msra.mxu0 %v309
      %338 = vmatmul.bf16.gmra.mxu0 %v314
      %v339 = vpop.f32.mrf.mxu0
      %v340 = vadd.f32 0.0, %v339
      %v341 = vpop.f32.mrf.mxu0
      %v342 = vadd.f32 0.0, %v341
      %343 = vdwg.mxu0
      %344 = vmatpush.bf16.msra.mxu0 0
      %345 = vmatpush.bf16.msra.mxu0 0
      %346 = vmatpush.bf16.msra.mxu0 0
      %347 = vmatpush.bf16.msra.mxu0 0
      %348 = vmatpush.bf16.msra.mxu0 0
      %349 = vmatpush.bf16.msra.mxu0 0
      %350 = vmatpush.bf16.msra.mxu0 0
      %351 = vmatpush.bf16.msra.mxu0 %v306
      %352 = vmatmul.bf16.gmra.mxu0 %v314
      %v353 = vpop.f32.mrf.mxu0
      %v354 = vadd.f32 0.0, %v353
      %v355 = vpop.f32.mrf.mxu0
      %v356 = vadd.f32 0.0, %v355
      %357 = vdwg.mxu0
      %v358 = vadd.f32 %v270, %v326
      %v359 = vadd.f32 %v271, %v340
      %v360 = vadd.f32 %v272, %v354
      %v361 = vadd.f32 %v273, %v328
      %v362 = vadd.f32 %v274, %v342
      %v363 = vadd.f32 %v275, %v356
      %364 = vst [vmem:[%s170] sm:$0xff] %v358
      %365 = vst [vmem:[%s170 + $0x8] sm:$0xff] %v359
      %366 = vst.msk [vmem:[%s170 + $0x10] sm:$0xff] %vm174, %v360
      %367 = vst [vmem:[%s170 + $0x18] sm:$0xff] %v361
      %368 = vst [vmem:[%s170 + $0x20] sm:$0xff] %v362
      %369 = vst.msk [vmem:[%s170 + $0x28] sm:$0xff] %vm174, %v363
      %v370 = vld [vmem:[%s170] sm:$0xff]
      %v371 = vld [vmem:[%s170 + $0x8] sm:$0xff]
      %v372 = vld [vmem:[%s170 + $0x10] sm:$0xff]
      %v373 = vld [vmem:[%s170 + $0x18] sm:$0xff]
      %v374 = vld [vmem:[%s170 + $0x20] sm:$0xff]
      %v375 = vld [vmem:[%s170 + $0x28] sm:$0xff]
      %s376 = scalar_lea.vmem %s0, 16
      %v377 = vld [vmem:[%s376] sm:$0xf]
      %v378 = vld [vmem:[%s376 + $0x4] sm:$0xf]
      %v379 = vld [vmem:[%s165] sm:$0xff]
      %v380 = vld [vmem:[%s165 + $0x8] sm:$0xf]
      %v381 = vld [vmem:[%s165 + $0x10] sm:$0xff]
      %v382 = vld [vmem:[%s165 + $0x18] sm:$0xf]
      %v385 = vunpack.c.l.b16 %v377
      %v386 = vunpack.c.l.b16 %v378
      %v387 = vpack.c.b16 %v386, %v385
      %v392 = vunpack.c.l.b16 %v379
      %v393 = vunpack.c.h.b16 %v379
      %v394 = vunpack.c.l.b16 %v380
      %v395 = vunpack.c.l.b16 %v381
      %v396 = vunpack.c.h.b16 %v381
      %v397 = vunpack.c.l.b16 %v382
      %v398 = vpack.c.b16 %v395, %v392
      %v399 = vpack.c.b16 %v396, %v393
      %v400 = vpack.c.b16 %v397, %v394
      %401 = vrot.lane.b32.xlu0 %v398, 126
      %v402 = vpop.permute.xlu0 %401
      %403 = vrot.lane.b32.xlu0 %v399, 126
      %v404 = vpop.permute.xlu0 %403
      %405 = vrot.lane.b32.xlu0 %v400, 126
      %v406 = vpop.permute.xlu0 %405
      %vm407 = vcmask 1031168
      %v408 = vsel %vm407, %v402, %v404
      %v409 = vsel %vm407, %v404, %v406
      %v414 = vsel %vm212, %v387, 0
      %416 = vmatpush.bf16.msra.mxu0 0
      %417 = vmatpush.bf16.msra.mxu0 0
      %418 = vmatpush.bf16.msra.mxu0 0
      %419 = vmatpush.bf16.msra.mxu0 0
      %420 = vmatpush.bf16.msra.mxu0 0
      %421 = vmatpush.bf16.msra.mxu0 0
      %422 = vmatpush.bf16.msra.mxu0 0
      %423 = vmatpush.bf16.msra.mxu0 %v408
      %424 = vmatmul.bf16.gmra.mxu0 %v414
      %v425 = vpop.f32.mrf.mxu0
      %v426 = vadd.f32 0.0, %v425
      %v427 = vpop.f32.mrf.mxu0
      %v428 = vadd.f32 0.0, %v427
      %429 = vdwg.mxu0
      %430 = vmatpush.bf16.msra.mxu0 0
      %431 = vmatpush.bf16.msra.mxu0 0
      %432 = vmatpush.bf16.msra.mxu0 0
      %433 = vmatpush.bf16.msra.mxu0 0
      %434 = vmatpush.bf16.msra.mxu0 0
      %435 = vmatpush.bf16.msra.mxu0 0
      %436 = vmatpush.bf16.msra.mxu0 0
      %437 = vmatpush.bf16.msra.mxu0 %v409
      %438 = vmatmul.bf16.gmra.mxu0 %v414
      %v439 = vpop.f32.mrf.mxu0
      %v440 = vadd.f32 0.0, %v439
      %v441 = vpop.f32.mrf.mxu0
      %v442 = vadd.f32 0.0, %v441
      %443 = vdwg.mxu0
      %444 = vmatpush.bf16.msra.mxu0 0
      %445 = vmatpush.bf16.msra.mxu0 0
      %446 = vmatpush.bf16.msra.mxu0 0
      %447 = vmatpush.bf16.msra.mxu0 0
      %448 = vmatpush.bf16.msra.mxu0 0
      %449 = vmatpush.bf16.msra.mxu0 0
      %450 = vmatpush.bf16.msra.mxu0 0
      %451 = vmatpush.bf16.msra.mxu0 %v406
      %452 = vmatmul.bf16.gmra.mxu0 %v414
      %v453 = vpop.f32.mrf.mxu0
      %v454 = vadd.f32 0.0, %v453
      %v455 = vpop.f32.mrf.mxu0
      %v456 = vadd.f32 0.0, %v455
      %457 = vdwg.mxu0
      %v458 = vadd.f32 %v370, %v426
      %v459 = vadd.f32 %v371, %v440
      %v460 = vadd.f32 %v372, %v454
      %v461 = vadd.f32 %v373, %v428
      %v462 = vadd.f32 %v374, %v442
      %v463 = vadd.f32 %v375, %v456
      %464 = vst [vmem:[%s170] sm:$0xff] %v458
      %465 = vst [vmem:[%s170 + $0x8] sm:$0xff] %v459
      %466 = vst.msk [vmem:[%s170 + $0x10] sm:$0xff] %vm174, %v460
      %467 = vst [vmem:[%s170 + $0x18] sm:$0xff] %v461
      %468 = vst [vmem:[%s170 + $0x20] sm:$0xff] %v462
      %469 = vst.msk [vmem:[%s170 + $0x28] sm:$0xff] %vm174, %v463
      %v470 = vld [vmem:[%s170] sm:$0xff]
      %v471 = vld [vmem:[%s170 + $0x8] sm:$0xff]
      %v472 = vld [vmem:[%s170 + $0x10] sm:$0xff]
      %v473 = vld [vmem:[%s170 + $0x18] sm:$0xff]
      %v474 = vld [vmem:[%s170 + $0x20] sm:$0xff]
      %v475 = vld [vmem:[%s170 + $0x28] sm:$0xff]
      %s476 = scalar_lea.vmem %s0, 24
      %v477 = vld [vmem:[%s476] sm:$0xf]
      %v478 = vld [vmem:[%s476 + $0x4] sm:$0xf]
      %v479 = vld [vmem:[%s165] sm:$0xff]
      %v480 = vld [vmem:[%s165 + $0x8] sm:$0xf]
      %v481 = vld [vmem:[%s165 + $0x10] sm:$0xff]
      %v482 = vld [vmem:[%s165 + $0x18] sm:$0xf]
      %v485 = vunpack.c.l.b16 %v477
      %v486 = vunpack.c.l.b16 %v478
      %v487 = vpack.c.b16 %v486, %v485
      %v492 = vunpack.c.l.b16 %v479
      %v493 = vunpack.c.h.b16 %v479
      %v494 = vunpack.c.l.b16 %v480
      %v495 = vunpack.c.l.b16 %v481
      %v496 = vunpack.c.h.b16 %v481
      %v497 = vunpack.c.l.b16 %v482
      %v498 = vpack.c.b16 %v495, %v492
      %v499 = vpack.c.b16 %v496, %v493
      %v500 = vpack.c.b16 %v497, %v494
      %501 = vrot.lane.b32.xlu0 %v498, 125
      %v502 = vpop.permute.xlu0 %501
      %503 = vrot.lane.b32.xlu0 %v499, 125
      %v504 = vpop.permute.xlu0 %503
      %505 = vrot.lane.b32.xlu0 %v500, 125
      %v506 = vpop.permute.xlu0 %505
      %vm507 = vcmask 1022976
      %v508 = vsel %vm507, %v502, %v504
      %v509 = vsel %vm507, %v504, %v506
      %v514 = vsel %vm212, %v487, 0
      %516 = vmatpush.bf16.msra.mxu0 0
      %517 = vmatpush.bf16.msra.mxu0 0
      %518 = vmatpush.bf16.msra.mxu0 0
      %519 = vmatpush.bf16.msra.mxu0 0
      %520 = vmatpush.bf16.msra.mxu0 0
      %521 = vmatpush.bf16.msra.mxu0 0
      %522 = vmatpush.bf16.msra.mxu0 0
      %523 = vmatpush.bf16.msra.mxu0 %v508
      %524 = vmatmul.bf16.gmra.mxu0 %v514
      %v525 = vpop.f32.mrf.mxu0
      %v526 = vadd.f32 0.0, %v525
      %v527 = vpop.f32.mrf.mxu0
      %v528 = vadd.f32 0.0, %v527
      %529 = vdwg.mxu0
      %530 = vmatpush.bf16.msra.mxu0 0
      %531 = vmatpush.bf16.msra.mxu0 0
      %532 = vmatpush.bf16.msra.mxu0 0
      %533 = vmatpush.bf16.msra.mxu0 0
      %534 = vmatpush.bf16.msra.mxu0 0
      %535 = vmatpush.bf16.msra.mxu0 0
      %536 = vmatpush.bf16.msra.mxu0 0
      %537 = vmatpush.bf16.msra.mxu0 %v509
      %538 = vmatmul.bf16.gmra.mxu0 %v514
      %v539 = vpop.f32.mrf.mxu0
      %v540 = vadd.f32 0.0, %v539
      %v541 = vpop.f32.mrf.mxu0
      %v542 = vadd.f32 0.0, %v541
      %543 = vdwg.mxu0
      %544 = vmatpush.bf16.msra.mxu0 0
      %545 = vmatpush.bf16.msra.mxu0 0
      %546 = vmatpush.bf16.msra.mxu0 0
      %547 = vmatpush.bf16.msra.mxu0 0
      %548 = vmatpush.bf16.msra.mxu0 0
      %549 = vmatpush.bf16.msra.mxu0 0
      %550 = vmatpush.bf16.msra.mxu0 0
      %551 = vmatpush.bf16.msra.mxu0 %v506
      %552 = vmatmul.bf16.gmra.mxu0 %v514
      %v553 = vpop.f32.mrf.mxu0
      %v554 = vadd.f32 0.0, %v553
      %v555 = vpop.f32.mrf.mxu0
      %v556 = vadd.f32 0.0, %v555
      %557 = vdwg.mxu0
      %v558 = vadd.f32 %v470, %v526
      %v559 = vadd.f32 %v471, %v540
      %v560 = vadd.f32 %v472, %v554
      %v561 = vadd.f32 %v473, %v528
      %v562 = vadd.f32 %v474, %v542
      %v563 = vadd.f32 %v475, %v556
      %564 = vst [vmem:[%s170] sm:$0xff] %v558
      %565 = vst [vmem:[%s170 + $0x8] sm:$0xff] %v559
      %566 = vst.msk [vmem:[%s170 + $0x10] sm:$0xff] %vm174, %v560
      %567 = vst [vmem:[%s170 + $0x18] sm:$0xff] %v561
      %568 = vst [vmem:[%s170 + $0x20] sm:$0xff] %v562
      %569 = vst.msk [vmem:[%s170 + $0x28] sm:$0xff] %vm174, %v563
      %v570 = vld [vmem:[%s170] sm:$0xff]
      %v571 = vld [vmem:[%s170 + $0x8] sm:$0xff]
      %v572 = vld [vmem:[%s170 + $0x10] sm:$0xff]
      %v573 = vld [vmem:[%s170 + $0x18] sm:$0xff]
      %v574 = vld [vmem:[%s170 + $0x20] sm:$0xff]
      %v575 = vld [vmem:[%s170 + $0x28] sm:$0xff]
      %s576 = scalar_lea.vmem %s0, 32
      %v577 = vld [vmem:[%s576] sm:$0xf]
      %v578 = vld [vmem:[%s576 + $0x4] sm:$0xf]
      %v579 = vld [vmem:[%s165] sm:$0xff]
      %v580 = vld [vmem:[%s165 + $0x8] sm:$0xf]
      %v581 = vld [vmem:[%s165 + $0x10] sm:$0xff]
      %v582 = vld [vmem:[%s165 + $0x18] sm:$0xf]
      %v585 = vunpack.c.l.b16 %v577
      %v586 = vunpack.c.l.b16 %v578
      %v587 = vpack.c.b16 %v586, %v585
      %v592 = vunpack.c.l.b16 %v579
      %v593 = vunpack.c.h.b16 %v579
      %v594 = vunpack.c.l.b16 %v580
      %v595 = vunpack.c.l.b16 %v581
      %v596 = vunpack.c.h.b16 %v581
      %v597 = vunpack.c.l.b16 %v582
      %v598 = vpack.c.b16 %v595, %v592
      %v599 = vpack.c.b16 %v596, %v593
      %v600 = vpack.c.b16 %v597, %v594
      %601 = vrot.lane.b32.xlu0 %v598, 124
      %v602 = vpop.permute.xlu0 %601
      %603 = vrot.lane.b32.xlu0 %v599, 124
      %v604 = vpop.permute.xlu0 %603
      %605 = vrot.lane.b32.xlu0 %v600, 124
      %v606 = vpop.permute.xlu0 %605
      %vm607 = vcmask 1014784
      %v608 = vsel %vm607, %v602, %v604
      %v609 = vsel %vm607, %v604, %v606
      %v614 = vsel %vm212, %v587, 0
      %616 = vmatpush.bf16.msra.mxu0 0
      %617 = vmatpush.bf16.msra.mxu0 0
      %618 = vmatpush.bf16.msra.mxu0 0
      %619 = vmatpush.bf16.msra.mxu0 0
      %620 = vmatpush.bf16.msra.mxu0 0
      %621 = vmatpush.bf16.msra.mxu0 0
      %622 = vmatpush.bf16.msra.mxu0 0
      %623 = vmatpush.bf16.msra.mxu0 %v608
      %624 = vmatmul.bf16.gmra.mxu0 %v614
      %v625 = vpop.f32.mrf.mxu0
      %v626 = vadd.f32 0.0, %v625
      %v627 = vpop.f32.mrf.mxu0
      %v628 = vadd.f32 0.0, %v627
      %629 = vdwg.mxu0
      %630 = vmatpush.bf16.msra.mxu0 0
      %631 = vmatpush.bf16.msra.mxu0 0
      %632 = vmatpush.bf16.msra.mxu0 0
      %633 = vmatpush.bf16.msra.mxu0 0
      %634 = vmatpush.bf16.msra.mxu0 0
      %635 = vmatpush.bf16.msra.mxu0 0
      %636 = vmatpush.bf16.msra.mxu0 0
      %637 = vmatpush.bf16.msra.mxu0 %v609
      %638 = vmatmul.bf16.gmra.mxu0 %v614
      %v639 = vpop.f32.mrf.mxu0
      %v640 = vadd.f32 0.0, %v639
      %v641 = vpop.f32.mrf.mxu0
      %v642 = vadd.f32 0.0, %v641
      %643 = vdwg.mxu0
      %644 = vmatpush.bf16.msra.mxu0 0
      %645 = vmatpush.bf16.msra.mxu0 0
      %646 = vmatpush.bf16.msra.mxu0 0
      %647 = vmatpush.bf16.msra.mxu0 0
      %648 = vmatpush.bf16.msra.mxu0 0
      %649 = vmatpush.bf16.msra.mxu0 0
      %650 = vmatpush.bf16.msra.mxu0 0
      %651 = vmatpush.bf16.msra.mxu0 %v606
      %652 = vmatmul.bf16.gmra.mxu0 %v614
      %v653 = vpop.f32.mrf.mxu0
      %v654 = vadd.f32 0.0, %v653
      %v655 = vpop.f32.mrf.mxu0
      %v656 = vadd.f32 0.0, %v655
      %657 = vdwg.mxu0
      %v658 = vadd.f32 %v570, %v626
      %v659 = vadd.f32 %v571, %v640
      %v660 = vadd.f32 %v572, %v654
      %v661 = vadd.f32 %v573, %v628
      %v662 = vadd.f32 %v574, %v642
      %v663 = vadd.f32 %v575, %v656
      %664 = vst [vmem:[%s170] sm:$0xff] %v658
      %665 = vst [vmem:[%s170 + $0x8] sm:$0xff] %v659
      %666 = vst.msk [vmem:[%s170 + $0x10] sm:$0xff] %vm174, %v660
      %667 = vst [vmem:[%s170 + $0x18] sm:$0xff] %v661
      %668 = vst [vmem:[%s170 + $0x20] sm:$0xff] %v662
      %669 = vst.msk [vmem:[%s170 + $0x28] sm:$0xff] %vm174, %v663
      %v670 = vld [vmem:[%s170] sm:$0xff]
      %v671 = vld [vmem:[%s170 + $0x8] sm:$0xff]
      %v672 = vld [vmem:[%s170 + $0x10] sm:$0xff]
      %v673 = vld [vmem:[%s170 + $0x18] sm:$0xff]
      %v674 = vld [vmem:[%s170 + $0x20] sm:$0xff]
      %v675 = vld [vmem:[%s170 + $0x28] sm:$0xff]
      %s676 = scalar_lea.vmem %s0, 40
      %v677 = vld [vmem:[%s676] sm:$0xf]
      %v678 = vld [vmem:[%s676 + $0x4] sm:$0xf]
      %v679 = vld [vmem:[%s165] sm:$0xff]
      %v680 = vld [vmem:[%s165 + $0x8] sm:$0xf]
      %v681 = vld [vmem:[%s165 + $0x10] sm:$0xff]
      %v682 = vld [vmem:[%s165 + $0x18] sm:$0xf]
      %v685 = vunpack.c.l.b16 %v677
      %v686 = vunpack.c.l.b16 %v678
      %v687 = vpack.c.b16 %v686, %v685
      %v692 = vunpack.c.l.b16 %v679
      %v693 = vunpack.c.h.b16 %v679
      %v694 = vunpack.c.l.b16 %v680
      %v695 = vunpack.c.l.b16 %v681
      %v696 = vunpack.c.h.b16 %v681
      %v697 = vunpack.c.l.b16 %v682
      %v698 = vpack.c.b16 %v695, %v692
      %v699 = vpack.c.b16 %v696, %v693
      %v700 = vpack.c.b16 %v697, %v694
      %701 = vrot.lane.b32.xlu0 %v698, 108
      %v702 = vpop.permute.xlu0 %701
      %703 = vrot.lane.b32.xlu0 %v699, 108
      %v704 = vpop.permute.xlu0 %703
      %705 = vrot.lane.b32.xlu0 %v700, 108
      %v706 = vpop.permute.xlu0 %705
      %vm707 = vcmask 883712
      %v708 = vsel %vm707, %v702, %v704
      %v709 = vsel %vm707, %v704, %v706
      %v714 = vsel %vm212, %v687, 0
      %716 = vmatpush.bf16.msra.mxu0 0
      %717 = vmatpush.bf16.msra.mxu0 0
      %718 = vmatpush.bf16.msra.mxu0 0
      %719 = vmatpush.bf16.msra.mxu0 0
      %720 = vmatpush.bf16.msra.mxu0 0
      %721 = vmatpush.bf16.msra.mxu0 0
      %722 = vmatpush.bf16.msra.mxu0 0
      %723 = vmatpush.bf16.msra.mxu0 %v708
      %724 = vmatmul.bf16.gmra.mxu0 %v714
      %v725 = vpop.f32.mrf.mxu0
      %v726 = vadd.f32 0.0, %v725
      %v727 = vpop.f32.mrf.mxu0
      %v728 = vadd.f32 0.0, %v727
      %729 = vdwg.mxu0
      %730 = vmatpush.bf16.msra.mxu0 0
      %731 = vmatpush.bf16.msra.mxu0 0
      %732 = vmatpush.bf16.msra.mxu0 0
      %733 = vmatpush.bf16.msra.mxu0 0
      %734 = vmatpush.bf16.msra.mxu0 0
      %735 = vmatpush.bf16.msra.mxu0 0
      %736 = vmatpush.bf16.msra.mxu0 0
      %737 = vmatpush.bf16.msra.mxu0 %v709
      %738 = vmatmul.bf16.gmra.mxu0 %v714
      %v739 = vpop.f32.mrf.mxu0
      %v740 = vadd.f32 0.0, %v739
      %v741 = vpop.f32.mrf.mxu0
      %v742 = vadd.f32 0.0, %v741
      %743 = vdwg.mxu0
      %744 = vmatpush.bf16.msra.mxu0 0
      %745 = vmatpush.bf16.msra.mxu0 0
      %746 = vmatpush.bf16.msra.mxu0 0
      %747 = vmatpush.bf16.msra.mxu0 0
      %748 = vmatpush.bf16.msra.mxu0 0
      %749 = vmatpush.bf16.msra.mxu0 0
      %750 = vmatpush.bf16.msra.mxu0 0
      %751 = vmatpush.bf16.msra.mxu0 %v706
      %752 = vmatmul.bf16.gmra.mxu0 %v714
      %v753 = vpop.f32.mrf.mxu0
      %v754 = vadd.f32 0.0, %v753
      %v755 = vpop.f32.mrf.mxu0
      %v756 = vadd.f32 0.0, %v755
      %757 = vdwg.mxu0
      %v758 = vadd.f32 %v670, %v726
      %v759 = vadd.f32 %v671, %v740
      %v760 = vadd.f32 %v672, %v754
      %v761 = vadd.f32 %v673, %v728
      %v762 = vadd.f32 %v674, %v742
      %v763 = vadd.f32 %v675, %v756
      %764 = vst [vmem:[%s170] sm:$0xff] %v758
      %765 = vst [vmem:[%s170 + $0x8] sm:$0xff] %v759
      %766 = vst.msk [vmem:[%s170 + $0x10] sm:$0xff] %vm174, %v760
      %767 = vst [vmem:[%s170 + $0x18] sm:$0xff] %v761
      %768 = vst [vmem:[%s170 + $0x20] sm:$0xff] %v762
      %769 = vst.msk [vmem:[%s170 + $0x28] sm:$0xff] %vm174, %v763
      %v770 = vld [vmem:[%s170] sm:$0xff]
      %v771 = vld [vmem:[%s170 + $0x8] sm:$0xff]
      %v772 = vld [vmem:[%s170 + $0x10] sm:$0xff]
      %v773 = vld [vmem:[%s170 + $0x18] sm:$0xff]
      %v774 = vld [vmem:[%s170 + $0x20] sm:$0xff]
      %v775 = vld [vmem:[%s170 + $0x28] sm:$0xff]
      %s776 = scalar_lea.vmem %s0, 48
      %v777 = vld [vmem:[%s776] sm:$0xf]
      %v778 = vld [vmem:[%s776 + $0x4] sm:$0xf]
      %v779 = vld [vmem:[%s165] sm:$0xff]
      %v780 = vld [vmem:[%s165 + $0x8] sm:$0xf]
      %v781 = vld [vmem:[%s165 + $0x10] sm:$0xff]
      %v782 = vld [vmem:[%s165 + $0x18] sm:$0xf]
      %v785 = vunpack.c.l.b16 %v777
      %v786 = vunpack.c.l.b16 %v778
      %v787 = vpack.c.b16 %v786, %v785
      %v792 = vunpack.c.l.b16 %v779
      %v793 = vunpack.c.h.b16 %v779
      %v794 = vunpack.c.l.b16 %v780
      %v795 = vunpack.c.l.b16 %v781
      %v796 = vunpack.c.h.b16 %v781
      %v797 = vunpack.c.l.b16 %v782
      %v798 = vpack.c.b16 %v795, %v792
      %v799 = vpack.c.b16 %v796, %v793
      %v800 = vpack.c.b16 %v797, %v794
      %801 = vrot.lane.b32.xlu0 %v798, 107
      %v802 = vpop.permute.xlu0 %801
      %803 = vrot.lane.b32.xlu0 %v799, 107
      %v804 = vpop.permute.xlu0 %803
      %805 = vrot.lane.b32.xlu0 %v800, 107
      %v806 = vpop.permute.xlu0 %805
      %vm807 = vcmask 875520
      %v808 = vsel %vm807, %v802, %v804
      %v809 = vsel %vm807, %v804, %v806
      %v814 = vsel %vm212, %v787, 0
      %816 = vmatpush.bf16.msra.mxu0 0
      %817 = vmatpush.bf16.msra.mxu0 0
      %818 = vmatpush.bf16.msra.mxu0 0
      %819 = vmatpush.bf16.msra.mxu0 0
      %820 = vmatpush.bf16.msra.mxu0 0
      %821 = vmatpush.bf16.msra.mxu0 0
      %822 = vmatpush.bf16.msra.mxu0 0
      %823 = vmatpush.bf16.msra.mxu0 %v808
      %824 = vmatmul.bf16.gmra.mxu0 %v814
      %v825 = vpop.f32.mrf.mxu0
      %v826 = vadd.f32 0.0, %v825
      %v827 = vpop.f32.mrf.mxu0
      %v828 = vadd.f32 0.0, %v827
      %829 = vdwg.mxu0
      %830 = vmatpush.bf16.msra.mxu0 0
      %831 = vmatpush.bf16.msra.mxu0 0
      %832 = vmatpush.bf16.msra.mxu0 0
      %833 = vmatpush.bf16.msra.mxu0 0
      %834 = vmatpush.bf16.msra.mxu0 0
      %835 = vmatpush.bf16.msra.mxu0 0
      %836 = vmatpush.bf16.msra.mxu0 0
      %837 = vmatpush.bf16.msra.mxu0 %v809
      %838 = vmatmul.bf16.gmra.mxu0 %v814
      %v839 = vpop.f32.mrf.mxu0
      %v840 = vadd.f32 0.0, %v839
      %v841 = vpop.f32.mrf.mxu0
      %v842 = vadd.f32 0.0, %v841
      %843 = vdwg.mxu0
      %844 = vmatpush.bf16.msra.mxu0 0
      %845 = vmatpush.bf16.msra.mxu0 0
      %846 = vmatpush.bf16.msra.mxu0 0
      %847 = vmatpush.bf16.msra.mxu0 0
      %848 = vmatpush.bf16.msra.mxu0 0
      %849 = vmatpush.bf16.msra.mxu0 0
      %850 = vmatpush.bf16.msra.mxu0 0
      %851 = vmatpush.bf16.msra.mxu0 %v806
      %852 = vmatmul.bf16.gmra.mxu0 %v814
      %v853 = vpop.f32.mrf.mxu0
      %v854 = vadd.f32 0.0, %v853
      %v855 = vpop.f32.mrf.mxu0
      %v856 = vadd.f32 0.0, %v855
      %857 = vdwg.mxu0
      %v858 = vadd.f32 %v770, %v826
      %v859 = vadd.f32 %v771, %v840
      %v860 = vadd.f32 %v772, %v854
      %v861 = vadd.f32 %v773, %v828
      %v862 = vadd.f32 %v774, %v842
      %v863 = vadd.f32 %v775, %v856
      %864 = vst [vmem:[%s170] sm:$0xff] %v858
      %865 = vst [vmem:[%s170 + $0x8] sm:$0xff] %v859
      %866 = vst.msk [vmem:[%s170 + $0x10] sm:$0xff] %vm174, %v860
      %867 = vst [vmem:[%s170 + $0x18] sm:$0xff] %v861
      %868 = vst [vmem:[%s170 + $0x20] sm:$0xff] %v862
      %869 = vst.msk [vmem:[%s170 + $0x28] sm:$0xff] %vm174, %v863
      %v870 = vld [vmem:[%s170] sm:$0xff]
      %v871 = vld [vmem:[%s170 + $0x8] sm:$0xff]
      %v872 = vld [vmem:[%s170 + $0x10] sm:$0xff]
      %v873 = vld [vmem:[%s170 + $0x18] sm:$0xff]
      %v874 = vld [vmem:[%s170 + $0x20] sm:$0xff]
      %v875 = vld [vmem:[%s170 + $0x28] sm:$0xff]
      %s876 = scalar_lea.vmem %s0, 56
      %v877 = vld [vmem:[%s876] sm:$0xf]
      %v878 = vld [vmem:[%s876 + $0x4] sm:$0xf]
      %v879 = vld [vmem:[%s165] sm:$0xff]
      %v880 = vld [vmem:[%s165 + $0x8] sm:$0xf]
      %v881 = vld [vmem:[%s165 + $0x10] sm:$0xff]
      %v882 = vld [vmem:[%s165 + $0x18] sm:$0xf]
      %v885 = vunpack.c.l.b16 %v877
      %v886 = vunpack.c.l.b16 %v878
      %v887 = vpack.c.b16 %v886, %v885
      %v892 = vunpack.c.l.b16 %v879
      %v893 = vunpack.c.h.b16 %v879
      %v894 = vunpack.c.l.b16 %v880
      %v895 = vunpack.c.l.b16 %v881
      %v896 = vunpack.c.h.b16 %v881
      %v897 = vunpack.c.l.b16 %v882
      %v898 = vpack.c.b16 %v895, %v892
      %v899 = vpack.c.b16 %v896, %v893
      %v900 = vpack.c.b16 %v897, %v894
      %901 = vrot.lane.b32.xlu0 %v898, 106
      %v902 = vpop.permute.xlu0 %901
      %903 = vrot.lane.b32.xlu0 %v899, 106
      %v904 = vpop.permute.xlu0 %903
      %905 = vrot.lane.b32.xlu0 %v900, 106
      %v906 = vpop.permute.xlu0 %905
      %vm907 = vcmask 867328
      %v908 = vsel %vm907, %v902, %v904
      %v909 = vsel %vm907, %v904, %v906
      %v914 = vsel %vm212, %v887, 0
      %916 = vmatpush.bf16.msra.mxu0 0
      %917 = vmatpush.bf16.msra.mxu0 0
      %918 = vmatpush.bf16.msra.mxu0 0
      %919 = vmatpush.bf16.msra.mxu0 0
      %920 = vmatpush.bf16.msra.mxu0 0
      %921 = vmatpush.bf16.msra.mxu0 0
      %922 = vmatpush.bf16.msra.mxu0 0
      %923 = vmatpush.bf16.msra.mxu0 %v908
      %924 = vmatmul.bf16.gmra.mxu0 %v914
      %v925 = vpop.f32.mrf.mxu0
      %v926 = vadd.f32 0.0, %v925
      %v927 = vpop.f32.mrf.mxu0
      %v928 = vadd.f32 0.0, %v927
      %929 = vdwg.mxu0
      %930 = vmatpush.bf16.msra.mxu0 0
      %931 = vmatpush.bf16.msra.mxu0 0
      %932 = vmatpush.bf16.msra.mxu0 0
      %933 = vmatpush.bf16.msra.mxu0 0
      %934 = vmatpush.bf16.msra.mxu0 0
      %935 = vmatpush.bf16.msra.mxu0 0
      %936 = vmatpush.bf16.msra.mxu0 0
      %937 = vmatpush.bf16.msra.mxu0 %v909
      %938 = vmatmul.bf16.gmra.mxu0 %v914
      %v939 = vpop.f32.mrf.mxu0
      %v940 = vadd.f32 0.0, %v939
      %v941 = vpop.f32.mrf.mxu0
      %v942 = vadd.f32 0.0, %v941
      %943 = vdwg.mxu0
      %944 = vmatpush.bf16.msra.mxu0 0
      %945 = vmatpush.bf16.msra.mxu0 0
      %946 = vmatpush.bf16.msra.mxu0 0
      %947 = vmatpush.bf16.msra.mxu0 0
      %948 = vmatpush.bf16.msra.mxu0 0
      %949 = vmatpush.bf16.msra.mxu0 0
      %950 = vmatpush.bf16.msra.mxu0 0
      %951 = vmatpush.bf16.msra.mxu0 %v906
      %952 = vmatmul.bf16.gmra.mxu0 %v914
      %v953 = vpop.f32.mrf.mxu0
      %v954 = vadd.f32 0.0, %v953
      %v955 = vpop.f32.mrf.mxu0
      %v956 = vadd.f32 0.0, %v955
      %957 = vdwg.mxu0
      %v958 = vadd.f32 %v870, %v926
      %v959 = vadd.f32 %v871, %v940
      %v960 = vadd.f32 %v872, %v954
      %v961 = vadd.f32 %v873, %v928
      %v962 = vadd.f32 %v874, %v942
      %v963 = vadd.f32 %v875, %v956
      %964 = vst [vmem:[%s170] sm:$0xff] %v958
      %965 = vst [vmem:[%s170 + $0x8] sm:$0xff] %v959
      %966 = vst.msk [vmem:[%s170 + $0x10] sm:$0xff] %vm174, %v960
      %967 = vst [vmem:[%s170 + $0x18] sm:$0xff] %v961
      %968 = vst [vmem:[%s170 + $0x20] sm:$0xff] %v962
      %969 = vst.msk [vmem:[%s170 + $0x28] sm:$0xff] %vm174, %v963
      %v970 = vld [vmem:[%s170] sm:$0xff]
      %v971 = vld [vmem:[%s170 + $0x8] sm:$0xff]
      %v972 = vld [vmem:[%s170 + $0x10] sm:$0xff]
      %v973 = vld [vmem:[%s170 + $0x18] sm:$0xff]
      %v974 = vld [vmem:[%s170 + $0x20] sm:$0xff]
      %v975 = vld [vmem:[%s170 + $0x28] sm:$0xff]
      %s976 = scalar_lea.vmem %s0, 64
      %v977 = vld [vmem:[%s976] sm:$0xf]
      %v978 = vld [vmem:[%s976 + $0x4] sm:$0xf]
      %v979 = vld [vmem:[%s165] sm:$0xff]
      %v980 = vld [vmem:[%s165 + $0x8] sm:$0xf]
      %v981 = vld [vmem:[%s165 + $0x10] sm:$0xff]
      %v982 = vld [vmem:[%s165 + $0x18] sm:$0xf]
      %v985 = vunpack.c.l.b16 %v977
      %v986 = vunpack.c.l.b16 %v978
      %v987 = vpack.c.b16 %v986, %v985
      %v992 = vunpack.c.l.b16 %v979
      %v993 = vunpack.c.h.b16 %v979
      %v994 = vunpack.c.l.b16 %v980
      %v995 = vunpack.c.l.b16 %v981
      %v996 = vunpack.c.h.b16 %v981
      %v997 = vunpack.c.l.b16 %v982
      %v998 = vpack.c.b16 %v995, %v992
      %v999 = vpack.c.b16 %v996, %v993
      %v1000 = vpack.c.b16 %v997, %v994
      %1001 = vrot.lane.b32.xlu0 %v998, 105
      %v1002 = vpop.permute.xlu0 %1001
      %1003 = vrot.lane.b32.xlu0 %v999, 105
      %v1004 = vpop.permute.xlu0 %1003
      %1005 = vrot.lane.b32.xlu0 %v1000, 105
      %v1006 = vpop.permute.xlu0 %1005
      %vm1007 = vcmask 859136
      %v1008 = vsel %vm1007, %v1002, %v1004
      %v1009 = vsel %vm1007, %v1004, %v1006
      %v1014 = vsel %vm212, %v987, 0
      %1016 = vmatpush.bf16.msra.mxu0 0
      %1017 = vmatpush.bf16.msra.mxu0 0
      %1018 = vmatpush.bf16.msra.mxu0 0
      %1019 = vmatpush.bf16.msra.mxu0 0
      %1020 = vmatpush.bf16.msra.mxu0 0
      %1021 = vmatpush.bf16.msra.mxu0 0
      %1022 = vmatpush.bf16.msra.mxu0 0
      %1023 = vmatpush.bf16.msra.mxu0 %v1008
      %1024 = vmatmul.bf16.gmra.mxu0 %v1014
      %v1025 = vpop.f32.mrf.mxu0
      %v1026 = vadd.f32 0.0, %v1025
      %v1027 = vpop.f32.mrf.mxu0
      %v1028 = vadd.f32 0.0, %v1027
      %1029 = vdwg.mxu0
      %1030 = vmatpush.bf16.msra.mxu0 0
      %1031 = vmatpush.bf16.msra.mxu0 0
      %1032 = vmatpush.bf16.msra.mxu0 0
      %1033 = vmatpush.bf16.msra.mxu0 0
      %1034 = vmatpush.bf16.msra.mxu0 0
      %1035 = vmatpush.bf16.msra.mxu0 0
      %1036 = vmatpush.bf16.msra.mxu0 0
      %1037 = vmatpush.bf16.msra.mxu0 %v1009
      %1038 = vmatmul.bf16.gmra.mxu0 %v1014
      %v1039 = vpop.f32.mrf.mxu0
      %v1040 = vadd.f32 0.0, %v1039
      %v1041 = vpop.f32.mrf.mxu0
      %v1042 = vadd.f32 0.0, %v1041
      %1043 = vdwg.mxu0
      %1044 = vmatpush.bf16.msra.mxu0 0
      %1045 = vmatpush.bf16.msra.mxu0 0
      %1046 = vmatpush.bf16.msra.mxu0 0
      %1047 = vmatpush.bf16.msra.mxu0 0
      %1048 = vmatpush.bf16.msra.mxu0 0
      %1049 = vmatpush.bf16.msra.mxu0 0
      %1050 = vmatpush.bf16.msra.mxu0 0
      %1051 = vmatpush.bf16.msra.mxu0 %v1006
      %1052 = vmatmul.bf16.gmra.mxu0 %v1014
      %v1053 = vpop.f32.mrf.mxu0
      %v1054 = vadd.f32 0.0, %v1053
      %v1055 = vpop.f32.mrf.mxu0
      %v1056 = vadd.f32 0.0, %v1055
      %1057 = vdwg.mxu0
      %v1058 = vadd.f32 %v970, %v1026
      %v1059 = vadd.f32 %v971, %v1040
      %v1060 = vadd.f32 %v972, %v1054
      %v1061 = vadd.f32 %v973, %v1028
      %v1062 = vadd.f32 %v974, %v1042
      %v1063 = vadd.f32 %v975, %v1056
      %1064 = vst [vmem:[%s170] sm:$0xff] %v1058
      %1065 = vst [vmem:[%s170 + $0x8] sm:$0xff] %v1059
      %1066 = vst.msk [vmem:[%s170 + $0x10] sm:$0xff] %vm174, %v1060
      %1067 = vst [vmem:[%s170 + $0x18] sm:$0xff] %v1061
      %1068 = vst [vmem:[%s170 + $0x20] sm:$0xff] %v1062
      %1069 = vst.msk [vmem:[%s170 + $0x28] sm:$0xff] %vm174, %v1063
      %v1070 = vld [vmem:[%s170] sm:$0xff]
      %v1071 = vld [vmem:[%s170 + $0x8] sm:$0xff]
      %v1072 = vld [vmem:[%s170 + $0x10] sm:$0xff]
      %v1073 = vld [vmem:[%s170 + $0x18] sm:$0xff]
      %v1074 = vld [vmem:[%s170 + $0x20] sm:$0xff]
      %v1075 = vld [vmem:[%s170 + $0x28] sm:$0xff]
      %s1076 = scalar_lea.vmem %s0, 72
      %v1077 = vld [vmem:[%s1076] sm:$0xf]
      %v1078 = vld [vmem:[%s1076 + $0x4] sm:$0xf]
      %v1079 = vld [vmem:[%s165] sm:$0xff]
      %v1080 = vld [vmem:[%s165 + $0x8] sm:$0xf]
      %v1081 = vld [vmem:[%s165 + $0x10] sm:$0xff]
      %v1082 = vld [vmem:[%s165 + $0x18] sm:$0xf]
      %v1085 = vunpack.c.l.b16 %v1077
      %v1086 = vunpack.c.l.b16 %v1078
      %v1087 = vpack.c.b16 %v1086, %v1085
      %v1092 = vunpack.c.l.b16 %v1079
      %v1093 = vunpack.c.h.b16 %v1079
      %v1094 = vunpack.c.l.b16 %v1080
      %v1095 = vunpack.c.l.b16 %v1081
      %v1096 = vunpack.c.h.b16 %v1081
      %v1097 = vunpack.c.l.b16 %v1082
      %v1098 = vpack.c.b16 %v1095, %v1092
      %v1099 = vpack.c.b16 %v1096, %v1093
      %v1100 = vpack.c.b16 %v1097, %v1094
      %1101 = vrot.lane.b32.xlu0 %v1098, 104
      %v1102 = vpop.permute.xlu0 %1101
      %1103 = vrot.lane.b32.xlu0 %v1099, 104
      %v1104 = vpop.permute.xlu0 %1103
      %1105 = vrot.lane.b32.xlu0 %v1100, 104
      %v1106 = vpop.permute.xlu0 %1105
      %vm1107 = vcmask 850944
      %v1108 = vsel %vm1107, %v1102, %v1104
      %v1109 = vsel %vm1107, %v1104, %v1106
      %v1114 = vsel %vm212, %v1087, 0
      %1116 = vmatpush.bf16.msra.mxu0 0
      %1117 = vmatpush.bf16.msra.mxu0 0
      %1118 = vmatpush.bf16.msra.mxu0 0
      %1119 = vmatpush.bf16.msra.mxu0 0
      %1120 = vmatpush.bf16.msra.mxu0 0
      %1121 = vmatpush.bf16.msra.mxu0 0
      %1122 = vmatpush.bf16.msra.mxu0 0
      %1123 = vmatpush.bf16.msra.mxu0 %v1108
      %1124 = vmatmul.bf16.gmra.mxu0 %v1114
      %v1125 = vpop.f32.mrf.mxu0
      %v1126 = vadd.f32 0.0, %v1125
      %v1127 = vpop.f32.mrf.mxu0
      %v1128 = vadd.f32 0.0, %v1127
      %1129 = vdwg.mxu0
      %1130 = vmatpush.bf16.msra.mxu0 0
      %1131 = vmatpush.bf16.msra.mxu0 0
      %1132 = vmatpush.bf16.msra.mxu0 0
      %1133 = vmatpush.bf16.msra.mxu0 0
      %1134 = vmatpush.bf16.msra.mxu0 0
      %1135 = vmatpush.bf16.msra.mxu0 0
      %1136 = vmatpush.bf16.msra.mxu0 0
      %1137 = vmatpush.bf16.msra.mxu0 %v1109
      %1138 = vmatmul.bf16.gmra.mxu0 %v1114
      %v1139 = vpop.f32.mrf.mxu0
      %v1140 = vadd.f32 0.0, %v1139
      %v1141 = vpop.f32.mrf.mxu0
      %v1142 = vadd.f32 0.0, %v1141
      %1143 = vdwg.mxu0
      %1144 = vmatpush.bf16.msra.mxu0 0
      %1145 = vmatpush.bf16.msra.mxu0 0
      %1146 = vmatpush.bf16.msra.mxu0 0
      %1147 = vmatpush.bf16.msra.mxu0 0
      %1148 = vmatpush.bf16.msra.mxu0 0
      %1149 = vmatpush.bf16.msra.mxu0 0
      %1150 = vmatpush.bf16.msra.mxu0 0
      %1151 = vmatpush.bf16.msra.mxu0 %v1106
      %1152 = vmatmul.bf16.gmra.mxu0 %v1114
      %v1153 = vpop.f32.mrf.mxu0
      %v1154 = vadd.f32 0.0, %v1153
      %v1155 = vpop.f32.mrf.mxu0
      %v1156 = vadd.f32 0.0, %v1155
      %1157 = vdwg.mxu0
      %v1158 = vadd.f32 %v1070, %v1126
      %v1159 = vadd.f32 %v1071, %v1140
      %v1160 = vadd.f32 %v1072, %v1154
      %v1161 = vadd.f32 %v1073, %v1128
      %v1162 = vadd.f32 %v1074, %v1142
      %v1163 = vadd.f32 %v1075, %v1156
      %1164 = vst [vmem:[%s170] sm:$0xff] %v1158
      %1165 = vst [vmem:[%s170 + $0x8] sm:$0xff] %v1159
      %1166 = vst.msk [vmem:[%s170 + $0x10] sm:$0xff] %vm174, %v1160
      %1167 = vst [vmem:[%s170 + $0x18] sm:$0xff] %v1161
      %1168 = vst [vmem:[%s170 + $0x20] sm:$0xff] %v1162
      %1169 = vst.msk [vmem:[%s170 + $0x28] sm:$0xff] %vm174, %v1163
      %v1170 = vld [vmem:[%s170] sm:$0xff]
      %v1171 = vld [vmem:[%s170 + $0x8] sm:$0xff]
      %v1172 = vld [vmem:[%s170 + $0x10] sm:$0xff]
      %v1173 = vld [vmem:[%s170 + $0x18] sm:$0xff]
      %v1174 = vld [vmem:[%s170 + $0x20] sm:$0xff]
      %v1175 = vld [vmem:[%s170 + $0x28] sm:$0xff]
      %s1176 = scalar_lea.vmem %s0, 80
      %v1177 = vld [vmem:[%s1176] sm:$0xf]
      %v1178 = vld [vmem:[%s1176 + $0x4] sm:$0xf]
      %v1179 = vld [vmem:[%s165] sm:$0xff]
      %v1180 = vld [vmem:[%s165 + $0x8] sm:$0xf]
      %v1181 = vld [vmem:[%s165 + $0x10] sm:$0xff]
      %v1182 = vld [vmem:[%s165 + $0x18] sm:$0xf]
      %v1185 = vunpack.c.l.b16 %v1177
      %v1186 = vunpack.c.l.b16 %v1178
      %v1187 = vpack.c.b16 %v1186, %v1185
      %v1192 = vunpack.c.l.b16 %v1179
      %v1193 = vunpack.c.h.b16 %v1179
      %v1194 = vunpack.c.l.b16 %v1180
      %v1195 = vunpack.c.l.b16 %v1181
      %v1196 = vunpack.c.h.b16 %v1181
      %v1197 = vunpack.c.l.b16 %v1182
      %v1198 = vpack.c.b16 %v1195, %v1192
      %v1199 = vpack.c.b16 %v1196, %v1193
      %v1200 = vpack.c.b16 %v1197, %v1194
      %1201 = vrot.lane.b32.xlu0 %v1198, 88
      %v1202 = vpop.permute.xlu0 %1201
      %1203 = vrot.lane.b32.xlu0 %v1199, 88
      %v1204 = vpop.permute.xlu0 %1203
      %1205 = vrot.lane.b32.xlu0 %v1200, 88
      %v1206 = vpop.permute.xlu0 %1205
      %vm1207 = vcmask 719872
      %v1208 = vsel %vm1207, %v1202, %v1204
      %v1209 = vsel %vm1207, %v1204, %v1206
      %v1214 = vsel %vm212, %v1187, 0
      %1216 = vmatpush.bf16.msra.mxu0 0
      %1217 = vmatpush.bf16.msra.mxu0 0
      %1218 = vmatpush.bf16.msra.mxu0 0
      %1219 = vmatpush.bf16.msra.mxu0 0
      %1220 = vmatpush.bf16.msra.mxu0 0
      %1221 = vmatpush.bf16.msra.mxu0 0
      %1222 = vmatpush.bf16.msra.mxu0 0
      %1223 = vmatpush.bf16.msra.mxu0 %v1208
      %1224 = vmatmul.bf16.gmra.mxu0 %v1214
      %v1225 = vpop.f32.mrf.mxu0
      %v1226 = vadd.f32 0.0, %v1225
      %v1227 = vpop.f32.mrf.mxu0
      %v1228 = vadd.f32 0.0, %v1227
      %1229 = vdwg.mxu0
      %1230 = vmatpush.bf16.msra.mxu0 0
      %1231 = vmatpush.bf16.msra.mxu0 0
      %1232 = vmatpush.bf16.msra.mxu0 0
      %1233 = vmatpush.bf16.msra.mxu0 0
      %1234 = vmatpush.bf16.msra.mxu0 0
      %1235 = vmatpush.bf16.msra.mxu0 0
      %1236 = vmatpush.bf16.msra.mxu0 0
      %1237 = vmatpush.bf16.msra.mxu0 %v1209
      %1238 = vmatmul.bf16.gmra.mxu0 %v1214
      %v1239 = vpop.f32.mrf.mxu0
      %v1240 = vadd.f32 0.0, %v1239
      %v1241 = vpop.f32.mrf.mxu0
      %v1242 = vadd.f32 0.0, %v1241
      %1243 = vdwg.mxu0
      %1244 = vmatpush.bf16.msra.mxu0 0
      %1245 = vmatpush.bf16.msra.mxu0 0
      %1246 = vmatpush.bf16.msra.mxu0 0
      %1247 = vmatpush.bf16.msra.mxu0 0
      %1248 = vmatpush.bf16.msra.mxu0 0
      %1249 = vmatpush.bf16.msra.mxu0 0
      %1250 = vmatpush.bf16.msra.mxu0 0
      %1251 = vmatpush.bf16.msra.mxu0 %v1206
      %1252 = vmatmul.bf16.gmra.mxu0 %v1214
      %v1253 = vpop.f32.mrf.mxu0
      %v1254 = vadd.f32 0.0, %v1253
      %v1255 = vpop.f32.mrf.mxu0
      %v1256 = vadd.f32 0.0, %v1255
      %1257 = vdwg.mxu0
      %v1258 = vadd.f32 %v1170, %v1226
      %v1259 = vadd.f32 %v1171, %v1240
      %v1260 = vadd.f32 %v1172, %v1254
      %v1261 = vadd.f32 %v1173, %v1228
      %v1262 = vadd.f32 %v1174, %v1242
      %v1263 = vadd.f32 %v1175, %v1256
      %1264 = vst [vmem:[%s170] sm:$0xff] %v1258
      %1265 = vst [vmem:[%s170 + $0x8] sm:$0xff] %v1259
      %1266 = vst.msk [vmem:[%s170 + $0x10] sm:$0xff] %vm174, %v1260
      %1267 = vst [vmem:[%s170 + $0x18] sm:$0xff] %v1261
      %1268 = vst [vmem:[%s170 + $0x20] sm:$0xff] %v1262
      %1269 = vst.msk [vmem:[%s170 + $0x28] sm:$0xff] %vm174, %v1263
      %v1270 = vld [vmem:[%s170] sm:$0xff]
      %v1271 = vld [vmem:[%s170 + $0x8] sm:$0xff]
      %v1272 = vld [vmem:[%s170 + $0x10] sm:$0xff]
      %v1273 = vld [vmem:[%s170 + $0x18] sm:$0xff]
      %v1274 = vld [vmem:[%s170 + $0x20] sm:$0xff]
      %v1275 = vld [vmem:[%s170 + $0x28] sm:$0xff]
      %s1276 = scalar_lea.vmem %s0, 88
      %v1277 = vld [vmem:[%s1276] sm:$0xf]
      %v1278 = vld [vmem:[%s1276 + $0x4] sm:$0xf]
      %v1279 = vld [vmem:[%s165] sm:$0xff]
      %v1280 = vld [vmem:[%s165 + $0x8] sm:$0xf]
      %v1281 = vld [vmem:[%s165 + $0x10] sm:$0xff]
      %v1282 = vld [vmem:[%s165 + $0x18] sm:$0xf]
      %v1285 = vunpack.c.l.b16 %v1277
      %v1286 = vunpack.c.l.b16 %v1278
      %v1287 = vpack.c.b16 %v1286, %v1285
      %v1292 = vunpack.c.l.b16 %v1279
      %v1293 = vunpack.c.h.b16 %v1279
      %v1294 = vunpack.c.l.b16 %v1280
      %v1295 = vunpack.c.l.b16 %v1281
      %v1296 = vunpack.c.h.b16 %v1281
      %v1297 = vunpack.c.l.b16 %v1282
      %v1298 = vpack.c.b16 %v1295, %v1292
      %v1299 = vpack.c.b16 %v1296, %v1293
      %v1300 = vpack.c.b16 %v1297, %v1294
      %1301 = vrot.lane.b32.xlu0 %v1298, 87
      %v1302 = vpop.permute.xlu0 %1301
      %1303 = vrot.lane.b32.xlu0 %v1299, 87
      %v1304 = vpop.permute.xlu0 %1303
      %1305 = vrot.lane.b32.xlu0 %v1300, 87
      %v1306 = vpop.permute.xlu0 %1305
      %vm1307 = vcmask 711680
      %v1308 = vsel %vm1307, %v1302, %v1304
      %v1309 = vsel %vm1307, %v1304, %v1306
      %v1314 = vsel %vm212, %v1287, 0
      %1316 = vmatpush.bf16.msra.mxu0 0
      %1317 = vmatpush.bf16.msra.mxu0 0
      %1318 = vmatpush.bf16.msra.mxu0 0
      %1319 = vmatpush.bf16.msra.mxu0 0
      %1320 = vmatpush.bf16.msra.mxu0 0
      %1321 = vmatpush.bf16.msra.mxu0 0
      %1322 = vmatpush.bf16.msra.mxu0 0
      %1323 = vmatpush.bf16.msra.mxu0 %v1308
      %1324 = vmatmul.bf16.gmra.mxu0 %v1314
      %v1325 = vpop.f32.mrf.mxu0
      %v1326 = vadd.f32 0.0, %v1325
      %v1327 = vpop.f32.mrf.mxu0
      %v1328 = vadd.f32 0.0, %v1327
      %1329 = vdwg.mxu0
      %1330 = vmatpush.bf16.msra.mxu0 0
      %1331 = vmatpush.bf16.msra.mxu0 0
      %1332 = vmatpush.bf16.msra.mxu0 0
      %1333 = vmatpush.bf16.msra.mxu0 0
      %1334 = vmatpush.bf16.msra.mxu0 0
      %1335 = vmatpush.bf16.msra.mxu0 0
      %1336 = vmatpush.bf16.msra.mxu0 0
      %1337 = vmatpush.bf16.msra.mxu0 %v1309
      %1338 = vmatmul.bf16.gmra.mxu0 %v1314
      %v1339 = vpop.f32.mrf.mxu0
      %v1340 = vadd.f32 0.0, %v1339
      %v1341 = vpop.f32.mrf.mxu0
      %v1342 = vadd.f32 0.0, %v1341
      %1343 = vdwg.mxu0
      %1344 = vmatpush.bf16.msra.mxu0 0
      %1345 = vmatpush.bf16.msra.mxu0 0
      %1346 = vmatpush.bf16.msra.mxu0 0
      %1347 = vmatpush.bf16.msra.mxu0 0
      %1348 = vmatpush.bf16.msra.mxu0 0
      %1349 = vmatpush.bf16.msra.mxu0 0
      %1350 = vmatpush.bf16.msra.mxu0 0
      %1351 = vmatpush.bf16.msra.mxu0 %v1306
      %1352 = vmatmul.bf16.gmra.mxu0 %v1314
      %v1353 = vpop.f32.mrf.mxu0
      %v1354 = vadd.f32 0.0, %v1353
      %v1355 = vpop.f32.mrf.mxu0
      %v1356 = vadd.f32 0.0, %v1355
      %1357 = vdwg.mxu0
      %v1358 = vadd.f32 %v1270, %v1326
      %v1359 = vadd.f32 %v1271, %v1340
      %v1360 = vadd.f32 %v1272, %v1354
      %v1361 = vadd.f32 %v1273, %v1328
      %v1362 = vadd.f32 %v1274, %v1342
      %v1363 = vadd.f32 %v1275, %v1356
      %1364 = vst [vmem:[%s170] sm:$0xff] %v1358
      %1365 = vst [vmem:[%s170 + $0x8] sm:$0xff] %v1359
      %1366 = vst.msk [vmem:[%s170 + $0x10] sm:$0xff] %vm174, %v1360
      %1367 = vst [vmem:[%s170 + $0x18] sm:$0xff] %v1361
      %1368 = vst [vmem:[%s170 + $0x20] sm:$0xff] %v1362
      %1369 = vst.msk [vmem:[%s170 + $0x28] sm:$0xff] %vm174, %v1363
      %v1370 = vld [vmem:[%s170] sm:$0xff]
      %v1371 = vld [vmem:[%s170 + $0x8] sm:$0xff]
      %v1372 = vld [vmem:[%s170 + $0x10] sm:$0xff]
      %v1373 = vld [vmem:[%s170 + $0x18] sm:$0xff]
      %v1374 = vld [vmem:[%s170 + $0x20] sm:$0xff]
      %v1375 = vld [vmem:[%s170 + $0x28] sm:$0xff]
      %s1376 = scalar_lea.vmem %s0, 96
      %v1377 = vld [vmem:[%s1376] sm:$0xf]
      %v1378 = vld [vmem:[%s1376 + $0x4] sm:$0xf]
      %v1379 = vld [vmem:[%s165] sm:$0xff]
      %v1380 = vld [vmem:[%s165 + $0x8] sm:$0xf]
      %v1381 = vld [vmem:[%s165 + $0x10] sm:$0xff]
      %v1382 = vld [vmem:[%s165 + $0x18] sm:$0xf]
      %v1385 = vunpack.c.l.b16 %v1377
      %v1386 = vunpack.c.l.b16 %v1378
      %v1387 = vpack.c.b16 %v1386, %v1385
      %v1392 = vunpack.c.l.b16 %v1379
      %v1393 = vunpack.c.h.b16 %v1379
      %v1394 = vunpack.c.l.b16 %v1380
      %v1395 = vunpack.c.l.b16 %v1381
      %v1396 = vunpack.c.h.b16 %v1381
      %v1397 = vunpack.c.l.b16 %v1382
      %v1398 = vpack.c.b16 %v1395, %v1392
      %v1399 = vpack.c.b16 %v1396, %v1393
      %v1400 = vpack.c.b16 %v1397, %v1394
      %1401 = vrot.lane.b32.xlu0 %v1398, 86
      %v1402 = vpop.permute.xlu0 %1401
      %1403 = vrot.lane.b32.xlu0 %v1399, 86
      %v1404 = vpop.permute.xlu0 %1403
      %1405 = vrot.lane.b32.xlu0 %v1400, 86
      %v1406 = vpop.permute.xlu0 %1405
      %vm1407 = vcmask 703488
      %v1408 = vsel %vm1407, %v1402, %v1404
      %v1409 = vsel %vm1407, %v1404, %v1406
      %v1414 = vsel %vm212, %v1387, 0
      %1416 = vmatpush.bf16.msra.mxu0 0
      %1417 = vmatpush.bf16.msra.mxu0 0
      %1418 = vmatpush.bf16.msra.mxu0 0
      %1419 = vmatpush.bf16.msra.mxu0 0
      %1420 = vmatpush.bf16.msra.mxu0 0
      %1421 = vmatpush.bf16.msra.mxu0 0
      %1422 = vmatpush.bf16.msra.mxu0 0
      %1423 = vmatpush.bf16.msra.mxu0 %v1408
      %1424 = vmatmul.bf16.gmra.mxu0 %v1414
      %v1425 = vpop.f32.mrf.mxu0
      %v1426 = vadd.f32 0.0, %v1425
      %v1427 = vpop.f32.mrf.mxu0
      %v1428 = vadd.f32 0.0, %v1427
      %1429 = vdwg.mxu0
      %1430 = vmatpush.bf16.msra.mxu0 0
      %1431 = vmatpush.bf16.msra.mxu0 0
      %1432 = vmatpush.bf16.msra.mxu0 0
      %1433 = vmatpush.bf16.msra.mxu0 0
      %1434 = vmatpush.bf16.msra.mxu0 0
      %1435 = vmatpush.bf16.msra.mxu0 0
      %1436 = vmatpush.bf16.msra.mxu0 0
      %1437 = vmatpush.bf16.msra.mxu0 %v1409
      %1438 = vmatmul.bf16.gmra.mxu0 %v1414
      %v1439 = vpop.f32.mrf.mxu0
      %v1440 = vadd.f32 0.0, %v1439
      %v1441 = vpop.f32.mrf.mxu0
      %v1442 = vadd.f32 0.0, %v1441
      %1443 = vdwg.mxu0
      %1444 = vmatpush.bf16.msra.mxu0 0
      %1445 = vmatpush.bf16.msra.mxu0 0
      %1446 = vmatpush.bf16.msra.mxu0 0
      %1447 = vmatpush.bf16.msra.mxu0 0
      %1448 = vmatpush.bf16.msra.mxu0 0
      %1449 = vmatpush.bf16.msra.mxu0 0
      %1450 = vmatpush.bf16.msra.mxu0 0
      %1451 = vmatpush.bf16.msra.mxu0 %v1406
      %1452 = vmatmul.bf16.gmra.mxu0 %v1414
      %v1453 = vpop.f32.mrf.mxu0
      %v1454 = vadd.f32 0.0, %v1453
      %v1455 = vpop.f32.mrf.mxu0
      %v1456 = vadd.f32 0.0, %v1455
      %1457 = vdwg.mxu0
      %v1458 = vadd.f32 %v1370, %v1426
      %v1459 = vadd.f32 %v1371, %v1440
      %v1460 = vadd.f32 %v1372, %v1454
      %v1461 = vadd.f32 %v1373, %v1428
      %v1462 = vadd.f32 %v1374, %v1442
      %v1463 = vadd.f32 %v1375, %v1456
      %1464 = vst [vmem:[%s170] sm:$0xff] %v1458
      %1465 = vst [vmem:[%s170 + $0x8] sm:$0xff] %v1459
      %1466 = vst.msk [vmem:[%s170 + $0x10] sm:$0xff] %vm174, %v1460
      %1467 = vst [vmem:[%s170 + $0x18] sm:$0xff] %v1461
      %1468 = vst [vmem:[%s170 + $0x20] sm:$0xff] %v1462
      %1469 = vst.msk [vmem:[%s170 + $0x28] sm:$0xff] %vm174, %v1463
      %v1470 = vld [vmem:[%s170] sm:$0xff]
      %v1471 = vld [vmem:[%s170 + $0x8] sm:$0xff]
      %v1472 = vld [vmem:[%s170 + $0x10] sm:$0xff]
      %v1473 = vld [vmem:[%s170 + $0x18] sm:$0xff]
      %v1474 = vld [vmem:[%s170 + $0x20] sm:$0xff]
      %v1475 = vld [vmem:[%s170 + $0x28] sm:$0xff]
      %s1476 = scalar_lea.vmem %s0, 104
      %v1477 = vld [vmem:[%s1476] sm:$0xf]
      %v1478 = vld [vmem:[%s1476 + $0x4] sm:$0xf]
      %v1479 = vld [vmem:[%s165] sm:$0xff]
      %v1480 = vld [vmem:[%s165 + $0x8] sm:$0xf]
      %v1481 = vld [vmem:[%s165 + $0x10] sm:$0xff]
      %v1482 = vld [vmem:[%s165 + $0x18] sm:$0xf]
      %v1485 = vunpack.c.l.b16 %v1477
      %v1486 = vunpack.c.l.b16 %v1478
      %v1487 = vpack.c.b16 %v1486, %v1485
      %v1492 = vunpack.c.l.b16 %v1479
      %v1493 = vunpack.c.h.b16 %v1479
      %v1494 = vunpack.c.l.b16 %v1480
      %v1495 = vunpack.c.l.b16 %v1481
      %v1496 = vunpack.c.h.b16 %v1481
      %v1497 = vunpack.c.l.b16 %v1482
      %v1498 = vpack.c.b16 %v1495, %v1492
      %v1499 = vpack.c.b16 %v1496, %v1493
      %v1500 = vpack.c.b16 %v1497, %v1494
      %1501 = vrot.lane.b32.xlu0 %v1498, 85
      %v1502 = vpop.permute.xlu0 %1501
      %1503 = vrot.lane.b32.xlu0 %v1499, 85
      %v1504 = vpop.permute.xlu0 %1503
      %1505 = vrot.lane.b32.xlu0 %v1500, 85
      %v1506 = vpop.permute.xlu0 %1505
      %vm1507 = vcmask 695296
      %v1508 = vsel %vm1507, %v1502, %v1504
      %v1509 = vsel %vm1507, %v1504, %v1506
      %v1514 = vsel %vm212, %v1487, 0
      %1516 = vmatpush.bf16.msra.mxu0 0
      %1517 = vmatpush.bf16.msra.mxu0 0
      %1518 = vmatpush.bf16.msra.mxu0 0
      %1519 = vmatpush.bf16.msra.mxu0 0
      %1520 = vmatpush.bf16.msra.mxu0 0
      %1521 = vmatpush.bf16.msra.mxu0 0
      %1522 = vmatpush.bf16.msra.mxu0 0
      %1523 = vmatpush.bf16.msra.mxu0 %v1508
      %1524 = vmatmul.bf16.gmra.mxu0 %v1514
      %v1525 = vpop.f32.mrf.mxu0
      %v1526 = vadd.f32 0.0, %v1525
      %v1527 = vpop.f32.mrf.mxu0
      %v1528 = vadd.f32 0.0, %v1527
      %1529 = vdwg.mxu0
      %1530 = vmatpush.bf16.msra.mxu0 0
      %1531 = vmatpush.bf16.msra.mxu0 0
      %1532 = vmatpush.bf16.msra.mxu0 0
      %1533 = vmatpush.bf16.msra.mxu0 0
      %1534 = vmatpush.bf16.msra.mxu0 0
      %1535 = vmatpush.bf16.msra.mxu0 0
      %1536 = vmatpush.bf16.msra.mxu0 0
      %1537 = vmatpush.bf16.msra.mxu0 %v1509
      %1538 = vmatmul.bf16.gmra.mxu0 %v1514
      %v1539 = vpop.f32.mrf.mxu0
      %v1540 = vadd.f32 0.0, %v1539
      %v1541 = vpop.f32.mrf.mxu0
      %v1542 = vadd.f32 0.0, %v1541
      %1543 = vdwg.mxu0
      %1544 = vmatpush.bf16.msra.mxu0 0
      %1545 = vmatpush.bf16.msra.mxu0 0
      %1546 = vmatpush.bf16.msra.mxu0 0
      %1547 = vmatpush.bf16.msra.mxu0 0
      %1548 = vmatpush.bf16.msra.mxu0 0
      %1549 = vmatpush.bf16.msra.mxu0 0
      %1550 = vmatpush.bf16.msra.mxu0 0
      %1551 = vmatpush.bf16.msra.mxu0 %v1506
      %1552 = vmatmul.bf16.gmra.mxu0 %v1514
      %v1553 = vpop.f32.mrf.mxu0
      %v1554 = vadd.f32 0.0, %v1553
      %v1555 = vpop.f32.mrf.mxu0
      %v1556 = vadd.f32 0.0, %v1555
      %1557 = vdwg.mxu0
      %v1558 = vadd.f32 %v1470, %v1526
      %v1559 = vadd.f32 %v1471, %v1540
      %v1560 = vadd.f32 %v1472, %v1554
      %v1561 = vadd.f32 %v1473, %v1528
      %v1562 = vadd.f32 %v1474, %v1542
      %v1563 = vadd.f32 %v1475, %v1556
      %1564 = vst [vmem:[%s170] sm:$0xff] %v1558
      %1565 = vst [vmem:[%s170 + $0x8] sm:$0xff] %v1559
      %1566 = vst.msk [vmem:[%s170 + $0x10] sm:$0xff] %vm174, %v1560
      %1567 = vst [vmem:[%s170 + $0x18] sm:$0xff] %v1561
      %1568 = vst [vmem:[%s170 + $0x20] sm:$0xff] %v1562
      %1569 = vst.msk [vmem:[%s170 + $0x28] sm:$0xff] %vm174, %v1563
      %v1570 = vld [vmem:[%s170] sm:$0xff]
      %v1571 = vld [vmem:[%s170 + $0x8] sm:$0xff]
      %v1572 = vld [vmem:[%s170 + $0x10] sm:$0xff]
      %v1573 = vld [vmem:[%s170 + $0x18] sm:$0xff]
      %v1574 = vld [vmem:[%s170 + $0x20] sm:$0xff]
      %v1575 = vld [vmem:[%s170 + $0x28] sm:$0xff]
      %s1576 = scalar_lea.vmem %s0, 112
      %v1577 = vld [vmem:[%s1576] sm:$0xf]
      %v1578 = vld [vmem:[%s1576 + $0x4] sm:$0xf]
      %v1579 = vld [vmem:[%s165] sm:$0xff]
      %v1580 = vld [vmem:[%s165 + $0x8] sm:$0xf]
      %v1581 = vld [vmem:[%s165 + $0x10] sm:$0xff]
      %v1582 = vld [vmem:[%s165 + $0x18] sm:$0xf]
      %v1585 = vunpack.c.l.b16 %v1577
      %v1586 = vunpack.c.l.b16 %v1578
      %v1587 = vpack.c.b16 %v1586, %v1585
      %v1592 = vunpack.c.l.b16 %v1579
      %v1593 = vunpack.c.h.b16 %v1579
      %v1594 = vunpack.c.l.b16 %v1580
      %v1595 = vunpack.c.l.b16 %v1581
      %v1596 = vunpack.c.h.b16 %v1581
      %v1597 = vunpack.c.l.b16 %v1582
      %v1598 = vpack.c.b16 %v1595, %v1592
      %v1599 = vpack.c.b16 %v1596, %v1593
      %v1600 = vpack.c.b16 %v1597, %v1594
      %1601 = vrot.lane.b32.xlu0 %v1598, 84
      %v1602 = vpop.permute.xlu0 %1601
      %1603 = vrot.lane.b32.xlu0 %v1599, 84
      %v1604 = vpop.permute.xlu0 %1603
      %1605 = vrot.lane.b32.xlu0 %v1600, 84
      %v1606 = vpop.permute.xlu0 %1605
      %vm1607 = vcmask 687104
      %v1608 = vsel %vm1607, %v1602, %v1604
      %v1609 = vsel %vm1607, %v1604, %v1606
      %v1614 = vsel %vm212, %v1587, 0
      %1616 = vmatpush.bf16.msra.mxu0 0
      %1617 = vmatpush.bf16.msra.mxu0 0
      %1618 = vmatpush.bf16.msra.mxu0 0
      %1619 = vmatpush.bf16.msra.mxu0 0
      %1620 = vmatpush.bf16.msra.mxu0 0
      %1621 = vmatpush.bf16.msra.mxu0 0
      %1622 = vmatpush.bf16.msra.mxu0 0
      %1623 = vmatpush.bf16.msra.mxu0 %v1608
      %1624 = vmatmul.bf16.gmra.mxu0 %v1614
      %v1625 = vpop.f32.mrf.mxu0
      %v1626 = vadd.f32 0.0, %v1625
      %v1627 = vpop.f32.mrf.mxu0
      %v1628 = vadd.f32 0.0, %v1627
      %1629 = vdwg.mxu0
      %1630 = vmatpush.bf16.msra.mxu0 0
      %1631 = vmatpush.bf16.msra.mxu0 0
      %1632 = vmatpush.bf16.msra.mxu0 0
      %1633 = vmatpush.bf16.msra.mxu0 0
      %1634 = vmatpush.bf16.msra.mxu0 0
      %1635 = vmatpush.bf16.msra.mxu0 0
      %1636 = vmatpush.bf16.msra.mxu0 0
      %1637 = vmatpush.bf16.msra.mxu0 %v1609
      %1638 = vmatmul.bf16.gmra.mxu0 %v1614
      %v1639 = vpop.f32.mrf.mxu0
      %v1640 = vadd.f32 0.0, %v1639
      %v1641 = vpop.f32.mrf.mxu0
      %v1642 = vadd.f32 0.0, %v1641
      %1643 = vdwg.mxu0
      %1644 = vmatpush.bf16.msra.mxu0 0
      %1645 = vmatpush.bf16.msra.mxu0 0
      %1646 = vmatpush.bf16.msra.mxu0 0
      %1647 = vmatpush.bf16.msra.mxu0 0
      %1648 = vmatpush.bf16.msra.mxu0 0
      %1649 = vmatpush.bf16.msra.mxu0 0
      %1650 = vmatpush.bf16.msra.mxu0 0
      %1651 = vmatpush.bf16.msra.mxu0 %v1606
      %1652 = vmatmul.bf16.gmra.mxu0 %v1614
      %v1653 = vpop.f32.mrf.mxu0
      %v1654 = vadd.f32 0.0, %v1653
      %v1655 = vpop.f32.mrf.mxu0
      %v1656 = vadd.f32 0.0, %v1655
      %1657 = vdwg.mxu0
      %v1658 = vadd.f32 %v1570, %v1626
      %v1659 = vadd.f32 %v1571, %v1640
      %v1660 = vadd.f32 %v1572, %v1654
      %v1661 = vadd.f32 %v1573, %v1628
      %v1662 = vadd.f32 %v1574, %v1642
      %v1663 = vadd.f32 %v1575, %v1656
      %1664 = vst [vmem:[%s170] sm:$0xff] %v1658
      %1665 = vst [vmem:[%s170 + $0x8] sm:$0xff] %v1659
      %1666 = vst.msk [vmem:[%s170 + $0x10] sm:$0xff] %vm174, %v1660
      %1667 = vst [vmem:[%s170 + $0x18] sm:$0xff] %v1661
      %1668 = vst [vmem:[%s170 + $0x20] sm:$0xff] %v1662
      %1669 = vst.msk [vmem:[%s170 + $0x28] sm:$0xff] %vm174, %v1663
      %v1670 = vld [vmem:[%s170] sm:$0xff]
      %v1671 = vld [vmem:[%s170 + $0x8] sm:$0xff]
      %v1672 = vld [vmem:[%s170 + $0x10] sm:$0xff]
      %v1673 = vld [vmem:[%s170 + $0x18] sm:$0xff]
      %v1674 = vld [vmem:[%s170 + $0x20] sm:$0xff]
      %v1675 = vld [vmem:[%s170 + $0x28] sm:$0xff]
      %s1676 = scalar_lea.vmem %s0, 120
      %v1677 = vld [vmem:[%s1676] sm:$0xf]
      %v1678 = vld [vmem:[%s1676 + $0x4] sm:$0xf]
      %v1679 = vld [vmem:[%s165] sm:$0xff]
      %v1680 = vld [vmem:[%s165 + $0x8] sm:$0xf]
      %v1681 = vld [vmem:[%s165 + $0x10] sm:$0xff]
      %v1682 = vld [vmem:[%s165 + $0x18] sm:$0xf]
      %v1685 = vunpack.c.l.b16 %v1677
      %v1686 = vunpack.c.l.b16 %v1678
      %v1687 = vpack.c.b16 %v1686, %v1685
      %v1692 = vunpack.c.l.b16 %v1679
      %v1693 = vunpack.c.h.b16 %v1679
      %v1694 = vunpack.c.l.b16 %v1680
      %v1695 = vunpack.c.l.b16 %v1681
      %v1696 = vunpack.c.h.b16 %v1681
      %v1697 = vunpack.c.l.b16 %v1682
      %v1698 = vpack.c.b16 %v1695, %v1692
      %v1699 = vpack.c.b16 %v1696, %v1693
      %v1700 = vpack.c.b16 %v1697, %v1694
      %1701 = vrot.lane.b32.xlu0 %v1698, 68
      %v1702 = vpop.permute.xlu0 %1701
      %1703 = vrot.lane.b32.xlu0 %v1699, 68
      %v1704 = vpop.permute.xlu0 %1703
      %1705 = vrot.lane.b32.xlu0 %v1700, 68
      %v1706 = vpop.permute.xlu0 %1705
      %vm1707 = vcmask 556032
      %v1708 = vsel %vm1707, %v1702, %v1704
      %v1709 = vsel %vm1707, %v1704, %v1706
      %v1714 = vsel %vm212, %v1687, 0
      %1716 = vmatpush.bf16.msra.mxu0 0
      %1717 = vmatpush.bf16.msra.mxu0 0
      %1718 = vmatpush.bf16.msra.mxu0 0
      %1719 = vmatpush.bf16.msra.mxu0 0
      %1720 = vmatpush.bf16.msra.mxu0 0
      %1721 = vmatpush.bf16.msra.mxu0 0
      %1722 = vmatpush.bf16.msra.mxu0 0
      %1723 = vmatpush.bf16.msra.mxu0 %v1708
      %1724 = vmatmul.bf16.gmra.mxu0 %v1714
      %v1725 = vpop.f32.mrf.mxu0
      %v1726 = vadd.f32 0.0, %v1725
      %v1727 = vpop.f32.mrf.mxu0
      %v1728 = vadd.f32 0.0, %v1727
      %1729 = vdwg.mxu0
      %1730 = vmatpush.bf16.msra.mxu0 0
      %1731 = vmatpush.bf16.msra.mxu0 0
      %1732 = vmatpush.bf16.msra.mxu0 0
      %1733 = vmatpush.bf16.msra.mxu0 0
      %1734 = vmatpush.bf16.msra.mxu0 0
      %1735 = vmatpush.bf16.msra.mxu0 0
      %1736 = vmatpush.bf16.msra.mxu0 0
      %1737 = vmatpush.bf16.msra.mxu0 %v1709
      %1738 = vmatmul.bf16.gmra.mxu0 %v1714
      %v1739 = vpop.f32.mrf.mxu0
      %v1740 = vadd.f32 0.0, %v1739
      %v1741 = vpop.f32.mrf.mxu0
      %v1742 = vadd.f32 0.0, %v1741
      %1743 = vdwg.mxu0
      %1744 = vmatpush.bf16.msra.mxu0 0
      %1745 = vmatpush.bf16.msra.mxu0 0
      %1746 = vmatpush.bf16.msra.mxu0 0
      %1747 = vmatpush.bf16.msra.mxu0 0
      %1748 = vmatpush.bf16.msra.mxu0 0
      %1749 = vmatpush.bf16.msra.mxu0 0
      %1750 = vmatpush.bf16.msra.mxu0 0
      %1751 = vmatpush.bf16.msra.mxu0 %v1706
      %1752 = vmatmul.bf16.gmra.mxu0 %v1714
      %v1753 = vpop.f32.mrf.mxu0
      %v1754 = vadd.f32 0.0, %v1753
      %v1755 = vpop.f32.mrf.mxu0
      %v1756 = vadd.f32 0.0, %v1755
      %1757 = vdwg.mxu0
      %v1758 = vadd.f32 %v1670, %v1726
      %v1759 = vadd.f32 %v1671, %v1740
      %v1760 = vadd.f32 %v1672, %v1754
      %v1761 = vadd.f32 %v1673, %v1728
      %v1762 = vadd.f32 %v1674, %v1742
      %v1763 = vadd.f32 %v1675, %v1756
      %1764 = vst [vmem:[%s170] sm:$0xff] %v1758
      %1765 = vst [vmem:[%s170 + $0x8] sm:$0xff] %v1759
      %1766 = vst.msk [vmem:[%s170 + $0x10] sm:$0xff] %vm174, %v1760
      %1767 = vst [vmem:[%s170 + $0x18] sm:$0xff] %v1761
      %1768 = vst [vmem:[%s170 + $0x20] sm:$0xff] %v1762
      %1769 = vst.msk [vmem:[%s170 + $0x28] sm:$0xff] %vm174, %v1763
      %v1770 = vld [vmem:[%s170] sm:$0xff]
      %v1771 = vld [vmem:[%s170 + $0x8] sm:$0xff]
      %v1772 = vld [vmem:[%s170 + $0x10] sm:$0xff]
      %v1773 = vld [vmem:[%s170 + $0x18] sm:$0xff]
      %v1774 = vld [vmem:[%s170 + $0x20] sm:$0xff]
      %v1775 = vld [vmem:[%s170 + $0x28] sm:$0xff]
      %s1776 = scalar_lea.vmem %s0, 128
      %v1777 = vld [vmem:[%s1776] sm:$0xf]
      %v1778 = vld [vmem:[%s1776 + $0x4] sm:$0xf]
      %v1779 = vld [vmem:[%s165] sm:$0xff]
      %v1780 = vld [vmem:[%s165 + $0x8] sm:$0xf]
      %v1781 = vld [vmem:[%s165 + $0x10] sm:$0xff]
      %v1782 = vld [vmem:[%s165 + $0x18] sm:$0xf]
      %v1785 = vunpack.c.l.b16 %v1777
      %v1786 = vunpack.c.l.b16 %v1778
      %v1787 = vpack.c.b16 %v1786, %v1785
      %v1792 = vunpack.c.l.b16 %v1779
      %v1793 = vunpack.c.h.b16 %v1779
      %v1794 = vunpack.c.l.b16 %v1780
      %v1795 = vunpack.c.l.b16 %v1781
      %v1796 = vunpack.c.h.b16 %v1781
      %v1797 = vunpack.c.l.b16 %v1782
      %v1798 = vpack.c.b16 %v1795, %v1792
      %v1799 = vpack.c.b16 %v1796, %v1793
      %v1800 = vpack.c.b16 %v1797, %v1794
      %1801 = vrot.lane.b32.xlu0 %v1798, 67
      %v1802 = vpop.permute.xlu0 %1801
      %1803 = vrot.lane.b32.xlu0 %v1799, 67
      %v1804 = vpop.permute.xlu0 %1803
      %1805 = vrot.lane.b32.xlu0 %v1800, 67
      %v1806 = vpop.permute.xlu0 %1805
      %vm1807 = vcmask 547840
      %v1808 = vsel %vm1807, %v1802, %v1804
      %v1809 = vsel %vm1807, %v1804, %v1806
      %v1814 = vsel %vm212, %v1787, 0
      %1816 = vmatpush.bf16.msra.mxu0 0
      %1817 = vmatpush.bf16.msra.mxu0 0
      %1818 = vmatpush.bf16.msra.mxu0 0
      %1819 = vmatpush.bf16.msra.mxu0 0
      %1820 = vmatpush.bf16.msra.mxu0 0
      %1821 = vmatpush.bf16.msra.mxu0 0
      %1822 = vmatpush.bf16.msra.mxu0 0
      %1823 = vmatpush.bf16.msra.mxu0 %v1808
      %1824 = vmatmul.bf16.gmra.mxu0 %v1814
      %v1825 = vpop.f32.mrf.mxu0
      %v1826 = vadd.f32 0.0, %v1825
      %v1827 = vpop.f32.mrf.mxu0
      %v1828 = vadd.f32 0.0, %v1827
      %1829 = vdwg.mxu0
      %1830 = vmatpush.bf16.msra.mxu0 0
      %1831 = vmatpush.bf16.msra.mxu0 0
      %1832 = vmatpush.bf16.msra.mxu0 0
      %1833 = vmatpush.bf16.msra.mxu0 0
      %1834 = vmatpush.bf16.msra.mxu0 0
      %1835 = vmatpush.bf16.msra.mxu0 0
      %1836 = vmatpush.bf16.msra.mxu0 0
      %1837 = vmatpush.bf16.msra.mxu0 %v1809
      %1838 = vmatmul.bf16.gmra.mxu0 %v1814
      %v1839 = vpop.f32.mrf.mxu0
      %v1840 = vadd.f32 0.0, %v1839
      %v1841 = vpop.f32.mrf.mxu0
      %v1842 = vadd.f32 0.0, %v1841
      %1843 = vdwg.mxu0
      %1844 = vmatpush.bf16.msra.mxu0 0
      %1845 = vmatpush.bf16.msra.mxu0 0
      %1846 = vmatpush.bf16.msra.mxu0 0
      %1847 = vmatpush.bf16.msra.mxu0 0
      %1848 = vmatpush.bf16.msra.mxu0 0
      %1849 = vmatpush.bf16.msra.mxu0 0
      %1850 = vmatpush.bf16.msra.mxu0 0
      %1851 = vmatpush.bf16.msra.mxu0 %v1806
      %1852 = vmatmul.bf16.gmra.mxu0 %v1814
      %v1853 = vpop.f32.mrf.mxu0
      %v1854 = vadd.f32 0.0, %v1853
      %v1855 = vpop.f32.mrf.mxu0
      %v1856 = vadd.f32 0.0, %v1855
      %1857 = vdwg.mxu0
      %v1858 = vadd.f32 %v1770, %v1826
      %v1859 = vadd.f32 %v1771, %v1840
      %v1860 = vadd.f32 %v1772, %v1854
      %v1861 = vadd.f32 %v1773, %v1828
      %v1862 = vadd.f32 %v1774, %v1842
      %v1863 = vadd.f32 %v1775, %v1856
      %1864 = vst [vmem:[%s170] sm:$0xff] %v1858
      %1865 = vst [vmem:[%s170 + $0x8] sm:$0xff] %v1859
      %1866 = vst.msk [vmem:[%s170 + $0x10] sm:$0xff] %vm174, %v1860
      %1867 = vst [vmem:[%s170 + $0x18] sm:$0xff] %v1861
      %1868 = vst [vmem:[%s170 + $0x20] sm:$0xff] %v1862
      %1869 = vst.msk [vmem:[%s170 + $0x28] sm:$0xff] %vm174, %v1863
      %v1870 = vld [vmem:[%s170] sm:$0xff]
      %v1871 = vld [vmem:[%s170 + $0x8] sm:$0xff]
      %v1872 = vld [vmem:[%s170 + $0x10] sm:$0xff]
      %v1873 = vld [vmem:[%s170 + $0x18] sm:$0xff]
      %v1874 = vld [vmem:[%s170 + $0x20] sm:$0xff]
      %v1875 = vld [vmem:[%s170 + $0x28] sm:$0xff]
      %s1876 = scalar_lea.vmem %s0, 136
      %v1877 = vld [vmem:[%s1876] sm:$0xf]
      %v1878 = vld [vmem:[%s1876 + $0x4] sm:$0xf]
      %v1879 = vld [vmem:[%s165] sm:$0xff]
      %v1880 = vld [vmem:[%s165 + $0x8] sm:$0xf]
      %v1881 = vld [vmem:[%s165 + $0x10] sm:$0xff]
      %v1882 = vld [vmem:[%s165 + $0x18] sm:$0xf]
      %v1885 = vunpack.c.l.b16 %v1877
      %v1886 = vunpack.c.l.b16 %v1878
      %v1887 = vpack.c.b16 %v1886, %v1885
      %v1892 = vunpack.c.l.b16 %v1879
      %v1893 = vunpack.c.h.b16 %v1879
      %v1894 = vunpack.c.l.b16 %v1880
      %v1895 = vunpack.c.l.b16 %v1881
      %v1896 = vunpack.c.h.b16 %v1881
      %v1897 = vunpack.c.l.b16 %v1882
      %v1898 = vpack.c.b16 %v1895, %v1892
      %v1899 = vpack.c.b16 %v1896, %v1893
      %v1900 = vpack.c.b16 %v1897, %v1894
      %1901 = vrot.lane.b32.xlu0 %v1898, 66
      %v1902 = vpop.permute.xlu0 %1901
      %1903 = vrot.lane.b32.xlu0 %v1899, 66
      %v1904 = vpop.permute.xlu0 %1903
      %1905 = vrot.lane.b32.xlu0 %v1900, 66
      %v1906 = vpop.permute.xlu0 %1905
      %vm1907 = vcmask 539648
      %v1908 = vsel %vm1907, %v1902, %v1904
      %v1909 = vsel %vm1907, %v1904, %v1906
      %v1914 = vsel %vm212, %v1887, 0
      %1916 = vmatpush.bf16.msra.mxu0 0
      %1917 = vmatpush.bf16.msra.mxu0 0
      %1918 = vmatpush.bf16.msra.mxu0 0
      %1919 = vmatpush.bf16.msra.mxu0 0
      %1920 = vmatpush.bf16.msra.mxu0 0
      %1921 = vmatpush.bf16.msra.mxu0 0
      %1922 = vmatpush.bf16.msra.mxu0 0
      %1923 = vmatpush.bf16.msra.mxu0 %v1908
      %1924 = vmatmul.bf16.gmra.mxu0 %v1914
      %v1925 = vpop.f32.mrf.mxu0
      %v1926 = vadd.f32 0.0, %v1925
      %v1927 = vpop.f32.mrf.mxu0
      %v1928 = vadd.f32 0.0, %v1927
      %1929 = vdwg.mxu0
      %1930 = vmatpush.bf16.msra.mxu0 0
      %1931 = vmatpush.bf16.msra.mxu0 0
      %1932 = vmatpush.bf16.msra.mxu0 0
      %1933 = vmatpush.bf16.msra.mxu0 0
      %1934 = vmatpush.bf16.msra.mxu0 0
      %1935 = vmatpush.bf16.msra.mxu0 0
      %1936 = vmatpush.bf16.msra.mxu0 0
      %1937 = vmatpush.bf16.msra.mxu0 %v1909
      %1938 = vmatmul.bf16.gmra.mxu0 %v1914
      %v1939 = vpop.f32.mrf.mxu0
      %v1940 = vadd.f32 0.0, %v1939
      %v1941 = vpop.f32.mrf.mxu0
      %v1942 = vadd.f32 0.0, %v1941
      %1943 = vdwg.mxu0
      %1944 = vmatpush.bf16.msra.mxu0 0
      %1945 = vmatpush.bf16.msra.mxu0 0
      %1946 = vmatpush.bf16.msra.mxu0 0
      %1947 = vmatpush.bf16.msra.mxu0 0
      %1948 = vmatpush.bf16.msra.mxu0 0
      %1949 = vmatpush.bf16.msra.mxu0 0
      %1950 = vmatpush.bf16.msra.mxu0 0
      %1951 = vmatpush.bf16.msra.mxu0 %v1906
      %1952 = vmatmul.bf16.gmra.mxu0 %v1914
      %v1953 = vpop.f32.mrf.mxu0
      %v1954 = vadd.f32 0.0, %v1953
      %v1955 = vpop.f32.mrf.mxu0
      %v1956 = vadd.f32 0.0, %v1955
      %1957 = vdwg.mxu0
      %v1958 = vadd.f32 %v1870, %v1926
      %v1959 = vadd.f32 %v1871, %v1940
      %v1960 = vadd.f32 %v1872, %v1954
      %v1961 = vadd.f32 %v1873, %v1928
      %v1962 = vadd.f32 %v1874, %v1942
      %v1963 = vadd.f32 %v1875, %v1956
      %1964 = vst [vmem:[%s170] sm:$0xff] %v1958
      %1965 = vst [vmem:[%s170 + $0x8] sm:$0xff] %v1959
      %1966 = vst.msk [vmem:[%s170 + $0x10] sm:$0xff] %vm174, %v1960
      %1967 = vst [vmem:[%s170 + $0x18] sm:$0xff] %v1961
      %1968 = vst [vmem:[%s170 + $0x20] sm:$0xff] %v1962
      %1969 = vst.msk [vmem:[%s170 + $0x28] sm:$0xff] %vm174, %v1963
      %v1970 = vld [vmem:[%s170] sm:$0xff]
      %v1971 = vld [vmem:[%s170 + $0x8] sm:$0xff]
      %v1972 = vld [vmem:[%s170 + $0x10] sm:$0xff]
      %v1973 = vld [vmem:[%s170 + $0x18] sm:$0xff]
      %v1974 = vld [vmem:[%s170 + $0x20] sm:$0xff]
      %v1975 = vld [vmem:[%s170 + $0x28] sm:$0xff]
      %s1976 = scalar_lea.vmem %s0, 144
      %v1977 = vld [vmem:[%s1976] sm:$0xf]
      %v1978 = vld [vmem:[%s1976 + $0x4] sm:$0xf]
      %v1979 = vld [vmem:[%s165] sm:$0xff]
      %v1980 = vld [vmem:[%s165 + $0x8] sm:$0xf]
      %v1981 = vld [vmem:[%s165 + $0x10] sm:$0xff]
      %v1982 = vld [vmem:[%s165 + $0x18] sm:$0xf]
      %v1985 = vunpack.c.l.b16 %v1977
      %v1986 = vunpack.c.l.b16 %v1978
      %v1987 = vpack.c.b16 %v1986, %v1985
      %v1992 = vunpack.c.l.b16 %v1979
      %v1993 = vunpack.c.h.b16 %v1979
      %v1994 = vunpack.c.l.b16 %v1980
      %v1995 = vunpack.c.l.b16 %v1981
      %v1996 = vunpack.c.h.b16 %v1981
      %v1997 = vunpack.c.l.b16 %v1982
      %v1998 = vpack.c.b16 %v1995, %v1992
      %v1999 = vpack.c.b16 %v1996, %v1993
      %v2000 = vpack.c.b16 %v1997, %v1994
      %2001 = vrot.lane.b32.xlu0 %v1998, 65
      %v2002 = vpop.permute.xlu0 %2001
      %2003 = vrot.lane.b32.xlu0 %v1999, 65
      %v2004 = vpop.permute.xlu0 %2003
      %2005 = vrot.lane.b32.xlu0 %v2000, 65
      %v2006 = vpop.permute.xlu0 %2005
      %vm2007 = vcmask 531456
      %v2008 = vsel %vm2007, %v2002, %v2004
      %v2009 = vsel %vm2007, %v2004, %v2006
      %v2014 = vsel %vm212, %v1987, 0
      %2016 = vmatpush.bf16.msra.mxu0 0
      %2017 = vmatpush.bf16.msra.mxu0 0
      %2018 = vmatpush.bf16.msra.mxu0 0
      %2019 = vmatpush.bf16.msra.mxu0 0
      %2020 = vmatpush.bf16.msra.mxu0 0
      %2021 = vmatpush.bf16.msra.mxu0 0
      %2022 = vmatpush.bf16.msra.mxu0 0
      %2023 = vmatpush.bf16.msra.mxu0 %v2008
      %2024 = vmatmul.bf16.gmra.mxu0 %v2014
      %v2025 = vpop.f32.mrf.mxu0
      %v2026 = vadd.f32 0.0, %v2025
      %v2027 = vpop.f32.mrf.mxu0
      %v2028 = vadd.f32 0.0, %v2027
      %2029 = vdwg.mxu0
      %2030 = vmatpush.bf16.msra.mxu0 0
      %2031 = vmatpush.bf16.msra.mxu0 0
      %2032 = vmatpush.bf16.msra.mxu0 0
      %2033 = vmatpush.bf16.msra.mxu0 0
      %2034 = vmatpush.bf16.msra.mxu0 0
      %2035 = vmatpush.bf16.msra.mxu0 0
      %2036 = vmatpush.bf16.msra.mxu0 0
      %2037 = vmatpush.bf16.msra.mxu0 %v2009
      %2038 = vmatmul.bf16.gmra.mxu0 %v2014
      %v2039 = vpop.f32.mrf.mxu0
      %v2040 = vadd.f32 0.0, %v2039
      %v2041 = vpop.f32.mrf.mxu0
      %v2042 = vadd.f32 0.0, %v2041
      %2043 = vdwg.mxu0
      %2044 = vmatpush.bf16.msra.mxu0 0
      %2045 = vmatpush.bf16.msra.mxu0 0
      %2046 = vmatpush.bf16.msra.mxu0 0
      %2047 = vmatpush.bf16.msra.mxu0 0
      %2048 = vmatpush.bf16.msra.mxu0 0
      %2049 = vmatpush.bf16.msra.mxu0 0
      %2050 = vmatpush.bf16.msra.mxu0 0
      %2051 = vmatpush.bf16.msra.mxu0 %v2006
      %2052 = vmatmul.bf16.gmra.mxu0 %v2014
      %v2053 = vpop.f32.mrf.mxu0
      %v2054 = vadd.f32 0.0, %v2053
      %v2055 = vpop.f32.mrf.mxu0
      %v2056 = vadd.f32 0.0, %v2055
      %2057 = vdwg.mxu0
      %v2058 = vadd.f32 %v1970, %v2026
      %v2059 = vadd.f32 %v1971, %v2040
      %v2060 = vadd.f32 %v1972, %v2054
      %v2061 = vadd.f32 %v1973, %v2028
      %v2062 = vadd.f32 %v1974, %v2042
      %v2063 = vadd.f32 %v1975, %v2056
      %2064 = vst [vmem:[%s170] sm:$0xff] %v2058
      %2065 = vst [vmem:[%s170 + $0x8] sm:$0xff] %v2059
      %2066 = vst.msk [vmem:[%s170 + $0x10] sm:$0xff] %vm174, %v2060
      %2067 = vst [vmem:[%s170 + $0x18] sm:$0xff] %v2061
      %2068 = vst [vmem:[%s170 + $0x20] sm:$0xff] %v2062
      %2069 = vst.msk [vmem:[%s170 + $0x28] sm:$0xff] %vm174, %v2063
      %v2070 = vld [vmem:[%s170] sm:$0xff]
      %v2071 = vld [vmem:[%s170 + $0x8] sm:$0xff]
      %v2072 = vld [vmem:[%s170 + $0x10] sm:$0xff]
      %v2073 = vld [vmem:[%s170 + $0x18] sm:$0xff]
      %v2074 = vld [vmem:[%s170 + $0x20] sm:$0xff]
      %v2075 = vld [vmem:[%s170 + $0x28] sm:$0xff]
      %s2076 = scalar_lea.vmem %s0, 152
      %v2077 = vld [vmem:[%s2076] sm:$0xf]
      %v2078 = vld [vmem:[%s2076 + $0x4] sm:$0xf]
      %v2079 = vld [vmem:[%s165] sm:$0xff]
      %v2080 = vld [vmem:[%s165 + $0x8] sm:$0xf]
      %v2081 = vld [vmem:[%s165 + $0x10] sm:$0xff]
      %v2082 = vld [vmem:[%s165 + $0x18] sm:$0xf]
      %v2085 = vunpack.c.l.b16 %v2077
      %v2086 = vunpack.c.l.b16 %v2078
      %v2087 = vpack.c.b16 %v2086, %v2085
      %v2092 = vunpack.c.l.b16 %v2079
      %v2093 = vunpack.c.h.b16 %v2079
      %v2094 = vunpack.c.l.b16 %v2080
      %v2095 = vunpack.c.l.b16 %v2081
      %v2096 = vunpack.c.h.b16 %v2081
      %v2097 = vunpack.c.l.b16 %v2082
      %v2098 = vpack.c.b16 %v2095, %v2092
      %v2099 = vpack.c.b16 %v2096, %v2093
      %v2100 = vpack.c.b16 %v2097, %v2094
      %2101 = vrot.lane.b32.xlu0 %v2098, 64
      %v2102 = vpop.permute.xlu0 %2101
      %2103 = vrot.lane.b32.xlu0 %v2099, 64
      %v2104 = vpop.permute.xlu0 %2103
      %2105 = vrot.lane.b32.xlu0 %v2100, 64
      %v2106 = vpop.permute.xlu0 %2105
      %vm2107 = vcmask 523264
      %v2108 = vsel %vm2107, %v2102, %v2104
      %v2109 = vsel %vm2107, %v2104, %v2106
      %v2114 = vsel %vm212, %v2087, 0
      %2116 = vmatpush.bf16.msra.mxu0 0
      %2117 = vmatpush.bf16.msra.mxu0 0
      %2118 = vmatpush.bf16.msra.mxu0 0
      %2119 = vmatpush.bf16.msra.mxu0 0
      %2120 = vmatpush.bf16.msra.mxu0 0
      %2121 = vmatpush.bf16.msra.mxu0 0
      %2122 = vmatpush.bf16.msra.mxu0 0
      %2123 = vmatpush.bf16.msra.mxu0 %v2108
      %2124 = vmatmul.bf16.gmra.mxu0 %v2114
      %v2125 = vpop.f32.mrf.mxu0
      %v2126 = vadd.f32 0.0, %v2125
      %v2127 = vpop.f32.mrf.mxu0
      %v2128 = vadd.f32 0.0, %v2127
      %2129 = vdwg.mxu0
      %2130 = vmatpush.bf16.msra.mxu0 0
      %2131 = vmatpush.bf16.msra.mxu0 0
      %2132 = vmatpush.bf16.msra.mxu0 0
      %2133 = vmatpush.bf16.msra.mxu0 0
      %2134 = vmatpush.bf16.msra.mxu0 0
      %2135 = vmatpush.bf16.msra.mxu0 0
      %2136 = vmatpush.bf16.msra.mxu0 0
      %2137 = vmatpush.bf16.msra.mxu0 %v2109
      %2138 = vmatmul.bf16.gmra.mxu0 %v2114
      %v2139 = vpop.f32.mrf.mxu0
      %v2140 = vadd.f32 0.0, %v2139
      %v2141 = vpop.f32.mrf.mxu0
      %v2142 = vadd.f32 0.0, %v2141
      %2143 = vdwg.mxu0
      %2144 = vmatpush.bf16.msra.mxu0 0
      %2145 = vmatpush.bf16.msra.mxu0 0
      %2146 = vmatpush.bf16.msra.mxu0 0
      %2147 = vmatpush.bf16.msra.mxu0 0
      %2148 = vmatpush.bf16.msra.mxu0 0
      %2149 = vmatpush.bf16.msra.mxu0 0
      %2150 = vmatpush.bf16.msra.mxu0 0
      %2151 = vmatpush.bf16.msra.mxu0 %v2106
      %2152 = vmatmul.bf16.gmra.mxu0 %v2114
      %v2153 = vpop.f32.mrf.mxu0
      %v2154 = vadd.f32 0.0, %v2153
      %v2155 = vpop.f32.mrf.mxu0
      %v2156 = vadd.f32 0.0, %v2155
      %2157 = vdwg.mxu0
      %v2158 = vadd.f32 %v2070, %v2126
      %v2159 = vadd.f32 %v2071, %v2140
      %v2160 = vadd.f32 %v2072, %v2154
      %v2161 = vadd.f32 %v2073, %v2128
      %v2162 = vadd.f32 %v2074, %v2142
      %v2163 = vadd.f32 %v2075, %v2156
      %2164 = vst [vmem:[%s170] sm:$0xff] %v2158
      %2165 = vst [vmem:[%s170 + $0x8] sm:$0xff] %v2159
      %2166 = vst.msk [vmem:[%s170 + $0x10] sm:$0xff] %vm174, %v2160
      %2167 = vst [vmem:[%s170 + $0x18] sm:$0xff] %v2161
      %2168 = vst [vmem:[%s170 + $0x20] sm:$0xff] %v2162
      %2169 = vst.msk [vmem:[%s170 + $0x28] sm:$0xff] %vm174, %v2163
      %v2170 = vld [vmem:[%s170] sm:$0xff]
      %v2171 = vld [vmem:[%s170 + $0x8] sm:$0xff]
      %v2172 = vld [vmem:[%s170 + $0x10] sm:$0xff]
      %v2173 = vld [vmem:[%s170 + $0x18] sm:$0xff]
      %v2174 = vld [vmem:[%s170 + $0x20] sm:$0xff]
      %v2175 = vld [vmem:[%s170 + $0x28] sm:$0xff]
      %s2176 = scalar_lea.vmem %s0, 160
      %v2177 = vld [vmem:[%s2176] sm:$0xf]
      %v2178 = vld [vmem:[%s2176 + $0x4] sm:$0xf]
      %v2179 = vld [vmem:[%s165] sm:$0xff]
      %v2180 = vld [vmem:[%s165 + $0x8] sm:$0xff]
      %v2181 = vld [vmem:[%s165 + $0x10] sm:$0xff]
      %v2182 = vld [vmem:[%s165 + $0x18] sm:$0xff]
      %v2185 = vunpack.c.l.b16 %v2177
      %v2186 = vunpack.c.l.b16 %v2178
      %v2187 = vpack.c.b16 %v2186, %v2185
      %v2192 = vunpack.c.l.b16 %v2179
      %v2193 = vunpack.c.h.b16 %v2179
      %v2194 = vunpack.c.l.b16 %v2180
      %v2195 = vunpack.c.h.b16 %v2180
      %v2196 = vunpack.c.l.b16 %v2181
      %v2197 = vunpack.c.h.b16 %v2181
      %v2198 = vunpack.c.l.b16 %v2182
      %v2199 = vunpack.c.h.b16 %v2182
      %v2200 = vpack.c.b16 %v2196, %v2192
      %v2201 = vpack.c.b16 %v2197, %v2193
      %v2202 = vpack.c.b16 %v2198, %v2194
      %v2203 = vpack.c.b16 %v2199, %v2195
      %2204 = vrot.lane.b32.xlu0 %v2200, 48
      %v2205 = vpop.permute.xlu0 %2204
      %2206 = vrot.lane.b32.xlu0 %v2201, 48
      %v2207 = vpop.permute.xlu0 %2206
      %2208 = vrot.lane.b32.xlu0 %v2202, 48
      %v2209 = vpop.permute.xlu0 %2208
      %2210 = vrot.lane.b32.xlu0 %v2203, 48
      %v2211 = vpop.permute.xlu0 %2210
      %vm2212 = vcmask 392192
      %v2213 = vsel %vm2212, %v2205, %v2207
      %v2214 = vsel %vm2212, %v2207, %v2209
      %v2215 = vsel %vm2212, %v2209, %v2211
      %v2220 = vsel %vm212, %v2187, 0
      %2222 = vmatpush.bf16.msra.mxu0 0
      %2223 = vmatpush.bf16.msra.mxu0 0
      %2224 = vmatpush.bf16.msra.mxu0 0
      %2225 = vmatpush.bf16.msra.mxu0 0
      %2226 = vmatpush.bf16.msra.mxu0 0
      %2227 = vmatpush.bf16.msra.mxu0 0
      %2228 = vmatpush.bf16.msra.mxu0 0
      %2229 = vmatpush.bf16.msra.mxu0 %v2213
      %2230 = vmatmul.bf16.gmra.mxu0 %v2220
      %v2231 = vpop.f32.mrf.mxu0
      %v2232 = vadd.f32 0.0, %v2231
      %v2233 = vpop.f32.mrf.mxu0
      %v2234 = vadd.f32 0.0, %v2233
      %2235 = vdwg.mxu0
      %2236 = vmatpush.bf16.msra.mxu0 0
      %2237 = vmatpush.bf16.msra.mxu0 0
      %2238 = vmatpush.bf16.msra.mxu0 0
      %2239 = vmatpush.bf16.msra.mxu0 0
      %2240 = vmatpush.bf16.msra.mxu0 0
      %2241 = vmatpush.bf16.msra.mxu0 0
      %2242 = vmatpush.bf16.msra.mxu0 0
      %2243 = vmatpush.bf16.msra.mxu0 %v2214
      %2244 = vmatmul.bf16.gmra.mxu0 %v2220
      %v2245 = vpop.f32.mrf.mxu0
      %v2246 = vadd.f32 0.0, %v2245
      %v2247 = vpop.f32.mrf.mxu0
      %v2248 = vadd.f32 0.0, %v2247
      %2249 = vdwg.mxu0
      %2250 = vmatpush.bf16.msra.mxu0 0
      %2251 = vmatpush.bf16.msra.mxu0 0
      %2252 = vmatpush.bf16.msra.mxu0 0
      %2253 = vmatpush.bf16.msra.mxu0 0
      %2254 = vmatpush.bf16.msra.mxu0 0
      %2255 = vmatpush.bf16.msra.mxu0 0
      %2256 = vmatpush.bf16.msra.mxu0 0
      %2257 = vmatpush.bf16.msra.mxu0 %v2215
      %2258 = vmatmul.bf16.gmra.mxu0 %v2220
      %v2259 = vpop.f32.mrf.mxu0
      %v2260 = vadd.f32 0.0, %v2259
      %v2261 = vpop.f32.mrf.mxu0
      %v2262 = vadd.f32 0.0, %v2261
      %2263 = vdwg.mxu0
      %v2264 = vadd.f32 %v2170, %v2232
      %v2265 = vadd.f32 %v2171, %v2246
      %v2266 = vadd.f32 %v2172, %v2260
      %v2267 = vadd.f32 %v2173, %v2234
      %v2268 = vadd.f32 %v2174, %v2248
      %v2269 = vadd.f32 %v2175, %v2262
      %2270 = vst [vmem:[%s170] sm:$0xff] %v2264
      %2271 = vst [vmem:[%s170 + $0x8] sm:$0xff] %v2265
      %2272 = vst.msk [vmem:[%s170 + $0x10] sm:$0xff] %vm174, %v2266
      %2273 = vst [vmem:[%s170 + $0x18] sm:$0xff] %v2267
      %2274 = vst [vmem:[%s170 + $0x20] sm:$0xff] %v2268
      %2275 = vst.msk [vmem:[%s170 + $0x28] sm:$0xff] %vm174, %v2269
      %v2276 = vld [vmem:[%s170] sm:$0xff]
      %v2277 = vld [vmem:[%s170 + $0x8] sm:$0xff]
      %v2278 = vld [vmem:[%s170 + $0x10] sm:$0xff]
      %v2279 = vld [vmem:[%s170 + $0x18] sm:$0xff]
      %v2280 = vld [vmem:[%s170 + $0x20] sm:$0xff]
      %v2281 = vld [vmem:[%s170 + $0x28] sm:$0xff]
      %s2282 = scalar_lea.vmem %s0, 168
      %v2283 = vld [vmem:[%s2282] sm:$0xf]
      %v2284 = vld [vmem:[%s2282 + $0x4] sm:$0xf]
      %v2285 = vld [vmem:[%s165] sm:$0xff]
      %v2286 = vld [vmem:[%s165 + $0x8] sm:$0xff]
      %v2287 = vld [vmem:[%s165 + $0x10] sm:$0xff]
      %v2288 = vld [vmem:[%s165 + $0x18] sm:$0xff]
      %v2291 = vunpack.c.l.b16 %v2283
      %v2292 = vunpack.c.l.b16 %v2284
      %v2293 = vpack.c.b16 %v2292, %v2291
      %v2298 = vunpack.c.l.b16 %v2285
      %v2299 = vunpack.c.h.b16 %v2285
      %v2300 = vunpack.c.l.b16 %v2286
      %v2301 = vunpack.c.h.b16 %v2286
      %v2302 = vunpack.c.l.b16 %v2287
      %v2303 = vunpack.c.h.b16 %v2287
      %v2304 = vunpack.c.l.b16 %v2288
      %v2305 = vunpack.c.h.b16 %v2288
      %v2306 = vpack.c.b16 %v2302, %v2298
      %v2307 = vpack.c.b16 %v2303, %v2299
      %v2308 = vpack.c.b16 %v2304, %v2300
      %v2309 = vpack.c.b16 %v2305, %v2301
      %2310 = vrot.lane.b32.xlu0 %v2306, 47
      %v2311 = vpop.permute.xlu0 %2310
      %2312 = vrot.lane.b32.xlu0 %v2307, 47
      %v2313 = vpop.permute.xlu0 %2312
      %2314 = vrot.lane.b32.xlu0 %v2308, 47
      %v2315 = vpop.permute.xlu0 %2314
      %2316 = vrot.lane.b32.xlu0 %v2309, 47
      %v2317 = vpop.permute.xlu0 %2316
      %vm2318 = vcmask 384000
      %v2319 = vsel %vm2318, %v2311, %v2313
      %v2320 = vsel %vm2318, %v2313, %v2315
      %v2321 = vsel %vm2318, %v2315, %v2317
      %v2326 = vsel %vm212, %v2293, 0
      %2328 = vmatpush.bf16.msra.mxu0 0
      %2329 = vmatpush.bf16.msra.mxu0 0
      %2330 = vmatpush.bf16.msra.mxu0 0
      %2331 = vmatpush.bf16.msra.mxu0 0
      %2332 = vmatpush.bf16.msra.mxu0 0
      %2333 = vmatpush.bf16.msra.mxu0 0
      %2334 = vmatpush.bf16.msra.mxu0 0
      %2335 = vmatpush.bf16.msra.mxu0 %v2319
      %2336 = vmatmul.bf16.gmra.mxu0 %v2326
      %v2337 = vpop.f32.mrf.mxu0
      %v2338 = vadd.f32 0.0, %v2337
      %v2339 = vpop.f32.mrf.mxu0
      %v2340 = vadd.f32 0.0, %v2339
      %2341 = vdwg.mxu0
      %2342 = vmatpush.bf16.msra.mxu0 0
      %2343 = vmatpush.bf16.msra.mxu0 0
      %2344 = vmatpush.bf16.msra.mxu0 0
      %2345 = vmatpush.bf16.msra.mxu0 0
      %2346 = vmatpush.bf16.msra.mxu0 0
      %2347 = vmatpush.bf16.msra.mxu0 0
      %2348 = vmatpush.bf16.msra.mxu0 0
      %2349 = vmatpush.bf16.msra.mxu0 %v2320
      %2350 = vmatmul.bf16.gmra.mxu0 %v2326
      %v2351 = vpop.f32.mrf.mxu0
      %v2352 = vadd.f32 0.0, %v2351
      %v2353 = vpop.f32.mrf.mxu0
      %v2354 = vadd.f32 0.0, %v2353
      %2355 = vdwg.mxu0
      %2356 = vmatpush.bf16.msra.mxu0 0
      %2357 = vmatpush.bf16.msra.mxu0 0
      %2358 = vmatpush.bf16.msra.mxu0 0
      %2359 = vmatpush.bf16.msra.mxu0 0
      %2360 = vmatpush.bf16.msra.mxu0 0
      %2361 = vmatpush.bf16.msra.mxu0 0
      %2362 = vmatpush.bf16.msra.mxu0 0
      %2363 = vmatpush.bf16.msra.mxu0 %v2321
      %2364 = vmatmul.bf16.gmra.mxu0 %v2326
      %v2365 = vpop.f32.mrf.mxu0
      %v2366 = vadd.f32 0.0, %v2365
      %v2367 = vpop.f32.mrf.mxu0
      %v2368 = vadd.f32 0.0, %v2367
      %2369 = vdwg.mxu0
      %v2370 = vadd.f32 %v2276, %v2338
      %v2371 = vadd.f32 %v2277, %v2352
      %v2372 = vadd.f32 %v2278, %v2366
      %v2373 = vadd.f32 %v2279, %v2340
      %v2374 = vadd.f32 %v2280, %v2354
      %v2375 = vadd.f32 %v2281, %v2368
      %2376 = vst [vmem:[%s170] sm:$0xff] %v2370
      %2377 = vst [vmem:[%s170 + $0x8] sm:$0xff] %v2371
      %2378 = vst.msk [vmem:[%s170 + $0x10] sm:$0xff] %vm174, %v2372
      %2379 = vst [vmem:[%s170 + $0x18] sm:$0xff] %v2373
      %2380 = vst [vmem:[%s170 + $0x20] sm:$0xff] %v2374
      %2381 = vst.msk [vmem:[%s170 + $0x28] sm:$0xff] %vm174, %v2375
      %v2382 = vld [vmem:[%s170] sm:$0xff]
      %v2383 = vld [vmem:[%s170 + $0x8] sm:$0xff]
      %v2384 = vld [vmem:[%s170 + $0x10] sm:$0xff]
      %v2385 = vld [vmem:[%s170 + $0x18] sm:$0xff]
      %v2386 = vld [vmem:[%s170 + $0x20] sm:$0xff]
      %v2387 = vld [vmem:[%s170 + $0x28] sm:$0xff]
      %s2388 = scalar_lea.vmem %s0, 176
      %v2389 = vld [vmem:[%s2388] sm:$0xf]
      %v2390 = vld [vmem:[%s2388 + $0x4] sm:$0xf]
      %v2391 = vld [vmem:[%s165] sm:$0xff]
      %v2392 = vld [vmem:[%s165 + $0x8] sm:$0xff]
      %v2393 = vld [vmem:[%s165 + $0x10] sm:$0xff]
      %v2394 = vld [vmem:[%s165 + $0x18] sm:$0xff]
      %v2397 = vunpack.c.l.b16 %v2389
      %v2398 = vunpack.c.l.b16 %v2390
      %v2399 = vpack.c.b16 %v2398, %v2397
      %v2404 = vunpack.c.l.b16 %v2391
      %v2405 = vunpack.c.h.b16 %v2391
      %v2406 = vunpack.c.l.b16 %v2392
      %v2407 = vunpack.c.h.b16 %v2392
      %v2408 = vunpack.c.l.b16 %v2393
      %v2409 = vunpack.c.h.b16 %v2393
      %v2410 = vunpack.c.l.b16 %v2394
      %v2411 = vunpack.c.h.b16 %v2394
      %v2412 = vpack.c.b16 %v2408, %v2404
      %v2413 = vpack.c.b16 %v2409, %v2405
      %v2414 = vpack.c.b16 %v2410, %v2406
      %v2415 = vpack.c.b16 %v2411, %v2407
      %2416 = vrot.lane.b32.xlu0 %v2412, 46
      %v2417 = vpop.permute.xlu0 %2416
      %2418 = vrot.lane.b32.xlu0 %v2413, 46
      %v2419 = vpop.permute.xlu0 %2418
      %2420 = vrot.lane.b32.xlu0 %v2414, 46
      %v2421 = vpop.permute.xlu0 %2420
      %2422 = vrot.lane.b32.xlu0 %v2415, 46
      %v2423 = vpop.permute.xlu0 %2422
      %vm2424 = vcmask 375808
      %v2425 = vsel %vm2424, %v2417, %v2419
      %v2426 = vsel %vm2424, %v2419, %v2421
      %v2427 = vsel %vm2424, %v2421, %v2423
      %v2432 = vsel %vm212, %v2399, 0
      %2434 = vmatpush.bf16.msra.mxu0 0
      %2435 = vmatpush.bf16.msra.mxu0 0
      %2436 = vmatpush.bf16.msra.mxu0 0
      %2437 = vmatpush.bf16.msra.mxu0 0
      %2438 = vmatpush.bf16.msra.mxu0 0
      %2439 = vmatpush.bf16.msra.mxu0 0
      %2440 = vmatpush.bf16.msra.mxu0 0
      %2441 = vmatpush.bf16.msra.mxu0 %v2425
      %2442 = vmatmul.bf16.gmra.mxu0 %v2432
      %v2443 = vpop.f32.mrf.mxu0
      %v2444 = vadd.f32 0.0, %v2443
      %v2445 = vpop.f32.mrf.mxu0
      %v2446 = vadd.f32 0.0, %v2445
      %2447 = vdwg.mxu0
      %2448 = vmatpush.bf16.msra.mxu0 0
      %2449 = vmatpush.bf16.msra.mxu0 0
      %2450 = vmatpush.bf16.msra.mxu0 0
      %2451 = vmatpush.bf16.msra.mxu0 0
      %2452 = vmatpush.bf16.msra.mxu0 0
      %2453 = vmatpush.bf16.msra.mxu0 0
      %2454 = vmatpush.bf16.msra.mxu0 0
      %2455 = vmatpush.bf16.msra.mxu0 %v2426
      %2456 = vmatmul.bf16.gmra.mxu0 %v2432
      %v2457 = vpop.f32.mrf.mxu0
      %v2458 = vadd.f32 0.0, %v2457
      %v2459 = vpop.f32.mrf.mxu0
      %v2460 = vadd.f32 0.0, %v2459
      %2461 = vdwg.mxu0
      %2462 = vmatpush.bf16.msra.mxu0 0
      %2463 = vmatpush.bf16.msra.mxu0 0
      %2464 = vmatpush.bf16.msra.mxu0 0
      %2465 = vmatpush.bf16.msra.mxu0 0
      %2466 = vmatpush.bf16.msra.mxu0 0
      %2467 = vmatpush.bf16.msra.mxu0 0
      %2468 = vmatpush.bf16.msra.mxu0 0
      %2469 = vmatpush.bf16.msra.mxu0 %v2427
      %2470 = vmatmul.bf16.gmra.mxu0 %v2432
      %v2471 = vpop.f32.mrf.mxu0
      %v2472 = vadd.f32 0.0, %v2471
      %v2473 = vpop.f32.mrf.mxu0
      %v2474 = vadd.f32 0.0, %v2473
      %2475 = vdwg.mxu0
      %v2476 = vadd.f32 %v2382, %v2444
      %v2477 = vadd.f32 %v2383, %v2458
      %v2478 = vadd.f32 %v2384, %v2472
      %v2479 = vadd.f32 %v2385, %v2446
      %v2480 = vadd.f32 %v2386, %v2460
      %v2481 = vadd.f32 %v2387, %v2474
      %2482 = vst [vmem:[%s170] sm:$0xff] %v2476
      %2483 = vst [vmem:[%s170 + $0x8] sm:$0xff] %v2477
      %2484 = vst.msk [vmem:[%s170 + $0x10] sm:$0xff] %vm174, %v2478
      %2485 = vst [vmem:[%s170 + $0x18] sm:$0xff] %v2479
      %2486 = vst [vmem:[%s170 + $0x20] sm:$0xff] %v2480
      %2487 = vst.msk [vmem:[%s170 + $0x28] sm:$0xff] %vm174, %v2481
      %v2488 = vld [vmem:[%s170] sm:$0xff]
      %v2489 = vld [vmem:[%s170 + $0x8] sm:$0xff]
      %v2490 = vld [vmem:[%s170 + $0x10] sm:$0xff]
      %v2491 = vld [vmem:[%s170 + $0x18] sm:$0xff]
      %v2492 = vld [vmem:[%s170 + $0x20] sm:$0xff]
      %v2493 = vld [vmem:[%s170 + $0x28] sm:$0xff]
      %s2494 = scalar_lea.vmem %s0, 184
      %v2495 = vld [vmem:[%s2494] sm:$0xf]
      %v2496 = vld [vmem:[%s2494 + $0x4] sm:$0xf]
      %v2497 = vld [vmem:[%s165] sm:$0xff]
      %v2498 = vld [vmem:[%s165 + $0x8] sm:$0xff]
      %v2499 = vld [vmem:[%s165 + $0x10] sm:$0xff]
      %v2500 = vld [vmem:[%s165 + $0x18] sm:$0xff]
      %v2503 = vunpack.c.l.b16 %v2495
      %v2504 = vunpack.c.l.b16 %v2496
      %v2505 = vpack.c.b16 %v2504, %v2503
      %v2510 = vunpack.c.l.b16 %v2497
      %v2511 = vunpack.c.h.b16 %v2497
      %v2512 = vunpack.c.l.b16 %v2498
      %v2513 = vunpack.c.h.b16 %v2498
      %v2514 = vunpack.c.l.b16 %v2499
      %v2515 = vunpack.c.h.b16 %v2499
      %v2516 = vunpack.c.l.b16 %v2500
      %v2517 = vunpack.c.h.b16 %v2500
      %v2518 = vpack.c.b16 %v2514, %v2510
      %v2519 = vpack.c.b16 %v2515, %v2511
      %v2520 = vpack.c.b16 %v2516, %v2512
      %v2521 = vpack.c.b16 %v2517, %v2513
      %2522 = vrot.lane.b32.xlu0 %v2518, 45
      %v2523 = vpop.permute.xlu0 %2522
      %2524 = vrot.lane.b32.xlu0 %v2519, 45
      %v2525 = vpop.permute.xlu0 %2524
      %2526 = vrot.lane.b32.xlu0 %v2520, 45
      %v2527 = vpop.permute.xlu0 %2526
      %2528 = vrot.lane.b32.xlu0 %v2521, 45
      %v2529 = vpop.permute.xlu0 %2528
      %vm2530 = vcmask 367616
      %v2531 = vsel %vm2530, %v2523, %v2525
      %v2532 = vsel %vm2530, %v2525, %v2527
      %v2533 = vsel %vm2530, %v2527, %v2529
      %v2538 = vsel %vm212, %v2505, 0
      %2540 = vmatpush.bf16.msra.mxu0 0
      %2541 = vmatpush.bf16.msra.mxu0 0
      %2542 = vmatpush.bf16.msra.mxu0 0
      %2543 = vmatpush.bf16.msra.mxu0 0
      %2544 = vmatpush.bf16.msra.mxu0 0
      %2545 = vmatpush.bf16.msra.mxu0 0
      %2546 = vmatpush.bf16.msra.mxu0 0
      %2547 = vmatpush.bf16.msra.mxu0 %v2531
      %2548 = vmatmul.bf16.gmra.mxu0 %v2538
      %v2549 = vpop.f32.mrf.mxu0
      %v2550 = vadd.f32 0.0, %v2549
      %v2551 = vpop.f32.mrf.mxu0
      %v2552 = vadd.f32 0.0, %v2551
      %2553 = vdwg.mxu0
      %2554 = vmatpush.bf16.msra.mxu0 0
      %2555 = vmatpush.bf16.msra.mxu0 0
      %2556 = vmatpush.bf16.msra.mxu0 0
      %2557 = vmatpush.bf16.msra.mxu0 0
      %2558 = vmatpush.bf16.msra.mxu0 0
      %2559 = vmatpush.bf16.msra.mxu0 0
      %2560 = vmatpush.bf16.msra.mxu0 0
      %2561 = vmatpush.bf16.msra.mxu0 %v2532
      %2562 = vmatmul.bf16.gmra.mxu0 %v2538
      %v2563 = vpop.f32.mrf.mxu0
      %v2564 = vadd.f32 0.0, %v2563
      %v2565 = vpop.f32.mrf.mxu0
      %v2566 = vadd.f32 0.0, %v2565
      %2567 = vdwg.mxu0
      %2568 = vmatpush.bf16.msra.mxu0 0
      %2569 = vmatpush.bf16.msra.mxu0 0
      %2570 = vmatpush.bf16.msra.mxu0 0
      %2571 = vmatpush.bf16.msra.mxu0 0
      %2572 = vmatpush.bf16.msra.mxu0 0
      %2573 = vmatpush.bf16.msra.mxu0 0
      %2574 = vmatpush.bf16.msra.mxu0 0
      %2575 = vmatpush.bf16.msra.mxu0 %v2533
      %2576 = vmatmul.bf16.gmra.mxu0 %v2538
      %v2577 = vpop.f32.mrf.mxu0
      %v2578 = vadd.f32 0.0, %v2577
      %v2579 = vpop.f32.mrf.mxu0
      %v2580 = vadd.f32 0.0, %v2579
      %2581 = vdwg.mxu0
      %v2582 = vadd.f32 %v2488, %v2550
      %v2583 = vadd.f32 %v2489, %v2564
      %v2584 = vadd.f32 %v2490, %v2578
      %v2585 = vadd.f32 %v2491, %v2552
      %v2586 = vadd.f32 %v2492, %v2566
      %v2587 = vadd.f32 %v2493, %v2580
      %2588 = vst [vmem:[%s170] sm:$0xff] %v2582
      %2589 = vst [vmem:[%s170 + $0x8] sm:$0xff] %v2583
      %2590 = vst.msk [vmem:[%s170 + $0x10] sm:$0xff] %vm174, %v2584
      %2591 = vst [vmem:[%s170 + $0x18] sm:$0xff] %v2585
      %2592 = vst [vmem:[%s170 + $0x20] sm:$0xff] %v2586
      %2593 = vst.msk [vmem:[%s170 + $0x28] sm:$0xff] %vm174, %v2587
      %v2594 = vld [vmem:[%s170] sm:$0xff]
      %v2595 = vld [vmem:[%s170 + $0x8] sm:$0xff]
      %v2596 = vld [vmem:[%s170 + $0x10] sm:$0xff]
      %v2597 = vld [vmem:[%s170 + $0x18] sm:$0xff]
      %v2598 = vld [vmem:[%s170 + $0x20] sm:$0xff]
      %v2599 = vld [vmem:[%s170 + $0x28] sm:$0xff]
      %s2600 = scalar_lea.vmem %s0, 192
      %v2601 = vld [vmem:[%s2600] sm:$0xf]
      %v2602 = vld [vmem:[%s2600 + $0x4] sm:$0xf]
      %v2603 = vld [vmem:[%s165] sm:$0xff]
      %v2604 = vld [vmem:[%s165 + $0x8] sm:$0xff]
      %v2605 = vld [vmem:[%s165 + $0x10] sm:$0xff]
      %v2606 = vld [vmem:[%s165 + $0x18] sm:$0xff]
      %v2609 = vunpack.c.l.b16 %v2601
      %v2610 = vunpack.c.l.b16 %v2602
      %v2611 = vpack.c.b16 %v2610, %v2609
      %v2616 = vunpack.c.l.b16 %v2603
      %v2617 = vunpack.c.h.b16 %v2603
      %v2618 = vunpack.c.l.b16 %v2604
      %v2619 = vunpack.c.h.b16 %v2604
      %v2620 = vunpack.c.l.b16 %v2605
      %v2621 = vunpack.c.h.b16 %v2605
      %v2622 = vunpack.c.l.b16 %v2606
      %v2623 = vunpack.c.h.b16 %v2606
      %v2624 = vpack.c.b16 %v2620, %v2616
      %v2625 = vpack.c.b16 %v2621, %v2617
      %v2626 = vpack.c.b16 %v2622, %v2618
      %v2627 = vpack.c.b16 %v2623, %v2619
      %2628 = vrot.lane.b32.xlu0 %v2624, 44
      %v2629 = vpop.permute.xlu0 %2628
      %2630 = vrot.lane.b32.xlu0 %v2625, 44
      %v2631 = vpop.permute.xlu0 %2630
      %2632 = vrot.lane.b32.xlu0 %v2626, 44
      %v2633 = vpop.permute.xlu0 %2632
      %2634 = vrot.lane.b32.xlu0 %v2627, 44
      %v2635 = vpop.permute.xlu0 %2634
      %vm2636 = vcmask 359424
      %v2637 = vsel %vm2636, %v2629, %v2631
      %v2638 = vsel %vm2636, %v2631, %v2633
      %v2639 = vsel %vm2636, %v2633, %v2635
      %v2644 = vsel %vm212, %v2611, 0
      %2646 = vmatpush.bf16.msra.mxu0 0
      %2647 = vmatpush.bf16.msra.mxu0 0
      %2648 = vmatpush.bf16.msra.mxu0 0
      %2649 = vmatpush.bf16.msra.mxu0 0
      %2650 = vmatpush.bf16.msra.mxu0 0
      %2651 = vmatpush.bf16.msra.mxu0 0
      %2652 = vmatpush.bf16.msra.mxu0 0
      %2653 = vmatpush.bf16.msra.mxu0 %v2637
      %2654 = vmatmul.bf16.gmra.mxu0 %v2644
      %v2655 = vpop.f32.mrf.mxu0
      %v2656 = vadd.f32 0.0, %v2655
      %v2657 = vpop.f32.mrf.mxu0
      %v2658 = vadd.f32 0.0, %v2657
      %2659 = vdwg.mxu0
      %2660 = vmatpush.bf16.msra.mxu0 0
      %2661 = vmatpush.bf16.msra.mxu0 0
      %2662 = vmatpush.bf16.msra.mxu0 0
      %2663 = vmatpush.bf16.msra.mxu0 0
      %2664 = vmatpush.bf16.msra.mxu0 0
      %2665 = vmatpush.bf16.msra.mxu0 0
      %2666 = vmatpush.bf16.msra.mxu0 0
      %2667 = vmatpush.bf16.msra.mxu0 %v2638
      %2668 = vmatmul.bf16.gmra.mxu0 %v2644
      %v2669 = vpop.f32.mrf.mxu0
      %v2670 = vadd.f32 0.0, %v2669
      %v2671 = vpop.f32.mrf.mxu0
      %v2672 = vadd.f32 0.0, %v2671
      %2673 = vdwg.mxu0
      %2674 = vmatpush.bf16.msra.mxu0 0
      %2675 = vmatpush.bf16.msra.mxu0 0
      %2676 = vmatpush.bf16.msra.mxu0 0
      %2677 = vmatpush.bf16.msra.mxu0 0
      %2678 = vmatpush.bf16.msra.mxu0 0
      %2679 = vmatpush.bf16.msra.mxu0 0
      %2680 = vmatpush.bf16.msra.mxu0 0
      %2681 = vmatpush.bf16.msra.mxu0 %v2639
      %2682 = vmatmul.bf16.gmra.mxu0 %v2644
      %v2683 = vpop.f32.mrf.mxu0
      %v2684 = vadd.f32 0.0, %v2683
      %v2685 = vpop.f32.mrf.mxu0
      %v2686 = vadd.f32 0.0, %v2685
      %2687 = vdwg.mxu0
      %v2688 = vadd.f32 %v2594, %v2656
      %v2689 = vadd.f32 %v2595, %v2670
      %v2690 = vadd.f32 %v2596, %v2684
      %v2691 = vadd.f32 %v2597, %v2658
      %v2692 = vadd.f32 %v2598, %v2672
      %v2693 = vadd.f32 %v2599, %v2686
      %2694 = vst [vmem:[%s170] sm:$0xff] %v2688
      %2695 = vst [vmem:[%s170 + $0x8] sm:$0xff] %v2689
      %2696 = vst.msk [vmem:[%s170 + $0x10] sm:$0xff] %vm174, %v2690
      %2697 = vst [vmem:[%s170 + $0x18] sm:$0xff] %v2691
      %2698 = vst [vmem:[%s170 + $0x20] sm:$0xff] %v2692
      %2699 = vst.msk [vmem:[%s170 + $0x28] sm:$0xff] %vm174, %v2693
      %v2700 = vld [vmem:[%s170] sm:$0xff]
      %v2701 = vld [vmem:[%s170 + $0x8] sm:$0xff]
      %v2702 = vld [vmem:[%s170 + $0x10] sm:$0xff]
      %v2703 = vld [vmem:[%s170 + $0x18] sm:$0xff]
      %v2704 = vld [vmem:[%s170 + $0x20] sm:$0xff]
      %v2705 = vld [vmem:[%s170 + $0x28] sm:$0xff]
      %v2706 = vld [vmem:[%s1] sm:$0xff]
      %v2707 = vld [vmem:[%s1 + $0x8] sm:$0xff]
      %2709 = vset.pattern.permute.xlu0 0
      %2710 = vperm.xlu0 %2709, %v2706
      %v2711 = vpop.permute.xlu0 %2710
      %2714 = vset.pattern.permute.xlu0 0
      %2715 = vperm.xlu0 %2714, %v2707
      %v2716 = vpop.permute.xlu0 %2715
      %v2718 = vadd.f32 %v2700, %v2711
      %v2719 = vadd.f32 %v2701, %v2711
      %v2720 = vadd.f32 %v2702, %v2711
      %v2721 = vadd.f32 %v2703, %v2716
      %v2722 = vadd.f32 %v2704, %v2716
      %v2723 = vadd.f32 %v2705, %v2716
      %v2724 = vmax.f32 %v2718, 0.0
      %v2725 = vmax.f32 %v2719, 0.0
      %v2726 = vmax.f32 %v2720, 0.0
      %v2727 = vmax.f32 %v2721, 0.0
      %v2728 = vmax.f32 %v2722, 0.0
      %v2729 = vmax.f32 %v2723, 0.0
      %2730 = vst [vmem:[%s170] sm:$0xff] %v2724
      %2731 = vst [vmem:[%s170 + $0x8] sm:$0xff] %v2725
      %2732 = vst.msk [vmem:[%s170 + $0x10] sm:$0xff] %vm174, %v2726
      %2733 = vst [vmem:[%s170 + $0x18] sm:$0xff] %v2727
      %2734 = vst [vmem:[%s170 + $0x20] sm:$0xff] %v2728
      %2735 = vst.msk [vmem:[%s170 + $0x28] sm:$0xff] %vm174, %v2729
      %p2736 = scmp.lt.s32.totalorder %s14, 1
      %s2737 = scalar_select %p2736, %s14, 1
      %s2738 = smul.addr %s2737, 6
      %s2739 = smul.addr %s2738, 8
      %s2740 = scalar_lea.vmem %s3, %s2739
      // Predicated region
      $region33: #{_lambda_.1} parent=31 // pred_check
        %p2741 = pneg %p100
      $region34: #{_lambda_.1} parent=31 // pred_check_branch
        %2743 = sbr.rel (%p2741) target = $region36
      $region35: #{_lambda_.1} parent=31 // pred_region
        _
      $region36: #{_lambda_.1} parent=31 // pred_fallthru
        _
    $region32: #{_lambda_.1} parent=5 // pred_fallthru
      _
    %p2744 = scmp.le.s32.totalorder 2, %s9
    // Predicated region
    $region37: #{_lambda_.1} parent=5 // pred_check
      %p2745 = pneg %p2744
    $region38: #{_lambda_.1} parent=5 // pred_check_branch
      %2747 = sbr.rel (%p2745) target = $region40
    $region39: #{_lambda_.1} parent=5 // pred_region
      %s2748 = ssub.s32 %s9, 2
      // Predicated region
      $region41: #{_lambda_.1} parent=39 // pred_check
        %p2749 = pneg %p106
      $region42: #{_lambda_.1} parent=39 // pred_check_branch
        %2751 = sbr.rel (%p2749) target = $region44
      $region43: #{_lambda_.1} parent=39 // pred_region
        %p2752 = scmp.lt.s32.totalorder %s15, 1
        %s2753 = scalar_select %p2752, %s15, 1
        %s2754 = smul.addr %s2753, 6
        %s2755 = smul.addr %s2754, 8
        %s2756 = scalar_lea.vmem %s3, %s2755
      $region44: #{_lambda_.1} parent=39 // pred_fallthru
        _
    $region40: #{_lambda_.1} parent=5 // pred_fallthru
      _
  $region6: #{_lambda_.1} parent=0 // loop_footer
    %s13 = sadd.s32 1, %s9
  $region7: #{_lambda_.1} parent=0 // loop_footer_branch
    %8 = sbr.rel target = $region3
  $region8: #{_lambda_.1} parent=0 // loop_exit
    _

</llo_original>
